<compile_context>
chip_gen: v5e
topology: v5e:2x2
jax: 0.10.0
libtpu: 0.0.40
codegen_flags: <defaults>
</compile_context>

<pallas_src>
import functools

import jax
import jax.numpy as jnp
from jax.experimental import pallas as pl
from jax.experimental.pallas import tpu as pltpu


def _vq_kernel(x_ref, e_ref, esq_ref, q_ref, idx_ref, sse_ref, *, tm, n_valid):
    i = pl.program_id(0)

    @pl.when(i == 0)
    def _init():
        sse_ref[...] = jnp.zeros_like(sse_ref)

    x = x_ref[...]                       # [tm, D]  f32 row tile
    e = e_ref[...]                       # [K,  D]  f32 codebook (resident in VMEM)
    K = e.shape[0]

    # scores = x @ e^T on the MXU; distances = ||e||^2 - 2*scores  (||x||^2 omitted:
    # constant per row, cannot change the argmin).
    scores = jax.lax.dot_general(
        x, e, (((1,), (1,)), ((), ())),
        preferred_element_type=jnp.float32)                                   # [tm, K]
    dist = esq_ref[...] - 2.0 * scores                                        # [tm, K]

    # argmin over the codebook axis, ties broken to the smallest index
    # (min + iota + select: robust lowering, all VPU/XLU work).
    ids = jax.lax.broadcasted_iota(jnp.int32, (tm, K), 1)
    min_d = jnp.min(dist, axis=1, keepdims=True)
    idx = jnp.min(jnp.where(dist == min_d, ids, K), axis=1, keepdims=True)    # [tm,1] i32

    # one-hot @ codebook == embedding gather, runs on the MXU (mirrors the
    # scatter_ + matmul in the PyTorch spec, exact in f32).
    onehot = (ids == idx).astype(jnp.float32)                                 # [tm, K]
    quant = jnp.dot(onehot, e, preferred_element_type=jnp.float32)            # [tm, D]

    q_ref[...] = quant
    idx_ref[...] = idx

    # partial sum of squared errors (padded rows masked out), accumulated into a
    # resident (1,1) VMEM output across the grid.
    row = jax.lax.broadcasted_iota(jnp.int32, (tm, 1), 0) + i * tm
    diff = jnp.where(row < n_valid, quant - x, 0.0)
    sse_ref[...] = sse_ref[...] + jnp.sum(diff * diff)


def vector_quantize(inputs, codebook, commitment_cost=0.25, tile_m=256):
    """inputs: [B, C, H, W], codebook: [K, C].

    Returns (quantized [B, C, H, W], loss scalar, encoding_indices [B, H, W]),
    matching VectorQuantizer.forward (forward values; gradients not implemented).
    """
    B, C, H, W = inputs.shape
    K, D = codebook.shape
    assert D == C, "codebook embedding_dim must equal channel dim"

    codebook = codebook.astype(jnp.float32)
    x_flat = jnp.transpose(inputs, (0, 2, 3, 1)).reshape(-1, D).astype(jnp.float32)
    N = x_flat.shape[0]

    def _round_up(a, m):
        return (a + m - 1) // m * m

    tm = tile_m if N >= tile_m else _round_up(N, 8)
    n_pad = _round_up(N, tm)
    if n_pad != N:
        x_flat = jnp.pad(x_flat, ((0, n_pad - N), (0, 0)))

    esq = jnp.sum(codebook * codebook, axis=1).reshape(1, K)   # ||e||^2, tiny precompute

    grid = (n_pad // tm,)
    q_flat, idx_flat, sse = pl.pallas_call(
        functools.partial(_vq_kernel, tm=tm, n_valid=N),
        grid=grid,
        out_shape=(
            jax.ShapeDtypeStruct((n_pad, D), jnp.float32),
            jax.ShapeDtypeStruct((n_pad, 1), jnp.int32),
            jax.ShapeDtypeStruct((1, 1), jnp.float32),
        ),
        in_specs=[
            pl.BlockSpec((tm, D), lambda i: (i, 0)),   # activation row tile (pipelined)
            pl.BlockSpec((K, D), lambda i: (0, 0)),    # codebook: resident across grid
            pl.BlockSpec((1, K), lambda i: (0, 0)),    # ||e||^2: resident across grid
        ],
        out_specs=(
            pl.BlockSpec((tm, D), lambda i: (i, 0)),   # quantized rows
            pl.BlockSpec((tm, 1), lambda i: (i, 0)),   # argmin indices
            pl.BlockSpec((1, 1), lambda i: (0, 0)),    # SSE accumulator (resident)
        ),
        # Grid axis is a reduction for the loss accumulator -> "arbitrary".
        # (For very large N, emit per-tile partial SSE instead and mark "parallel"
        #  to use both v7x TensorCores.)
        compiler_params=pltpu.CompilerParams(dimension_semantics=("arbitrary",)),
    )(x_flat, codebook, esq)

    mse = sse[0, 0] / (N * D)
    # q_latent_loss + commitment_cost * e_latent_loss; both equal mse in forward.
    loss = (1.0 + commitment_cost) * mse

    quantized = q_flat[:N].reshape(B, H, W, C).transpose(0, 3, 1, 2)
    encoding_indices = idx_flat[:N, 0].reshape(B, H, W)
    # TODO(synk): straight-through estimator (inputs + (quant - inputs).detach()) and
    # detach() loss partitioning are autograd-only; forward values returned here match.
    return quantized, loss, encoding_indices


if __name__ == "__main__":
    # Small shapes consistent with the module: [B, C=embedding_dim, H, W]
    batch, embedding_dim, spatial = 2, 64, 16
    num_embeddings = 512          # K multiple of 128 keeps dist/one-hot blocks lane-dense
    commitment_cost = 0.25

    key = jax.random.PRNGKey(0)
    k_in, k_emb = jax.random.split(key)
    inputs = jax.random.normal(
        k_in, (batch, embedding_dim, spatial, spatial), dtype=jnp.float32)
    codebook = jax.random.uniform(
        k_emb, (num_embeddings, embedding_dim), dtype=jnp.float32,
        minval=-1.0 / num_embeddings, maxval=1.0 / num_embeddings)

    quantized, loss, indices = vector_quantize(inputs, codebook, commitment_cost)
    quantized = jax.block_until_ready(quantized)

    assert quantized.shape == inputs.shape
    assert indices.shape == (batch, spatial, spatial)
    assert bool(jnp.isfinite(loss))
    assert bool(jnp.all(jnp.isfinite(quantized)))
    assert bool(jnp.all((indices >= 0) & (indices < num_embeddings)))
    print("KERNEL_OK")
</pallas_src>

<mosaic_0001>
module attributes {stable_mosaic.version = 11 : i64} {
  func.func @_vq_kernel(%arg0: i32, %arg1: memref<256x64xf32, #tpu.memory_space<vmem>>, %arg2: memref<512x64xf32, #tpu.memory_space<vmem>>, %arg3: memref<1x512xf32, #tpu.memory_space<vmem>>, %arg4: memref<256x64xf32, #tpu.memory_space<vmem>>, %arg5: memref<256x1xi32, #tpu.memory_space<vmem>>, %arg6: memref<1x1xf32, #tpu.memory_space<vmem>>) attributes {dimension_semantics = [#tpu.dimension_semantics<arbitrary>], iteration_bounds = array<i64: 2>, scalar_prefetch = 0 : i64, scratch_operands = 0 : i64, tpu.core_type = #tpu.core_type<tc>, window_params = [{transform_indices = @transform_0, window_bounds = array<i64: 256, 64>}, {pipeline_mode = #tpu.pipeline_mode<synchronous>, transform_indices = @transform_1, window_bounds = array<i64: 512, 64>}, {pipeline_mode = #tpu.pipeline_mode<synchronous>, transform_indices = @transform_2, window_bounds = array<i64: 1, 512>}, {transform_indices = @transform_3, window_bounds = array<i64: 256, 64>}, {transform_indices = @transform_4, window_bounds = array<i64: 256, 1>}, {pipeline_mode = #tpu.pipeline_mode<synchronous>, transform_indices = @transform_5, window_bounds = array<i64: 1, 1>}]} {
    %c0_i32 = arith.constant 0 : i32
    %0 = arith.cmpi eq, %arg0, %c0_i32 : i32
    %1 = arith.extui %0 : i1 to i32
    %c0_i32_0 = arith.constant 0 : i32
    %2 = arith.cmpi ne, %1, %c0_i32_0 : i32
    scf.if %2 {
      %cst_21 = arith.constant 0.000000e+00 : f32
      %47 = vector.broadcast %cst_21 : f32 to vector<1x1xf32>
      %c0_22 = arith.constant 0 : index
      %c0_23 = arith.constant 0 : index
      %48 = vector.load %arg6[%c0_22, %c0_23] : memref<1x1xf32, #tpu.memory_space<vmem>>, vector<1x1xf32>
      tpu.vector_store %arg6[%c0_22, %c0_23], %47 {strides = array<i32>} : memref<1x1xf32, #tpu.memory_space<vmem>>, vector<1x1xf32>,
    } else {
    }
    %c0 = arith.constant 0 : index
    %c0_1 = arith.constant 0 : index
    %3 = vector.load %arg1[%c0, %c0_1] : memref<256x64xf32, #tpu.memory_space<vmem>>, vector<256x64xf32>
    %c0_2 = arith.constant 0 : index
    %c0_3 = arith.constant 0 : index
    %4 = vector.load %arg2[%c0_2, %c0_3] : memref<512x64xf32, #tpu.memory_space<vmem>>, vector<512x64xf32>
    %cst = arith.constant dense<0.000000e+00> : vector<256x512xf32>
    %5 = tpu.matmul %3, %4, %cst {dimension_numbers = #tpu.dot_dimension_numbers<[1], [1], [0], [0], [0, 0, 1, 0], [], []>} : vector<256x64xf32>, vector<512x64xf32>, vector<256x512xf32> -> vector<256x512xf32>
    %c0_4 = arith.constant 0 : index
    %c0_5 = arith.constant 0 : index
    %6 = vector.load %arg3[%c0_4, %c0_5] : memref<1x512xf32, #tpu.memory_space<vmem>>, vector<1x512xf32>
    %cst_6 = arith.constant 2.000000e+00 : f32
    %7 = vector.broadcast %cst_6 : f32 to vector<256x512xf32>
    %8 = arith.mulf %7, %5 : vector<256x512xf32>
    %9 = vector.broadcast %6 : vector<1x512xf32> to vector<256x512xf32>
    %10 = arith.subf %9, %8 : vector<256x512xf32>
    %11 = tpu.iota {dimensions = array<i32: 1>} : vector<256x512xi32>
    %cst_7 = arith.constant dense<0x7F800000> : vector<256xf32>
    %12 = vector.multi_reduction <minimumf>, %10, %cst_7 [1] : vector<256x512xf32> to vector<256xf32>
    %13 = vector.shape_cast %12 : vector<256xf32> to vector<256x1xf32>
    %14 = vector.broadcast %13 : vector<256x1xf32> to vector<256x512xf32>
    %15 = arith.cmpf oeq, %10, %14 : vector<256x512xf32>
    %c512_i32 = arith.constant 512 : i32
    %16 = vector.broadcast %c512_i32 : i32 to vector<256x512xi32>
    %17 = arith.select %15, %11, %16 : vector<256x512xi1>, vector<256x512xi32>
    %cst_8 = arith.constant dense<2147483647> : vector<256xi32>
    %18 = vector.multi_reduction <minsi>, %17, %cst_8 [1] : vector<256x512xi32> to vector<256xi32>
    %19 = vector.shape_cast %18 : vector<256xi32> to vector<256x1xi32>
    %20 = vector.broadcast %19 : vector<256x1xi32> to vector<256x512xi32>
    %21 = arith.cmpi eq, %11, %20 : vector<256x512xi32>
    %22 = arith.extui %21 : vector<256x512xi1> to vector<256x512xi32>
    %23 = arith.sitofp %22 : vector<256x512xi32> to vector<256x512xf32>
    %cst_9 = arith.constant dense<0.000000e+00> : vector<256x64xf32>
    %24 = tpu.matmul %23, %4, %cst_9 {dimension_numbers = #tpu.dot_dimension_numbers<[1], [0], [0], [1], [0, 0, 1, 1], [], []>} : vector<256x512xf32>, vector<512x64xf32>, vector<256x64xf32> -> vector<256x64xf32>
    %c0_10 = arith.constant 0 : index
    %c0_11 = arith.constant 0 : index
    %25 = vector.load %arg4[%c0_10, %c0_11] : memref<256x64xf32, #tpu.memory_space<vmem>>, vector<256x64xf32>
    tpu.vector_store %arg4[%c0_10, %c0_11], %24 {strides = array<i32>} : memref<256x64xf32, #tpu.memory_space<vmem>>, vector<256x64xf32>,
    %c0_12 = arith.constant 0 : index
    %c0_13 = arith.constant 0 : index
    %26 = vector.load %arg5[%c0_12, %c0_13] : memref<256x1xi32, #tpu.memory_space<vmem>>, vector<256x1xi32>
    tpu.vector_store %arg5[%c0_12, %c0_13], %19 {strides = array<i32>} : memref<256x1xi32, #tpu.memory_space<vmem>>, vector<256x1xi32>,
    %27 = tpu.iota {dimensions = array<i32: 0>} : vector<256x1xi32>
    %c256_i32 = arith.constant 256 : i32
    %28 = arith.muli %arg0, %c256_i32 : i32
    %29 = vector.broadcast %28 : i32 to vector<256x1xi32>
    %30 = arith.addi %27, %29 : vector<256x1xi32>
    %c512_i32_14 = arith.constant 512 : i32
    %31 = vector.broadcast %c512_i32_14 : i32 to vector<256x1xi32>
    %32 = arith.cmpi slt, %30, %31 : vector<256x1xi32>
    %33 = arith.subf %24, %3 : vector<256x64xf32>
    %cst_15 = arith.constant 0.000000e+00 : f32
    %34 = vector.shape_cast %32 : vector<256x1xi1> to vector<256x1xi1>
    %35 = vector.broadcast %34 : vector<256x1xi1> to vector<256x64xi1>
    %36 = vector.broadcast %cst_15 : f32 to vector<256x64xf32>
    %37 = arith.select %35, %33, %36 : vector<256x64xi1>, vector<256x64xf32>
    %c0_16 = arith.constant 0 : index
    %c0_17 = arith.constant 0 : index
    %38 = vector.load %arg6[%c0_16, %c0_17] : memref<1x1xf32, #tpu.memory_space<vmem>>, vector<1x1xf32>
    %39 = arith.mulf %37, %37 : vector<256x64xf32>
    %40 = vector.shape_cast %39 : vector<256x64xf32> to vector<1x256x64xf32>
    %cst_18 = arith.constant dense<0.000000e+00> : vector<1xf32>
    %41 = vector.multi_reduction <add>, %40, %cst_18 [1, 2] : vector<1x256x64xf32> to vector<1xf32>
    %42 = vector.shape_cast %41 : vector<1xf32> to vector<1x1x1xf32>
    %43 = vector.extract %42[0, 0, 0] : f32 from vector<1x1x1xf32>
    %44 = vector.broadcast %43 : f32 to vector<1x1xf32>
    %45 = arith.addf %38, %44 : vector<1x1xf32>
    %c0_19 = arith.constant 0 : index
    %c0_20 = arith.constant 0 : index
    %46 = vector.load %arg6[%c0_19, %c0_20] : memref<1x1xf32, #tpu.memory_space<vmem>>, vector<1x1xf32>
    tpu.vector_store %arg6[%c0_19, %c0_20], %45 {strides = array<i32>} : memref<1x1xf32, #tpu.memory_space<vmem>>, vector<1x1xf32>,
    return
  }
  func.func @transform_0(%arg0: i32) -> (i32, i32) {
    %c0_i32 = arith.constant 0 : i32
    %c0_i32_0 = arith.constant 0 : i32
    return %arg0, %c0_i32 : i32, i32
  }
  func.func @transform_1(%arg0: i32) -> (i32, i32) {
    %c0_i32 = arith.constant 0 : i32
    %c0_i32_0 = arith.constant 0 : i32
    %c0_i32_1 = arith.constant 0 : i32
    return %c0_i32, %c0_i32_0 : i32, i32
  }
  func.func @transform_2(%arg0: i32) -> (i32, i32) {
    %c0_i32 = arith.constant 0 : i32
    %c0_i32_0 = arith.constant 0 : i32
    %c0_i32_1 = arith.constant 0 : i32
    return %c0_i32, %c0_i32_0 : i32, i32
  }
  func.func @transform_3(%arg0: i32) -> (i32, i32) {
    %c0_i32 = arith.constant 0 : i32
    %c0_i32_0 = arith.constant 0 : i32
    return %arg0, %c0_i32 : i32, i32
  }
  func.func @transform_4(%arg0: i32) -> (i32, i32) {
    %c0_i32 = arith.constant 0 : i32
    %c0_i32_0 = arith.constant 0 : i32
    return %arg0, %c0_i32 : i32, i32
  }
  func.func @transform_5(%arg0: i32) -> (i32, i32) {
    %c0_i32 = arith.constant 0 : i32
    %c0_i32_0 = arith.constant 0 : i32
    %c0_i32_1 = arith.constant 0 : i32
    return %c0_i32, %c0_i32_0 : i32, i32
  }
}

</mosaic_0001>

<llo_original>
// kernel: tpu_custom_call.1
$region0: #{tpu_custom_call.1}
  #allocation0 [shape = 'u32[]', space=smem, size = 0x4, offset = 0x4, fixed_abs, tag = 'smem constant byte address 0x4 - core index']
  #allocation1 [shape = 'u32[72,128]{1,0:T(1,128)}', space=vmem, size = 0x9000, scoped, tag = 'internal scratch']
  %s0 = inlined_call_operand.vmem [shape: f32[512,64], index: 0, kind: input, shape index: {}]
  %s1 = inlined_call_operand.vmem [shape: f32[512,64], index: 1, kind: input, shape index: {}]
  %s2 = inlined_call_operand.vmem [shape: f32[1,512], index: 2, kind: input, shape index: {}]
  %s3 = inlined_call_operand.vmem [shape: f32[512,64], index: 3, kind: output, shape index: {0}]
  %s4 = inlined_call_operand.vmem [shape: s32[512,1], index: 4, kind: output, shape index: {1}]
  %s5 = inlined_call_operand.hbm [shape: f32[1,1], index: 5, kind: output, shape index: {2}]
  %6 = xla_tuple %s3, %s4, %s5
  %s7 = sld [smem:[#allocation0]]
  $region65: #{tpu_custom_call.1} parent=0
    _
  %s9 = ssub.s32 1, %s7
  %s10 = scalar_select 0, %s9, %s7
  $region1: #{tpu_custom_call.1} parent=0
    #allocation2 [shape = 'u8[512]{0}', space=vmem, size = 0x400, scoped, tag = 'output window, operand 2, single buffered']
    #allocation3 [shape = 's32[2]{0}', space=sflag, size = 0x8, scoped, tag = 'scoped memory for tpu_custom_call.1']
    %11 = vsyncpa [#allocation3], 0
    loop: start=0, step=1, limit=4
    $region2: #{tpu_custom_call.1} parent=1 // loop_pre_header
      _
    $region3: #{tpu_custom_call.1} parent=1 // loop_header
      %s13 = sphi 0, %s17
      %p14 = scmp.ge.s32.totalorder %s13, 4
      %s23 = sphi 0, %s25
      %s26 = sphi 0, %s23
      %s27 = sphi 0, %s26
      %s43 = sphi 0, %s27
      %s47 = sphi 0, %s47
      %s49 = sphi 0, %s47
      %s50 = sphi 0, %s49
      %s64 = sphi 0, %s50
      %s68 = sphi 0, %s68
      %s70 = sphi 0, %s68
      %s71 = sphi 0, %s70
      %s85 = sphi 0, %s71
      %s91 = sphi 0, %s93
      %s94 = sphi 0, %s91
      %s95 = sphi 0, %s94
      %s111 = sphi 0, %s95
      %s117 = sphi 0, %s119
      %s120 = sphi 0, %s117
      %s121 = sphi 0, %s120
      %s137 = sphi 0, %s121
      %s141 = sphi 0, %s141
      %s143 = sphi 0, %s141
      %s144 = sphi 0, %s143
      %s158 = sphi 0, %s144
    $region4: #{tpu_custom_call.1} parent=1 // loop_header_branch
      %16 = sbr.rel (%p14) target = $region8
    $region5: #{tpu_custom_call.1} parent=1 // loop_body
      %s18 = ssub.s32 %s13, 1
      %s19 = ssub.s32 %s13, 2
      %s20 = sadd.s32 %s13, 1
      %s21 = ssub.s32 %s13, %s20
      %p22 = scmp.eq.s32.totalorder %s21, 0
      %s24 = sadd.s32 %s23, 1
      %s25 = scalar_select %p22, %s23, %s24
      %p28 = pneg %p22
      %p29 = scmp.eq.s32.totalorder %s13, 1
      %p30 = por %p28, %p29
      %p31 = scmp.ne.s32.totalorder %s23, %s26
      %p32 = scmp.eq.s32.totalorder %s13, 0
      %p33 = por %p31, %p32
      %p34 = scmp.ne.s32.totalorder %s23, %s26
      %p35 = scmp.eq.s32.totalorder %s18, 1
      %p36 = por %p34, %p35
      %p37 = scmp.ne.s32.totalorder %s26, %s27
      %p38 = scmp.eq.s32.totalorder %s18, 0
      %p39 = por %p37, %p38
      %p40 = scmp.ne.s32.totalorder %s26, %s27
      %p41 = scmp.eq.s32.totalorder %s19, 1
      %p42 = por %p40, %p41
      %p44 = scmp.ne.s32.totalorder %s27, %s43
      %p45 = scmp.eq.s32.totalorder %s19, 0
      %p46 = por %p44, %p45
      %s48 = sadd.s32 %s47, 1
      %p51 = scmp.eq.s32.totalorder %s13, 1
      %p52 = scmp.ne.s32.totalorder %s47, %s49
      %p53 = scmp.eq.s32.totalorder %s13, 0
      %p54 = por %p52, %p53
      %p55 = scmp.ne.s32.totalorder %s47, %s49
      %p56 = scmp.eq.s32.totalorder %s18, 1
      %p57 = por %p55, %p56
      %p58 = scmp.ne.s32.totalorder %s49, %s50
      %p59 = scmp.eq.s32.totalorder %s18, 0
      %p60 = por %p58, %p59
      %p61 = scmp.ne.s32.totalorder %s49, %s50
      %p62 = scmp.eq.s32.totalorder %s19, 1
      %p63 = por %p61, %p62
      %p65 = scmp.ne.s32.totalorder %s50, %s64
      %p66 = scmp.eq.s32.totalorder %s19, 0
      %p67 = por %p65, %p66
      %s69 = sadd.s32 %s68, 1
      %p72 = scmp.eq.s32.totalorder %s13, 1
      %p73 = scmp.ne.s32.totalorder %s68, %s70
      %p74 = scmp.eq.s32.totalorder %s13, 0
      %p75 = por %p73, %p74
      %p76 = scmp.ne.s32.totalorder %s68, %s70
      %p77 = scmp.eq.s32.totalorder %s18, 1
      %p78 = por %p76, %p77
      %p79 = scmp.ne.s32.totalorder %s70, %s71
      %p80 = scmp.eq.s32.totalorder %s18, 0
      %p81 = por %p79, %p80
      %p82 = scmp.ne.s32.totalorder %s70, %s71
      %p83 = scmp.eq.s32.totalorder %s19, 1
      %p84 = por %p82, %p83
      %p86 = scmp.ne.s32.totalorder %s71, %s85
      %p87 = scmp.eq.s32.totalorder %s19, 0
      %p88 = por %p86, %p87
      %s89 = ssub.s32 %s13, %s20
      %p90 = scmp.eq.s32.totalorder %s89, 0
      %s92 = sadd.s32 %s91, 1
      %s93 = scalar_select %p90, %s91, %s92
      %p96 = pneg %p90
      %p97 = scmp.eq.s32.totalorder %s13, 1
      %p98 = por %p96, %p97
      %p99 = scmp.ne.s32.totalorder %s91, %s94
      %p100 = scmp.eq.s32.totalorder %s13, 0
      %p101 = por %p99, %p100
      %p102 = scmp.ne.s32.totalorder %s91, %s94
      %p103 = scmp.eq.s32.totalorder %s18, 1
      %p104 = por %p102, %p103
      %p105 = scmp.ne.s32.totalorder %s94, %s95
      %p106 = scmp.eq.s32.totalorder %s18, 0
      %p107 = por %p105, %p106
      %p108 = scmp.ne.s32.totalorder %s94, %s95
      %p109 = scmp.eq.s32.totalorder %s19, 1
      %p110 = por %p108, %p109
      %p112 = scmp.ne.s32.totalorder %s95, %s111
      %p113 = scmp.eq.s32.totalorder %s19, 0
      %p114 = por %p112, %p113
      %s115 = ssub.s32 %s13, %s20
      %p116 = scmp.eq.s32.totalorder %s115, 0
      %s118 = sadd.s32 %s117, 1
      %s119 = scalar_select %p116, %s117, %s118
      %p122 = pneg %p116
      %p123 = scmp.eq.s32.totalorder %s13, 1
      %p124 = por %p122, %p123
      %p125 = scmp.ne.s32.totalorder %s117, %s120
      %p126 = scmp.eq.s32.totalorder %s13, 0
      %p127 = por %p125, %p126
      %p128 = scmp.ne.s32.totalorder %s117, %s120
      %p129 = scmp.eq.s32.totalorder %s18, 1
      %p130 = por %p128, %p129
      %p131 = scmp.ne.s32.totalorder %s120, %s121
      %p132 = scmp.eq.s32.totalorder %s18, 0
      %p133 = por %p131, %p132
      %p134 = scmp.ne.s32.totalorder %s120, %s121
      %p135 = scmp.eq.s32.totalorder %s19, 1
      %p136 = por %p134, %p135
      %p138 = scmp.ne.s32.totalorder %s121, %s137
      %p139 = scmp.eq.s32.totalorder %s19, 0
      %p140 = por %p138, %p139
      %s142 = sadd.s32 %s141, 1
      %p145 = scmp.eq.s32.totalorder %s13, 1
      %p146 = scmp.ne.s32.totalorder %s141, %s143
      %p147 = scmp.eq.s32.totalorder %s13, 0
      %p148 = por %p146, %p147
      %p149 = scmp.ne.s32.totalorder %s141, %s143
      %p150 = scmp.eq.s32.totalorder %s18, 1
      %p151 = por %p149, %p150
      %p152 = scmp.ne.s32.totalorder %s143, %s144
      %p153 = scmp.eq.s32.totalorder %s18, 0
      %p154 = por %p152, %p153
      %p155 = scmp.ne.s32.totalorder %s143, %s144
      %p156 = scmp.eq.s32.totalorder %s19, 1
      %p157 = por %p155, %p156
      %p159 = scmp.ne.s32.totalorder %s144, %s158
      %p160 = scmp.eq.s32.totalorder %s19, 0
      %p161 = por %p159, %p160
      %p162 = scmp.le.s32.totalorder 1, %s13
      %p163 = scmp.lt.s32.totalorder %s13, 3
      %p164 = pnand %p162, %p163
      %p165 = pneg %p164
      // Predicated region
      $region9: #{tpu_custom_call.1} parent=5 // pred_check
        _
      $region10: #{tpu_custom_call.1} parent=5 // pred_check_branch
        %167 = sbr.rel (%p164) target = $region12
      $region11: #{tpu_custom_call.1} parent=5 // pred_region
        %s168 = ssub.s32 %s13, 1
        // Predicated region
        $region13: #{tpu_custom_call.1} parent=11 // pred_check
          %p169 = pneg %p60
        $region14: #{tpu_custom_call.1} parent=11 // pred_check_branch
          %171 = sbr.rel (%p169) target = $region16
        $region15: #{tpu_custom_call.1} parent=11 // pred_region
          _
        $region16: #{tpu_custom_call.1} parent=11 // pred_fallthru
          _
        // Predicated region
        $region17: #{tpu_custom_call.1} parent=11 // pred_check
          %p172 = pneg %p81
        $region18: #{tpu_custom_call.1} parent=11 // pred_check_branch
          %174 = sbr.rel (%p172) target = $region20
        $region19: #{tpu_custom_call.1} parent=11 // pred_region
          _
        $region20: #{tpu_custom_call.1} parent=11 // pred_fallthru
          _
      $region12: #{tpu_custom_call.1} parent=5 // pred_fallthru
        _
      %p175 = scmp.lt.s32.totalorder %s13, 2
      // Predicated region
      $region21: #{tpu_custom_call.1} parent=5 // pred_check
        %p176 = pneg %p175
      $region22: #{tpu_custom_call.1} parent=5 // pred_check_branch
        %178 = sbr.rel (%p176) target = $region24
      $region23: #{tpu_custom_call.1} parent=5 // pred_region
        // Predicated region
        $region25: #{tpu_custom_call.1} parent=23 // pred_check
          %p179 = pneg %p33
        $region26: #{tpu_custom_call.1} parent=23 // pred_check_branch
          %181 = sbr.rel (%p179) target = $region28
        $region27: #{tpu_custom_call.1} parent=23 // pred_region
          %s182 = smul.u32 32, %s13
          %p183 = scmp.lt.s32.totalorder %s182, 63
          %s184 = scalar_select %p183, %s182, 63
          %s185 = smul.addr %s184, 8
          %s186 = scalar_lea.vmem %s0, %s185
          %s187 = smul.u32 32, %s13
        $region28: #{tpu_custom_call.1} parent=23 // pred_fallthru
          _
      $region24: #{tpu_custom_call.1} parent=5 // pred_fallthru
        _
      %p188 = scmp.le.s32.totalorder 1, %s13
      %p189 = scmp.lt.s32.totalorder %s13, 3
      %p190 = pnand %p188, %p189
      %p191 = pneg %p190
      // Predicated region
      $region29: #{tpu_custom_call.1} parent=5 // pred_check
        _
      $region30: #{tpu_custom_call.1} parent=5 // pred_check_branch
        %193 = sbr.rel (%p190) target = $region32
      $region31: #{tpu_custom_call.1} parent=5 // pred_region
        %s194 = ssub.s32 %s13, 1
        %s195 = smul.u32 32, %s18
        %p196 = scmp.lt.s32.totalorder %s195, 63
        %s197 = scalar_select %p196, %s195, 63
        %s198 = smul.addr %s197, 8
        %s199 = scalar_lea.vmem %s0, %s198
        %p200 = pneg %p39
        %p201 = pneg %p36
        %p202 = pneg %p60
        %p203 = pneg %p57
        %p204 = pneg %p81
        %p205 = pneg %p78
        %p206 = pneg %p107
        %p207 = pneg %p104
        %s208 = smul.u32 32, %s18
        %p209 = scmp.lt.s32.totalorder %s208, 63
        %s210 = scalar_select %p209, %s208, 63
        %s211 = smul.addr %s210, 8
        %s212 = scalar_lea.vmem %s3, %s211
        %p213 = pneg %p133
        %p214 = pneg %p130
        %s215 = smul.u32 32, %s18
        %p216 = scmp.lt.s32.totalorder %s215, 63
        %s217 = scalar_select %p216, %s215, 63
        %s218 = smul.addr %s217, 8
        %s219 = scalar_lea.vmem %s4, %s218
        %p220 = pneg %p154
        %p221 = pneg %p151
        %s222 = smul.u32 32, %s18
        %p223 = scmp.lt.s32.totalorder %s222, 63
        %s224 = scalar_select %p223, %s222, 63
        %s225 = smul.addr %s224, 8
        %s226 = scalar_lea.vmem %s0, %s225
        %s227 = smul.u32 32, %s18
        %s228 = smul.u32 32, %s18
        %p229 = scmp.lt.s32.totalorder %s228, 63
        %s230 = scalar_select %p229, %s228, 63
        %s231 = smul.addr %s230, 8
        %s232 = scalar_lea.vmem %s3, %s231
        %s233 = smul.u32 32, %s18
        %s234 = smul.u32 32, %s18
        %p235 = scmp.lt.s32.totalorder %s234, 63
        %s236 = scalar_select %p235, %s234, 63
        %s237 = smul.addr %s236, 8
        %s238 = scalar_lea.vmem %s4, %s237
        %s239 = smul.u32 32, %s18
        %p240 = scmp.eq.s32.totalorder %s18, 0
        // Predicated region
        $region33: #{tpu_custom_call.1} parent=31 // pred_check
          %p241 = pneg %p240
        $region34: #{tpu_custom_call.1} parent=31 // pred_check_branch
          %243 = sbr.rel (%p241) target = $region36
        $region35: #{tpu_custom_call.1} parent=31 // pred_region
          %vm244 = vcmask 0
          %245 = vst.msk [vmem:[#allocation2] sm:$0x1] %vm244, 0.0
        $region36: #{tpu_custom_call.1} parent=31 // pred_fallthru
          _
        %v246 = vld [vmem:[%s226] sm:$0xff]
        %v247 = vld [vmem:[%s226 + $0x8] sm:$0xff]
        %v248 = vld [vmem:[%s226 + $0x10] sm:$0xff]
        %v249 = vld [vmem:[%s226 + $0x18] sm:$0xff]
        %v250 = vld [vmem:[%s226 + $0x20] sm:$0xff]
        %v251 = vld [vmem:[%s226 + $0x28] sm:$0xff]
        %v252 = vld [vmem:[%s226 + $0x30] sm:$0xff]
        %v253 = vld [vmem:[%s226 + $0x38] sm:$0xff]
        %v254 = vld [vmem:[%s226 + $0x40] sm:$0xff]
        %v255 = vld [vmem:[%s226 + $0x48] sm:$0xff]
        %v256 = vld [vmem:[%s226 + $0x50] sm:$0xff]
        %v257 = vld [vmem:[%s226 + $0x58] sm:$0xff]
        %v258 = vld [vmem:[%s226 + $0x60] sm:$0xff]
        %v259 = vld [vmem:[%s226 + $0x68] sm:$0xff]
        %v260 = vld [vmem:[%s226 + $0x70] sm:$0xff]
        %v261 = vld [vmem:[%s226 + $0x78] sm:$0xff]
        %v262 = vld [vmem:[%s226 + $0x80] sm:$0xff]
        %v263 = vld [vmem:[%s226 + $0x88] sm:$0xff]
        %v264 = vld [vmem:[%s226 + $0x90] sm:$0xff]
        %v265 = vld [vmem:[%s226 + $0x98] sm:$0xff]
        %v266 = vld [vmem:[%s226 + $0xa0] sm:$0xff]
        %v267 = vld [vmem:[%s226 + $0xa8] sm:$0xff]
        %v268 = vld [vmem:[%s226 + $0xb0] sm:$0xff]
        %v269 = vld [vmem:[%s226 + $0xb8] sm:$0xff]
        %v270 = vld [vmem:[%s226 + $0xc0] sm:$0xff]
        %v271 = vld [vmem:[%s226 + $0xc8] sm:$0xff]
        %v272 = vld [vmem:[%s226 + $0xd0] sm:$0xff]
        %v273 = vld [vmem:[%s226 + $0xd8] sm:$0xff]
        %v274 = vld [vmem:[%s226 + $0xe0] sm:$0xff]
        %v275 = vld [vmem:[%s226 + $0xe8] sm:$0xff]
        %v276 = vld [vmem:[%s226 + $0xf0] sm:$0xff]
        %v277 = vld [vmem:[%s226 + $0xf8] sm:$0xff]
        %v278 = vld [vmem:[%s1] sm:$0xff]
        %v279 = vld [vmem:[%s1 + $0x8] sm:$0xff]
        %v280 = vld [vmem:[%s1 + $0x10] sm:$0xff]
        %v281 = vld [vmem:[%s1 + $0x18] sm:$0xff]
        %v282 = vld [vmem:[%s1 + $0x20] sm:$0xff]
        %v283 = vld [vmem:[%s1 + $0x28] sm:$0xff]
        %v284 = vld [vmem:[%s1 + $0x30] sm:$0xff]
        %v285 = vld [vmem:[%s1 + $0x38] sm:$0xff]
        %v286 = vld [vmem:[%s1 + $0x40] sm:$0xff]
        %v287 = vld [vmem:[%s1 + $0x48] sm:$0xff]
        %v288 = vld [vmem:[%s1 + $0x50] sm:$0xff]
        %v289 = vld [vmem:[%s1 + $0x58] sm:$0xff]
        %v290 = vld [vmem:[%s1 + $0x60] sm:$0xff]
        %v291 = vld [vmem:[%s1 + $0x68] sm:$0xff]
        %v292 = vld [vmem:[%s1 + $0x70] sm:$0xff]
        %v293 = vld [vmem:[%s1 + $0x78] sm:$0xff]
        %v294 = vld [vmem:[%s1 + $0x80] sm:$0xff]
        %v295 = vld [vmem:[%s1 + $0x88] sm:$0xff]
        %v296 = vld [vmem:[%s1 + $0x90] sm:$0xff]
        %v297 = vld [vmem:[%s1 + $0x98] sm:$0xff]
        %v298 = vld [vmem:[%s1 + $0xa0] sm:$0xff]
        %v299 = vld [vmem:[%s1 + $0xa8] sm:$0xff]
        %v300 = vld [vmem:[%s1 + $0xb0] sm:$0xff]
        %v301 = vld [vmem:[%s1 + $0xb8] sm:$0xff]
        %v302 = vld [vmem:[%s1 + $0xc0] sm:$0xff]
        %v303 = vld [vmem:[%s1 + $0xc8] sm:$0xff]
        %v304 = vld [vmem:[%s1 + $0xd0] sm:$0xff]
        %v305 = vld [vmem:[%s1 + $0xd8] sm:$0xff]
        %v306 = vld [vmem:[%s1 + $0xe0] sm:$0xff]
        %v307 = vld [vmem:[%s1 + $0xe8] sm:$0xff]
        %v308 = vld [vmem:[%s1 + $0xf0] sm:$0xff]
        %v309 = vld [vmem:[%s1 + $0xf8] sm:$0xff]
        %v310 = vld [vmem:[%s1 + $0x100] sm:$0xff]
        %v311 = vld [vmem:[%s1 + $0x108] sm:$0xff]
        %v312 = vld [vmem:[%s1 + $0x110] sm:$0xff]
        %v313 = vld [vmem:[%s1 + $0x118] sm:$0xff]
        %v314 = vld [vmem:[%s1 + $0x120] sm:$0xff]
        %v315 = vld [vmem:[%s1 + $0x128] sm:$0xff]
        %v316 = vld [vmem:[%s1 + $0x130] sm:$0xff]
        %v317 = vld [vmem:[%s1 + $0x138] sm:$0xff]
        %v318 = vld [vmem:[%s1 + $0x140] sm:$0xff]
        %v319 = vld [vmem:[%s1 + $0x148] sm:$0xff]
        %v320 = vld [vmem:[%s1 + $0x150] sm:$0xff]
        %v321 = vld [vmem:[%s1 + $0x158] sm:$0xff]
        %v322 = vld [vmem:[%s1 + $0x160] sm:$0xff]
        %v323 = vld [vmem:[%s1 + $0x168] sm:$0xff]
        %v324 = vld [vmem:[%s1 + $0x170] sm:$0xff]
        %v325 = vld [vmem:[%s1 + $0x178] sm:$0xff]
        %v326 = vld [vmem:[%s1 + $0x180] sm:$0xff]
        %v327 = vld [vmem:[%s1 + $0x188] sm:$0xff]
        %v328 = vld [vmem:[%s1 + $0x190] sm:$0xff]
        %v329 = vld [vmem:[%s1 + $0x198] sm:$0xff]
        %v330 = vld [vmem:[%s1 + $0x1a0] sm:$0xff]
        %v331 = vld [vmem:[%s1 + $0x1a8] sm:$0xff]
        %v332 = vld [vmem:[%s1 + $0x1b0] sm:$0xff]
        %v333 = vld [vmem:[%s1 + $0x1b8] sm:$0xff]
        %v334 = vld [vmem:[%s1 + $0x1c0] sm:$0xff]
        %v335 = vld [vmem:[%s1 + $0x1c8] sm:$0xff]
        %v336 = vld [vmem:[%s1 + $0x1d0] sm:$0xff]
        %v337 = vld [vmem:[%s1 + $0x1d8] sm:$0xff]
        %v338 = vld [vmem:[%s1 + $0x1e0] sm:$0xff]
        %v339 = vld [vmem:[%s1 + $0x1e8] sm:$0xff]
        %v340 = vld [vmem:[%s1 + $0x1f0] sm:$0xff]
        %v341 = vld [vmem:[%s1 + $0x1f8] sm:$0xff]
        %vm342 = vcmask 523264
        %v344 = vsel %vm342, %v246, 0
        %v347 = vsel %vm342, %v247, 0
        %v350 = vsel %vm342, %v248, 0
        %v353 = vsel %vm342, %v249, 0
        %v356 = vsel %vm342, %v250, 0
        %v359 = vsel %vm342, %v251, 0
        %v362 = vsel %vm342, %v252, 0
        %v365 = vsel %vm342, %v253, 0
        %v368 = vsel %vm342, %v254, 0
        %v371 = vsel %vm342, %v255, 0
        %v374 = vsel %vm342, %v256, 0
        %v377 = vsel %vm342, %v257, 0
        %v380 = vsel %vm342, %v258, 0
        %v383 = vsel %vm342, %v259, 0
        %v386 = vsel %vm342, %v260, 0
        %v389 = vsel %vm342, %v261, 0
        %v392 = vsel %vm342, %v262, 0
        %v395 = vsel %vm342, %v263, 0
        %v398 = vsel %vm342, %v264, 0
        %v401 = vsel %vm342, %v265, 0
        %v404 = vsel %vm342, %v266, 0
        %v407 = vsel %vm342, %v267, 0
        %v410 = vsel %vm342, %v268, 0
        %v413 = vsel %vm342, %v269, 0
        %v416 = vsel %vm342, %v270, 0
        %v419 = vsel %vm342, %v271, 0
        %v422 = vsel %vm342, %v272, 0
        %v425 = vsel %vm342, %v273, 0
        %v428 = vsel %vm342, %v274, 0
        %v431 = vsel %vm342, %v275, 0
        %v434 = vsel %vm342, %v276, 0
        %v437 = vsel %vm342, %v277, 0
        %v440 = vsel %vm342, %v278, 0
        %v443 = vsel %vm342, %v279, 0
        %v446 = vsel %vm342, %v280, 0
        %v449 = vsel %vm342, %v281, 0
        %v452 = vsel %vm342, %v282, 0
        %v455 = vsel %vm342, %v283, 0
        %v458 = vsel %vm342, %v284, 0
        %v461 = vsel %vm342, %v285, 0
        %v464 = vsel %vm342, %v286, 0
        %v467 = vsel %vm342, %v287, 0
        %v470 = vsel %vm342, %v288, 0
        %v473 = vsel %vm342, %v289, 0
        %v476 = vsel %vm342, %v290, 0
        %v479 = vsel %vm342, %v291, 0
        %v482 = vsel %vm342, %v292, 0
        %v485 = vsel %vm342, %v293, 0
        %v488 = vsel %vm342, %v294, 0
        %v491 = vsel %vm342, %v295, 0
        %v494 = vsel %vm342, %v296, 0
        %v497 = vsel %vm342, %v297, 0
        %v500 = vsel %vm342, %v298, 0
        %v503 = vsel %vm342, %v299, 0
        %v506 = vsel %vm342, %v300, 0
        %v509 = vsel %vm342, %v301, 0
        %v512 = vsel %vm342, %v302, 0
        %v515 = vsel %vm342, %v303, 0
        %v518 = vsel %vm342, %v304, 0
        %v521 = vsel %vm342, %v305, 0
        %v524 = vsel %vm342, %v306, 0
        %v527 = vsel %vm342, %v307, 0
        %v530 = vsel %vm342, %v308, 0
        %v533 = vsel %vm342, %v309, 0
        %v536 = vsel %vm342, %v310, 0
        %v539 = vsel %vm342, %v311, 0
        %v542 = vsel %vm342, %v312, 0
        %v545 = vsel %vm342, %v313, 0
        %v548 = vsel %vm342, %v314, 0
        %v551 = vsel %vm342, %v315, 0
        %v554 = vsel %vm342, %v316, 0
        %v557 = vsel %vm342, %v317, 0
        %v560 = vsel %vm342, %v318, 0
        %v563 = vsel %vm342, %v319, 0
        %v566 = vsel %vm342, %v320, 0
        %v569 = vsel %vm342, %v321, 0
        %v572 = vsel %vm342, %v322, 0
        %v575 = vsel %vm342, %v323, 0
        %v578 = vsel %vm342, %v324, 0
        %v581 = vsel %vm342, %v325, 0
        %v584 = vsel %vm342, %v326, 0
        %v587 = vsel %vm342, %v327, 0
        %v590 = vsel %vm342, %v328, 0
        %v593 = vsel %vm342, %v329, 0
        %v596 = vsel %vm342, %v330, 0
        %v599 = vsel %vm342, %v331, 0
        %v602 = vsel %vm342, %v332, 0
        %v605 = vsel %vm342, %v333, 0
        %v608 = vsel %vm342, %v334, 0
        %v611 = vsel %vm342, %v335, 0
        %v614 = vsel %vm342, %v336, 0
        %v617 = vsel %vm342, %v337, 0
        %v620 = vsel %vm342, %v338, 0
        %v623 = vsel %vm342, %v339, 0
        %v626 = vsel %vm342, %v340, 0
        %v629 = vsel %vm342, %v341, 0
        %631 = vmatpush.xpose.msra.mxu0 %v485
        %632 = vmatpush.xpose.msra.mxu0 %v482
        %633 = vmatpush.xpose.msra.mxu0 %v479
        %634 = vmatpush.xpose.msra.mxu0 %v476
        %635 = vmatpush.xpose.msra.mxu0 %v473
        %636 = vmatpush.xpose.msra.mxu0 %v470
        %637 = vmatpush.xpose.msra.mxu0 %v467
        %638 = vmatpush.xpose.msra.mxu0 %v464
        %639 = vmatpush.xpose.msra.mxu0 %v461
        %640 = vmatpush.xpose.msra.mxu0 %v458
        %641 = vmatpush.xpose.msra.mxu0 %v455
        %642 = vmatpush.xpose.msra.mxu0 %v452
        %643 = vmatpush.xpose.msra.mxu0 %v449
        %644 = vmatpush.xpose.msra.mxu0 %v446
        %645 = vmatpush.xpose.msra.mxu0 %v443
        %646 = vmatpush.xpose.msra.mxu0 %v440
        %647 = vmatmul.f32.gmra.mxu0 %v344
        %v648 = vpop.f32.mrf.mxu0
        %v649 = vadd.f32 0.0, %v648
        %650 = vmatmul.f32.gmra.mxu0 %v347
        %v651 = vpop.f32.mrf.mxu0
        %v652 = vadd.f32 0.0, %v651
        %653 = vmatmul.f32.gmra.mxu0 %v350
        %v654 = vpop.f32.mrf.mxu0
        %v655 = vadd.f32 0.0, %v654
        %656 = vmatmul.f32.gmra.mxu0 %v353
        %v657 = vpop.f32.mrf.mxu0
        %v658 = vadd.f32 0.0, %v657
        %659 = vmatmul.f32.gmra.mxu0 %v356
        %v660 = vpop.f32.mrf.mxu0
        %v661 = vadd.f32 0.0, %v660
        %662 = vmatmul.f32.gmra.mxu0 %v359
        %v663 = vpop.f32.mrf.mxu0
        %v664 = vadd.f32 0.0, %v663
        %665 = vmatmul.f32.gmra.mxu0 %v362
        %v666 = vpop.f32.mrf.mxu0
        %v667 = vadd.f32 0.0, %v666
        %668 = vmatmul.f32.gmra.mxu0 %v365
        %v669 = vpop.f32.mrf.mxu0
        %v670 = vadd.f32 0.0, %v669
        %671 = vmatmul.f32.gmra.mxu0 %v368
        %v672 = vpop.f32.mrf.mxu0
        %v673 = vadd.f32 0.0, %v672
        %674 = vmatmul.f32.gmra.mxu0 %v371
        %v675 = vpop.f32.mrf.mxu0
        %v676 = vadd.f32 0.0, %v675
        %677 = vmatmul.f32.gmra.mxu0 %v374
        %v678 = vpop.f32.mrf.mxu0
        %v679 = vadd.f32 0.0, %v678
        %680 = vmatmul.f32.gmra.mxu0 %v377
        %v681 = vpop.f32.mrf.mxu0
        %v682 = vadd.f32 0.0, %v681
        %683 = vmatmul.f32.gmra.mxu0 %v380
        %v684 = vpop.f32.mrf.mxu0
        %v685 = vadd.f32 0.0, %v684
        %686 = vmatmul.f32.gmra.mxu0 %v383
        %v687 = vpop.f32.mrf.mxu0
        %v688 = vadd.f32 0.0, %v687
        %689 = vmatmul.f32.gmra.mxu0 %v386
        %v690 = vpop.f32.mrf.mxu0
        %v691 = vadd.f32 0.0, %v690
        %692 = vmatmul.f32.gmra.mxu0 %v389
        %v693 = vpop.f32.mrf.mxu0
        %v694 = vadd.f32 0.0, %v693
        %695 = vmatmul.f32.gmra.mxu0 %v392
        %v696 = vpop.f32.mrf.mxu0
        %v697 = vadd.f32 0.0, %v696
        %698 = vmatmul.f32.gmra.mxu0 %v395
        %v699 = vpop.f32.mrf.mxu0
        %v700 = vadd.f32 0.0, %v699
        %701 = vmatmul.f32.gmra.mxu0 %v398
        %v702 = vpop.f32.mrf.mxu0
        %v703 = vadd.f32 0.0, %v702
        %704 = vmatmul.f32.gmra.mxu0 %v401
        %v705 = vpop.f32.mrf.mxu0
        %v706 = vadd.f32 0.0, %v705
        %707 = vmatmul.f32.gmra.mxu0 %v404
        %v708 = vpop.f32.mrf.mxu0
        %v709 = vadd.f32 0.0, %v708
        %710 = vmatmul.f32.gmra.mxu0 %v407
        %v711 = vpop.f32.mrf.mxu0
        %v712 = vadd.f32 0.0, %v711
        %713 = vmatmul.f32.gmra.mxu0 %v410
        %v714 = vpop.f32.mrf.mxu0
        %v715 = vadd.f32 0.0, %v714
        %716 = vmatmul.f32.gmra.mxu0 %v413
        %v717 = vpop.f32.mrf.mxu0
        %v718 = vadd.f32 0.0, %v717
        %719 = vmatmul.f32.gmra.mxu0 %v416
        %v720 = vpop.f32.mrf.mxu0
        %v721 = vadd.f32 0.0, %v720
        %722 = vmatmul.f32.gmra.mxu0 %v419
        %v723 = vpop.f32.mrf.mxu0
        %v724 = vadd.f32 0.0, %v723
        %725 = vmatmul.f32.gmra.mxu0 %v422
        %v726 = vpop.f32.mrf.mxu0
        %v727 = vadd.f32 0.0, %v726
        %728 = vmatmul.f32.gmra.mxu0 %v425
        %v729 = vpop.f32.mrf.mxu0
        %v730 = vadd.f32 0.0, %v729
        %731 = vmatmul.f32.gmra.mxu0 %v428
        %v732 = vpop.f32.mrf.mxu0
        %v733 = vadd.f32 0.0, %v732
        %734 = vmatmul.f32.gmra.mxu0 %v431
        %v735 = vpop.f32.mrf.mxu0
        %v736 = vadd.f32 0.0, %v735
        %737 = vmatmul.f32.gmra.mxu0 %v434
        %v738 = vpop.f32.mrf.mxu0
        %v739 = vadd.f32 0.0, %v738
        %740 = vmatmul.f32.gmra.mxu0 %v437
        %v741 = vpop.f32.mrf.mxu0
        %v742 = vadd.f32 0.0, %v741
        %743 = vdwg.mxu0
        %744 = vmatpush.xpose.msra.mxu0 %v533
        %745 = vmatpush.xpose.msra.mxu0 %v530
        %746 = vmatpush.xpose.msra.mxu0 %v527
        %747 = vmatpush.xpose.msra.mxu0 %v524
        %748 = vmatpush.xpose.msra.mxu0 %v521
        %749 = vmatpush.xpose.msra.mxu0 %v518
        %750 = vmatpush.xpose.msra.mxu0 %v515
        %751 = vmatpush.xpose.msra.mxu0 %v512
        %752 = vmatpush.xpose.msra.mxu0 %v509
        %753 = vmatpush.xpose.msra.mxu0 %v506
        %754 = vmatpush.xpose.msra.mxu0 %v503
        %755 = vmatpush.xpose.msra.mxu0 %v500
        %756 = vmatpush.xpose.msra.mxu0 %v497
        %757 = vmatpush.xpose.msra.mxu0 %v494
        %758 = vmatpush.xpose.msra.mxu0 %v491
        %759 = vmatpush.xpose.msra.mxu0 %v488
        %760 = vmatmul.f32.gmra.mxu0 %v344
        %v761 = vpop.f32.mrf.mxu0
        %v762 = vadd.f32 0.0, %v761
        %763 = vmatmul.f32.gmra.mxu0 %v347
        %v764 = vpop.f32.mrf.mxu0
        %v765 = vadd.f32 0.0, %v764
        %766 = vmatmul.f32.gmra.mxu0 %v350
        %v767 = vpop.f32.mrf.mxu0
        %v768 = vadd.f32 0.0, %v767
        %769 = vmatmul.f32.gmra.mxu0 %v353
        %v770 = vpop.f32.mrf.mxu0
        %v771 = vadd.f32 0.0, %v770
        %772 = vmatmul.f32.gmra.mxu0 %v356
        %v773 = vpop.f32.mrf.mxu0
        %v774 = vadd.f32 0.0, %v773
        %775 = vmatmul.f32.gmra.mxu0 %v359
        %v776 = vpop.f32.mrf.mxu0
        %v777 = vadd.f32 0.0, %v776
        %778 = vmatmul.f32.gmra.mxu0 %v362
        %v779 = vpop.f32.mrf.mxu0
        %v780 = vadd.f32 0.0, %v779
        %781 = vmatmul.f32.gmra.mxu0 %v365
        %v782 = vpop.f32.mrf.mxu0
        %v783 = vadd.f32 0.0, %v782
        %784 = vmatmul.f32.gmra.mxu0 %v368
        %v785 = vpop.f32.mrf.mxu0
        %v786 = vadd.f32 0.0, %v785
        %787 = vmatmul.f32.gmra.mxu0 %v371
        %v788 = vpop.f32.mrf.mxu0
        %v789 = vadd.f32 0.0, %v788
        %790 = vmatmul.f32.gmra.mxu0 %v374
        %v791 = vpop.f32.mrf.mxu0
        %v792 = vadd.f32 0.0, %v791
        %793 = vmatmul.f32.gmra.mxu0 %v377
        %v794 = vpop.f32.mrf.mxu0
        %v795 = vadd.f32 0.0, %v794
        %796 = vmatmul.f32.gmra.mxu0 %v380
        %v797 = vpop.f32.mrf.mxu0
        %v798 = vadd.f32 0.0, %v797
        %799 = vmatmul.f32.gmra.mxu0 %v383
        %v800 = vpop.f32.mrf.mxu0
        %v801 = vadd.f32 0.0, %v800
        %802 = vmatmul.f32.gmra.mxu0 %v386
        %v803 = vpop.f32.mrf.mxu0
        %v804 = vadd.f32 0.0, %v803
        %805 = vmatmul.f32.gmra.mxu0 %v389
        %v806 = vpop.f32.mrf.mxu0
        %v807 = vadd.f32 0.0, %v806
        %808 = vmatmul.f32.gmra.mxu0 %v392
        %v809 = vpop.f32.mrf.mxu0
        %v810 = vadd.f32 0.0, %v809
        %811 = vmatmul.f32.gmra.mxu0 %v395
        %v812 = vpop.f32.mrf.mxu0
        %v813 = vadd.f32 0.0, %v812
        %814 = vmatmul.f32.gmra.mxu0 %v398
        %v815 = vpop.f32.mrf.mxu0
        %v816 = vadd.f32 0.0, %v815
        %817 = vmatmul.f32.gmra.mxu0 %v401
        %v818 = vpop.f32.mrf.mxu0
        %v819 = vadd.f32 0.0, %v818
        %820 = vmatmul.f32.gmra.mxu0 %v404
        %v821 = vpop.f32.mrf.mxu0
        %v822 = vadd.f32 0.0, %v821
        %823 = vmatmul.f32.gmra.mxu0 %v407
        %v824 = vpop.f32.mrf.mxu0
        %v825 = vadd.f32 0.0, %v824
        %826 = vmatmul.f32.gmra.mxu0 %v410
        %v827 = vpop.f32.mrf.mxu0
        %v828 = vadd.f32 0.0, %v827
        %829 = vmatmul.f32.gmra.mxu0 %v413
        %v830 = vpop.f32.mrf.mxu0
        %v831 = vadd.f32 0.0, %v830
        %832 = vmatmul.f32.gmra.mxu0 %v416
        %v833 = vpop.f32.mrf.mxu0
        %v834 = vadd.f32 0.0, %v833
        %835 = vmatmul.f32.gmra.mxu0 %v419
        %v836 = vpop.f32.mrf.mxu0
        %v837 = vadd.f32 0.0, %v836
        %838 = vmatmul.f32.gmra.mxu0 %v422
        %v839 = vpop.f32.mrf.mxu0
        %v840 = vadd.f32 0.0, %v839
        %841 = vmatmul.f32.gmra.mxu0 %v425
        %v842 = vpop.f32.mrf.mxu0
        %v843 = vadd.f32 0.0, %v842
        %844 = vmatmul.f32.gmra.mxu0 %v428
        %v845 = vpop.f32.mrf.mxu0
        %v846 = vadd.f32 0.0, %v845
        %847 = vmatmul.f32.gmra.mxu0 %v431
        %v848 = vpop.f32.mrf.mxu0
        %v849 = vadd.f32 0.0, %v848
        %850 = vmatmul.f32.gmra.mxu0 %v434
        %v851 = vpop.f32.mrf.mxu0
        %v852 = vadd.f32 0.0, %v851
        %853 = vmatmul.f32.gmra.mxu0 %v437
        %v854 = vpop.f32.mrf.mxu0
        %v855 = vadd.f32 0.0, %v854
        %856 = vdwg.mxu0
        %857 = vmatpush.xpose.msra.mxu0 %v581
        %858 = vmatpush.xpose.msra.mxu0 %v578
        %859 = vmatpush.xpose.msra.mxu0 %v575
        %860 = vmatpush.xpose.msra.mxu0 %v572
        %861 = vmatpush.xpose.msra.mxu0 %v569
        %862 = vmatpush.xpose.msra.mxu0 %v566
        %863 = vmatpush.xpose.msra.mxu0 %v563
        %864 = vmatpush.xpose.msra.mxu0 %v560
        %865 = vmatpush.xpose.msra.mxu0 %v557
        %866 = vmatpush.xpose.msra.mxu0 %v554
        %867 = vmatpush.xpose.msra.mxu0 %v551
        %868 = vmatpush.xpose.msra.mxu0 %v548
        %869 = vmatpush.xpose.msra.mxu0 %v545
        %870 = vmatpush.xpose.msra.mxu0 %v542
        %871 = vmatpush.xpose.msra.mxu0 %v539
        %872 = vmatpush.xpose.msra.mxu0 %v536
        %873 = vmatmul.f32.gmra.mxu0 %v344
        %v874 = vpop.f32.mrf.mxu0
        %v875 = vadd.f32 0.0, %v874
        %876 = vmatmul.f32.gmra.mxu0 %v347
        %v877 = vpop.f32.mrf.mxu0
        %v878 = vadd.f32 0.0, %v877
        %879 = vmatmul.f32.gmra.mxu0 %v350
        %v880 = vpop.f32.mrf.mxu0
        %v881 = vadd.f32 0.0, %v880
        %882 = vmatmul.f32.gmra.mxu0 %v353
        %v883 = vpop.f32.mrf.mxu0
        %v884 = vadd.f32 0.0, %v883
        %885 = vmatmul.f32.gmra.mxu0 %v356
        %v886 = vpop.f32.mrf.mxu0
        %v887 = vadd.f32 0.0, %v886
        %888 = vmatmul.f32.gmra.mxu0 %v359
        %v889 = vpop.f32.mrf.mxu0
        %v890 = vadd.f32 0.0, %v889
        %891 = vmatmul.f32.gmra.mxu0 %v362
        %v892 = vpop.f32.mrf.mxu0
        %v893 = vadd.f32 0.0, %v892
        %894 = vmatmul.f32.gmra.mxu0 %v365
        %v895 = vpop.f32.mrf.mxu0
        %v896 = vadd.f32 0.0, %v895
        %897 = vmatmul.f32.gmra.mxu0 %v368
        %v898 = vpop.f32.mrf.mxu0
        %v899 = vadd.f32 0.0, %v898
        %900 = vmatmul.f32.gmra.mxu0 %v371
        %v901 = vpop.f32.mrf.mxu0
        %v902 = vadd.f32 0.0, %v901
        %903 = vmatmul.f32.gmra.mxu0 %v374
        %v904 = vpop.f32.mrf.mxu0
        %v905 = vadd.f32 0.0, %v904
        %906 = vmatmul.f32.gmra.mxu0 %v377
        %v907 = vpop.f32.mrf.mxu0
        %v908 = vadd.f32 0.0, %v907
        %909 = vmatmul.f32.gmra.mxu0 %v380
        %v910 = vpop.f32.mrf.mxu0
        %v911 = vadd.f32 0.0, %v910
        %912 = vmatmul.f32.gmra.mxu0 %v383
        %v913 = vpop.f32.mrf.mxu0
        %v914 = vadd.f32 0.0, %v913
        %915 = vmatmul.f32.gmra.mxu0 %v386
        %v916 = vpop.f32.mrf.mxu0
        %v917 = vadd.f32 0.0, %v916
        %918 = vmatmul.f32.gmra.mxu0 %v389
        %v919 = vpop.f32.mrf.mxu0
        %v920 = vadd.f32 0.0, %v919
        %921 = vmatmul.f32.gmra.mxu0 %v392
        %v922 = vpop.f32.mrf.mxu0
        %v923 = vadd.f32 0.0, %v922
        %924 = vmatmul.f32.gmra.mxu0 %v395
        %v925 = vpop.f32.mrf.mxu0
        %v926 = vadd.f32 0.0, %v925
        %927 = vmatmul.f32.gmra.mxu0 %v398
        %v928 = vpop.f32.mrf.mxu0
        %v929 = vadd.f32 0.0, %v928
        %930 = vmatmul.f32.gmra.mxu0 %v401
        %v931 = vpop.f32.mrf.mxu0
        %v932 = vadd.f32 0.0, %v931
        %933 = vmatmul.f32.gmra.mxu0 %v404
        %v934 = vpop.f32.mrf.mxu0
        %v935 = vadd.f32 0.0, %v934
        %936 = vmatmul.f32.gmra.mxu0 %v407
        %v937 = vpop.f32.mrf.mxu0
        %v938 = vadd.f32 0.0, %v937
        %939 = vmatmul.f32.gmra.mxu0 %v410
        %v940 = vpop.f32.mrf.mxu0
        %v941 = vadd.f32 0.0, %v940
        %942 = vmatmul.f32.gmra.mxu0 %v413
        %v943 = vpop.f32.mrf.mxu0
        %v944 = vadd.f32 0.0, %v943
        %945 = vmatmul.f32.gmra.mxu0 %v416
        %v946 = vpop.f32.mrf.mxu0
        %v947 = vadd.f32 0.0, %v946
        %948 = vmatmul.f32.gmra.mxu0 %v419
        %v949 = vpop.f32.mrf.mxu0
        %v950 = vadd.f32 0.0, %v949
        %951 = vmatmul.f32.gmra.mxu0 %v422
        %v952 = vpop.f32.mrf.mxu0
        %v953 = vadd.f32 0.0, %v952
        %954 = vmatmul.f32.gmra.mxu0 %v425
        %v955 = vpop.f32.mrf.mxu0
        %v956 = vadd.f32 0.0, %v955
        %957 = vmatmul.f32.gmra.mxu0 %v428
        %v958 = vpop.f32.mrf.mxu0
        %v959 = vadd.f32 0.0, %v958
        %960 = vmatmul.f32.gmra.mxu0 %v431
        %v961 = vpop.f32.mrf.mxu0
        %v962 = vadd.f32 0.0, %v961
        %963 = vmatmul.f32.gmra.mxu0 %v434
        %v964 = vpop.f32.mrf.mxu0
        %v965 = vadd.f32 0.0, %v964
        %966 = vmatmul.f32.gmra.mxu0 %v437
        %v967 = vpop.f32.mrf.mxu0
        %v968 = vadd.f32 0.0, %v967
        %969 = vdwg.mxu0
        %970 = vmatpush.xpose.msra.mxu0 %v629
        %971 = vmatpush.xpose.msra.mxu0 %v626
        %972 = vmatpush.xpose.msra.mxu0 %v623
        %973 = vmatpush.xpose.msra.mxu0 %v620
        %974 = vmatpush.xpose.msra.mxu0 %v617
        %975 = vmatpush.xpose.msra.mxu0 %v614
        %976 = vmatpush.xpose.msra.mxu0 %v611
        %977 = vmatpush.xpose.msra.mxu0 %v608
        %978 = vmatpush.xpose.msra.mxu0 %v605
        %979 = vmatpush.xpose.msra.mxu0 %v602
        %980 = vmatpush.xpose.msra.mxu0 %v599
        %981 = vmatpush.xpose.msra.mxu0 %v596
        %982 = vmatpush.xpose.msra.mxu0 %v593
        %983 = vmatpush.xpose.msra.mxu0 %v590
        %984 = vmatpush.xpose.msra.mxu0 %v587
        %985 = vmatpush.xpose.msra.mxu0 %v584
        %986 = vmatmul.f32.gmra.mxu0 %v344
        %v987 = vpop.f32.mrf.mxu0
        %v988 = vadd.f32 0.0, %v987
        %989 = vmatmul.f32.gmra.mxu0 %v347
        %v990 = vpop.f32.mrf.mxu0
        %v991 = vadd.f32 0.0, %v990
        %992 = vmatmul.f32.gmra.mxu0 %v350
        %v993 = vpop.f32.mrf.mxu0
        %v994 = vadd.f32 0.0, %v993
        %995 = vmatmul.f32.gmra.mxu0 %v353
        %v996 = vpop.f32.mrf.mxu0
        %v997 = vadd.f32 0.0, %v996
        %998 = vmatmul.f32.gmra.mxu0 %v356
        %v999 = vpop.f32.mrf.mxu0
        %v1000 = vadd.f32 0.0, %v999
        %1001 = vmatmul.f32.gmra.mxu0 %v359
        %v1002 = vpop.f32.mrf.mxu0
        %v1003 = vadd.f32 0.0, %v1002
        %1004 = vmatmul.f32.gmra.mxu0 %v362
        %v1005 = vpop.f32.mrf.mxu0
        %v1006 = vadd.f32 0.0, %v1005
        %1007 = vmatmul.f32.gmra.mxu0 %v365
        %v1008 = vpop.f32.mrf.mxu0
        %v1009 = vadd.f32 0.0, %v1008
        %1010 = vmatmul.f32.gmra.mxu0 %v368
        %v1011 = vpop.f32.mrf.mxu0
        %v1012 = vadd.f32 0.0, %v1011
        %1013 = vmatmul.f32.gmra.mxu0 %v371
        %v1014 = vpop.f32.mrf.mxu0
        %v1015 = vadd.f32 0.0, %v1014
        %1016 = vmatmul.f32.gmra.mxu0 %v374
        %v1017 = vpop.f32.mrf.mxu0
        %v1018 = vadd.f32 0.0, %v1017
        %1019 = vmatmul.f32.gmra.mxu0 %v377
        %v1020 = vpop.f32.mrf.mxu0
        %v1021 = vadd.f32 0.0, %v1020
        %1022 = vmatmul.f32.gmra.mxu0 %v380
        %v1023 = vpop.f32.mrf.mxu0
        %v1024 = vadd.f32 0.0, %v1023
        %1025 = vmatmul.f32.gmra.mxu0 %v383
        %v1026 = vpop.f32.mrf.mxu0
        %v1027 = vadd.f32 0.0, %v1026
        %1028 = vmatmul.f32.gmra.mxu0 %v386
        %v1029 = vpop.f32.mrf.mxu0
        %v1030 = vadd.f32 0.0, %v1029
        %1031 = vmatmul.f32.gmra.mxu0 %v389
        %v1032 = vpop.f32.mrf.mxu0
        %v1033 = vadd.f32 0.0, %v1032
        %1034 = vmatmul.f32.gmra.mxu0 %v392
        %v1035 = vpop.f32.mrf.mxu0
        %v1036 = vadd.f32 0.0, %v1035
        %1037 = vmatmul.f32.gmra.mxu0 %v395
        %v1038 = vpop.f32.mrf.mxu0
        %v1039 = vadd.f32 0.0, %v1038
        %1040 = vmatmul.f32.gmra.mxu0 %v398
        %v1041 = vpop.f32.mrf.mxu0
        %v1042 = vadd.f32 0.0, %v1041
        %1043 = vmatmul.f32.gmra.mxu0 %v401
        %v1044 = vpop.f32.mrf.mxu0
        %v1045 = vadd.f32 0.0, %v1044
        %1046 = vmatmul.f32.gmra.mxu0 %v404
        %v1047 = vpop.f32.mrf.mxu0
        %v1048 = vadd.f32 0.0, %v1047
        %1049 = vmatmul.f32.gmra.mxu0 %v407
        %v1050 = vpop.f32.mrf.mxu0
        %v1051 = vadd.f32 0.0, %v1050
        %1052 = vmatmul.f32.gmra.mxu0 %v410
        %v1053 = vpop.f32.mrf.mxu0
        %v1054 = vadd.f32 0.0, %v1053
        %1055 = vmatmul.f32.gmra.mxu0 %v413
        %v1056 = vpop.f32.mrf.mxu0
        %v1057 = vadd.f32 0.0, %v1056
        %1058 = vmatmul.f32.gmra.mxu0 %v416
        %v1059 = vpop.f32.mrf.mxu0
        %v1060 = vadd.f32 0.0, %v1059
        %1061 = vmatmul.f32.gmra.mxu0 %v419
        %v1062 = vpop.f32.mrf.mxu0
        %v1063 = vadd.f32 0.0, %v1062
        %1064 = vmatmul.f32.gmra.mxu0 %v422
        %v1065 = vpop.f32.mrf.mxu0
        %v1066 = vadd.f32 0.0, %v1065
        %1067 = vmatmul.f32.gmra.mxu0 %v425
        %v1068 = vpop.f32.mrf.mxu0
        %v1069 = vadd.f32 0.0, %v1068
        %1070 = vmatmul.f32.gmra.mxu0 %v428
        %v1071 = vpop.f32.mrf.mxu0
        %v1072 = vadd.f32 0.0, %v1071
        %1073 = vmatmul.f32.gmra.mxu0 %v431
        %v1074 = vpop.f32.mrf.mxu0
        %v1075 = vadd.f32 0.0, %v1074
        %1076 = vmatmul.f32.gmra.mxu0 %v434
        %v1077 = vpop.f32.mrf.mxu0
        %v1078 = vadd.f32 0.0, %v1077
        %1079 = vmatmul.f32.gmra.mxu0 %v437
        %v1080 = vpop.f32.mrf.mxu0
        %v1081 = vadd.f32 0.0, %v1080
        %1082 = vdwg.mxu0
        %v1083 = vld [vmem:[%s2] sm:$0xf]
        %v1084 = vmul.f32 %v649, 2.0
        %v1085 = vmul.f32 %v762, 2.0
        %v1086 = vmul.f32 %v875, 2.0
        %v1087 = vmul.f32 %v988, 2.0
        %v1088 = vmul.f32 %v652, 2.0
        %v1089 = vmul.f32 %v765, 2.0
        %v1090 = vmul.f32 %v878, 2.0
        %v1091 = vmul.f32 %v991, 2.0
        %v1092 = vmul.f32 %v655, 2.0
        %v1093 = vmul.f32 %v768, 2.0
        %v1094 = vmul.f32 %v881, 2.0
        %v1095 = vmul.f32 %v994, 2.0
        %v1096 = vmul.f32 %v658, 2.0
        %v1097 = vmul.f32 %v771, 2.0
        %v1098 = vmul.f32 %v884, 2.0
        %v1099 = vmul.f32 %v997, 2.0
        %v1100 = vmul.f32 %v661, 2.0
        %v1101 = vmul.f32 %v774, 2.0
        %v1102 = vmul.f32 %v887, 2.0
        %v1103 = vmul.f32 %v1000, 2.0
        %v1104 = vmul.f32 %v664, 2.0
        %v1105 = vmul.f32 %v777, 2.0
        %v1106 = vmul.f32 %v890, 2.0
        %v1107 = vmul.f32 %v1003, 2.0
        %v1108 = vmul.f32 %v667, 2.0
        %v1109 = vmul.f32 %v780, 2.0
        %v1110 = vmul.f32 %v893, 2.0
        %v1111 = vmul.f32 %v1006, 2.0
        %v1112 = vmul.f32 %v670, 2.0
        %v1113 = vmul.f32 %v783, 2.0
        %v1114 = vmul.f32 %v896, 2.0
        %v1115 = vmul.f32 %v1009, 2.0
        %v1116 = vmul.f32 %v673, 2.0
        %v1117 = vmul.f32 %v786, 2.0
        %v1118 = vmul.f32 %v899, 2.0
        %v1119 = vmul.f32 %v1012, 2.0
        %v1120 = vmul.f32 %v676, 2.0
        %v1121 = vmul.f32 %v789, 2.0
        %v1122 = vmul.f32 %v902, 2.0
        %v1123 = vmul.f32 %v1015, 2.0
        %v1124 = vmul.f32 %v679, 2.0
        %v1125 = vmul.f32 %v792, 2.0
        %v1126 = vmul.f32 %v905, 2.0
        %v1127 = vmul.f32 %v1018, 2.0
        %v1128 = vmul.f32 %v682, 2.0
        %v1129 = vmul.f32 %v795, 2.0
        %v1130 = vmul.f32 %v908, 2.0
        %v1131 = vmul.f32 %v1021, 2.0
        %v1132 = vmul.f32 %v685, 2.0
        %v1133 = vmul.f32 %v798, 2.0
        %v1134 = vmul.f32 %v911, 2.0
        %v1135 = vmul.f32 %v1024, 2.0
        %v1136 = vmul.f32 %v688, 2.0
        %v1137 = vmul.f32 %v801, 2.0
        %v1138 = vmul.f32 %v914, 2.0
        %v1139 = vmul.f32 %v1027, 2.0
        %v1140 = vmul.f32 %v691, 2.0
        %v1141 = vmul.f32 %v804, 2.0
        %v1142 = vmul.f32 %v917, 2.0
        %v1143 = vmul.f32 %v1030, 2.0
        %v1144 = vmul.f32 %v694, 2.0
        %v1145 = vmul.f32 %v807, 2.0
        %v1146 = vmul.f32 %v920, 2.0
        %v1147 = vmul.f32 %v1033, 2.0
        %v1148 = vmul.f32 %v697, 2.0
        %v1149 = vmul.f32 %v810, 2.0
        %v1150 = vmul.f32 %v923, 2.0
        %v1151 = vmul.f32 %v1036, 2.0
        %v1152 = vmul.f32 %v700, 2.0
        %v1153 = vmul.f32 %v813, 2.0
        %v1154 = vmul.f32 %v926, 2.0
        %v1155 = vmul.f32 %v1039, 2.0
        %v1156 = vmul.f32 %v703, 2.0
        %v1157 = vmul.f32 %v816, 2.0
        %v1158 = vmul.f32 %v929, 2.0
        %v1159 = vmul.f32 %v1042, 2.0
        %v1160 = vmul.f32 %v706, 2.0
        %v1161 = vmul.f32 %v819, 2.0
        %v1162 = vmul.f32 %v932, 2.0
        %v1163 = vmul.f32 %v1045, 2.0
        %v1164 = vmul.f32 %v709, 2.0
        %v1165 = vmul.f32 %v822, 2.0
        %v1166 = vmul.f32 %v935, 2.0
        %v1167 = vmul.f32 %v1048, 2.0
        %v1168 = vmul.f32 %v712, 2.0
        %v1169 = vmul.f32 %v825, 2.0
        %v1170 = vmul.f32 %v938, 2.0
        %v1171 = vmul.f32 %v1051, 2.0
        %v1172 = vmul.f32 %v715, 2.0
        %v1173 = vmul.f32 %v828, 2.0
        %v1174 = vmul.f32 %v941, 2.0
        %v1175 = vmul.f32 %v1054, 2.0
        %v1176 = vmul.f32 %v718, 2.0
        %v1177 = vmul.f32 %v831, 2.0
        %v1178 = vmul.f32 %v944, 2.0
        %v1179 = vmul.f32 %v1057, 2.0
        %v1180 = vmul.f32 %v721, 2.0
        %v1181 = vmul.f32 %v834, 2.0
        %v1182 = vmul.f32 %v947, 2.0
        %v1183 = vmul.f32 %v1060, 2.0
        %v1184 = vmul.f32 %v724, 2.0
        %v1185 = vmul.f32 %v837, 2.0
        %v1186 = vmul.f32 %v950, 2.0
        %v1187 = vmul.f32 %v1063, 2.0
        %v1188 = vmul.f32 %v727, 2.0
        %v1189 = vmul.f32 %v840, 2.0
        %v1190 = vmul.f32 %v953, 2.0
        %v1191 = vmul.f32 %v1066, 2.0
        %v1192 = vmul.f32 %v730, 2.0
        %v1193 = vmul.f32 %v843, 2.0
        %v1194 = vmul.f32 %v956, 2.0
        %v1195 = vmul.f32 %v1069, 2.0
        %v1196 = vmul.f32 %v733, 2.0
        %v1197 = vmul.f32 %v846, 2.0
        %v1198 = vmul.f32 %v959, 2.0
        %v1199 = vmul.f32 %v1072, 2.0
        %v1200 = vmul.f32 %v736, 2.0
        %v1201 = vmul.f32 %v849, 2.0
        %v1202 = vmul.f32 %v962, 2.0
        %v1203 = vmul.f32 %v1075, 2.0
        %v1204 = vmul.f32 %v739, 2.0
        %v1205 = vmul.f32 %v852, 2.0
        %v1206 = vmul.f32 %v965, 2.0
        %v1207 = vmul.f32 %v1078, 2.0
        %v1208 = vmul.f32 %v742, 2.0
        %v1209 = vmul.f32 %v855, 2.0
        %v1210 = vmul.f32 %v968, 2.0
        %v1211 = vmul.f32 %v1081, 2.0
        %v1213 = vperm.slane %v1083, 0
        %v1214 = vperm.slane %v1083, 1
        %v1215 = vperm.slane %v1083, 2
        %v1216 = vperm.slane %v1083, 3
        %v1221 = vsub.f32 %v1213, %v1084
        %v1222 = vsub.f32 %v1214, %v1085
        %v1223 = vsub.f32 %v1215, %v1086
        %v1224 = vsub.f32 %v1216, %v1087
        %v1225 = vsub.f32 %v1213, %v1088
        %v1226 = vsub.f32 %v1214, %v1089
        %v1227 = vsub.f32 %v1215, %v1090
        %v1228 = vsub.f32 %v1216, %v1091
        %v1229 = vsub.f32 %v1213, %v1092
        %v1230 = vsub.f32 %v1214, %v1093
        %v1231 = vsub.f32 %v1215, %v1094
        %v1232 = vsub.f32 %v1216, %v1095
        %v1233 = vsub.f32 %v1213, %v1096
        %v1234 = vsub.f32 %v1214, %v1097
        %v1235 = vsub.f32 %v1215, %v1098
        %v1236 = vsub.f32 %v1216, %v1099
        %v1237 = vsub.f32 %v1213, %v1100
        %v1238 = vsub.f32 %v1214, %v1101
        %v1239 = vsub.f32 %v1215, %v1102
        %v1240 = vsub.f32 %v1216, %v1103
        %v1241 = vsub.f32 %v1213, %v1104
        %v1242 = vsub.f32 %v1214, %v1105
        %v1243 = vsub.f32 %v1215, %v1106
        %v1244 = vsub.f32 %v1216, %v1107
        %v1245 = vsub.f32 %v1213, %v1108
        %v1246 = vsub.f32 %v1214, %v1109
        %v1247 = vsub.f32 %v1215, %v1110
        %v1248 = vsub.f32 %v1216, %v1111
        %v1249 = vsub.f32 %v1213, %v1112
        %v1250 = vsub.f32 %v1214, %v1113
        %v1251 = vsub.f32 %v1215, %v1114
        %v1252 = vsub.f32 %v1216, %v1115
        %v1253 = vsub.f32 %v1213, %v1116
        %v1254 = vsub.f32 %v1214, %v1117
        %v1255 = vsub.f32 %v1215, %v1118
        %v1256 = vsub.f32 %v1216, %v1119
        %v1257 = vsub.f32 %v1213, %v1120
        %v1258 = vsub.f32 %v1214, %v1121
        %v1259 = vsub.f32 %v1215, %v1122
        %v1260 = vsub.f32 %v1216, %v1123
        %v1261 = vsub.f32 %v1213, %v1124
        %v1262 = vsub.f32 %v1214, %v1125
        %v1263 = vsub.f32 %v1215, %v1126
        %v1264 = vsub.f32 %v1216, %v1127
        %v1265 = vsub.f32 %v1213, %v1128
        %v1266 = vsub.f32 %v1214, %v1129
        %v1267 = vsub.f32 %v1215, %v1130
        %v1268 = vsub.f32 %v1216, %v1131
        %v1269 = vsub.f32 %v1213, %v1132
        %v1270 = vsub.f32 %v1214, %v1133
        %v1271 = vsub.f32 %v1215, %v1134
        %v1272 = vsub.f32 %v1216, %v1135
        %v1273 = vsub.f32 %v1213, %v1136
        %v1274 = vsub.f32 %v1214, %v1137
        %v1275 = vsub.f32 %v1215, %v1138
        %v1276 = vsub.f32 %v1216, %v1139
        %v1277 = vsub.f32 %v1213, %v1140
        %v1278 = vsub.f32 %v1214, %v1141
        %v1279 = vsub.f32 %v1215, %v1142
        %v1280 = vsub.f32 %v1216, %v1143
        %v1281 = vsub.f32 %v1213, %v1144
        %v1282 = vsub.f32 %v1214, %v1145
        %v1283 = vsub.f32 %v1215, %v1146
        %v1284 = vsub.f32 %v1216, %v1147
        %v1285 = vsub.f32 %v1213, %v1148
        %v1286 = vsub.f32 %v1214, %v1149
        %v1287 = vsub.f32 %v1215, %v1150
        %v1288 = vsub.f32 %v1216, %v1151
        %v1289 = vsub.f32 %v1213, %v1152
        %v1290 = vsub.f32 %v1214, %v1153
        %v1291 = vsub.f32 %v1215, %v1154
        %v1292 = vsub.f32 %v1216, %v1155
        %v1293 = vsub.f32 %v1213, %v1156
        %v1294 = vsub.f32 %v1214, %v1157
        %v1295 = vsub.f32 %v1215, %v1158
        %v1296 = vsub.f32 %v1216, %v1159
        %v1297 = vsub.f32 %v1213, %v1160
        %v1298 = vsub.f32 %v1214, %v1161
        %v1299 = vsub.f32 %v1215, %v1162
        %v1300 = vsub.f32 %v1216, %v1163
        %v1301 = vsub.f32 %v1213, %v1164
        %v1302 = vsub.f32 %v1214, %v1165
        %v1303 = vsub.f32 %v1215, %v1166
        %v1304 = vsub.f32 %v1216, %v1167
        %v1305 = vsub.f32 %v1213, %v1168
        %v1306 = vsub.f32 %v1214, %v1169
        %v1307 = vsub.f32 %v1215, %v1170
        %v1308 = vsub.f32 %v1216, %v1171
        %v1309 = vsub.f32 %v1213, %v1172
        %v1310 = vsub.f32 %v1214, %v1173
        %v1311 = vsub.f32 %v1215, %v1174
        %v1312 = vsub.f32 %v1216, %v1175
        %v1313 = vsub.f32 %v1213, %v1176
        %v1314 = vsub.f32 %v1214, %v1177
        %v1315 = vsub.f32 %v1215, %v1178
        %v1316 = vsub.f32 %v1216, %v1179
        %v1317 = vsub.f32 %v1213, %v1180
        %v1318 = vsub.f32 %v1214, %v1181
        %v1319 = vsub.f32 %v1215, %v1182
        %v1320 = vsub.f32 %v1216, %v1183
        %v1321 = vsub.f32 %v1213, %v1184
        %v1322 = vsub.f32 %v1214, %v1185
        %v1323 = vsub.f32 %v1215, %v1186
        %v1324 = vsub.f32 %v1216, %v1187
        %v1325 = vsub.f32 %v1213, %v1188
        %v1326 = vsub.f32 %v1214, %v1189
        %v1327 = vsub.f32 %v1215, %v1190
        %v1328 = vsub.f32 %v1216, %v1191
        %v1329 = vsub.f32 %v1213, %v1192
        %v1330 = vsub.f32 %v1214, %v1193
        %v1331 = vsub.f32 %v1215, %v1194
        %v1332 = vsub.f32 %v1216, %v1195
        %v1333 = vsub.f32 %v1213, %v1196
        %v1334 = vsub.f32 %v1214, %v1197
        %v1335 = vsub.f32 %v1215, %v1198
        %v1336 = vsub.f32 %v1216, %v1199
        %v1337 = vsub.f32 %v1213, %v1200
        %v1338 = vsub.f32 %v1214, %v1201
        %v1339 = vsub.f32 %v1215, %v1202
        %v1340 = vsub.f32 %v1216, %v1203
        %v1341 = vsub.f32 %v1213, %v1204
        %v1342 = vsub.f32 %v1214, %v1205
        %v1343 = vsub.f32 %v1215, %v1206
        %v1344 = vsub.f32 %v1216, %v1207
        %v1345 = vsub.f32 %v1213, %v1208
        %v1346 = vsub.f32 %v1214, %v1209
        %v1347 = vsub.f32 %v1215, %v1210
        %v1348 = vsub.f32 %v1216, %v1211
        %v1349 = vlaneseq
        %v1350 = vand.u32 %v1349, 127
        %v1351 = vadd.s32 %v1350, 128
        %v1352 = vadd.s32 %v1350, 256
        %v1353 = vadd.s32 %v1350, 384
        %v1354 = vmin.f32 %v1221, %v1222
        %v1355 = vmin.f32 %v1354, %v1223
        %v1356 = vmin.f32 %v1355, %v1224
        %1357 = vmin.xlane.f32.xlu0 %v1356
        %v1358 = vpop.xlane.xlu0 %1357
        %v1359 = vmin.f32 %v1225, %v1226
        %v1360 = vmin.f32 %v1359, %v1227
        %v1361 = vmin.f32 %v1360, %v1228
        %1362 = vmin.xlane.f32.xlu0 %v1361
        %v1363 = vpop.xlane.xlu0 %1362
        %v1364 = vmin.f32 %v1229, %v1230
        %v1365 = vmin.f32 %v1364, %v1231
        %v1366 = vmin.f32 %v1365, %v1232
        %1367 = vmin.xlane.f32.xlu0 %v1366
        %v1368 = vpop.xlane.xlu0 %1367
        %v1369 = vmin.f32 %v1233, %v1234
        %v1370 = vmin.f32 %v1369, %v1235
        %v1371 = vmin.f32 %v1370, %v1236
        %1372 = vmin.xlane.f32.xlu0 %v1371
        %v1373 = vpop.xlane.xlu0 %1372
        %v1374 = vmin.f32 %v1237, %v1238
        %v1375 = vmin.f32 %v1374, %v1239
        %v1376 = vmin.f32 %v1375, %v1240
        %1377 = vmin.xlane.f32.xlu0 %v1376
        %v1378 = vpop.xlane.xlu0 %1377
        %v1379 = vmin.f32 %v1241, %v1242
        %v1380 = vmin.f32 %v1379, %v1243
        %v1381 = vmin.f32 %v1380, %v1244
        %1382 = vmin.xlane.f32.xlu0 %v1381
        %v1383 = vpop.xlane.xlu0 %1382
        %v1384 = vmin.f32 %v1245, %v1246
        %v1385 = vmin.f32 %v1384, %v1247
        %v1386 = vmin.f32 %v1385, %v1248
        %1387 = vmin.xlane.f32.xlu0 %v1386
        %v1388 = vpop.xlane.xlu0 %1387
        %v1389 = vmin.f32 %v1249, %v1250
        %v1390 = vmin.f32 %v1389, %v1251
        %v1391 = vmin.f32 %v1390, %v1252
        %1392 = vmin.xlane.f32.xlu0 %v1391
        %v1393 = vpop.xlane.xlu0 %1392
        %v1394 = vmin.f32 %v1253, %v1254
        %v1395 = vmin.f32 %v1394, %v1255
        %v1396 = vmin.f32 %v1395, %v1256
        %1397 = vmin.xlane.f32.xlu0 %v1396
        %v1398 = vpop.xlane.xlu0 %1397
        %v1399 = vmin.f32 %v1257, %v1258
        %v1400 = vmin.f32 %v1399, %v1259
        %v1401 = vmin.f32 %v1400, %v1260
        %1402 = vmin.xlane.f32.xlu0 %v1401
        %v1403 = vpop.xlane.xlu0 %1402
        %v1404 = vmin.f32 %v1261, %v1262
        %v1405 = vmin.f32 %v1404, %v1263
        %v1406 = vmin.f32 %v1405, %v1264
        %1407 = vmin.xlane.f32.xlu0 %v1406
        %v1408 = vpop.xlane.xlu0 %1407
        %v1409 = vmin.f32 %v1265, %v1266
        %v1410 = vmin.f32 %v1409, %v1267
        %v1411 = vmin.f32 %v1410, %v1268
        %1412 = vmin.xlane.f32.xlu0 %v1411
        %v1413 = vpop.xlane.xlu0 %1412
        %v1414 = vmin.f32 %v1269, %v1270
        %v1415 = vmin.f32 %v1414, %v1271
        %v1416 = vmin.f32 %v1415, %v1272
        %1417 = vmin.xlane.f32.xlu0 %v1416
        %v1418 = vpop.xlane.xlu0 %1417
        %v1419 = vmin.f32 %v1273, %v1274
        %v1420 = vmin.f32 %v1419, %v1275
        %v1421 = vmin.f32 %v1420, %v1276
        %1422 = vmin.xlane.f32.xlu0 %v1421
        %v1423 = vpop.xlane.xlu0 %1422
        %v1424 = vmin.f32 %v1277, %v1278
        %v1425 = vmin.f32 %v1424, %v1279
        %v1426 = vmin.f32 %v1425, %v1280
        %1427 = vmin.xlane.f32.xlu0 %v1426
        %v1428 = vpop.xlane.xlu0 %1427
        %v1429 = vmin.f32 %v1281, %v1282
        %v1430 = vmin.f32 %v1429, %v1283
        %v1431 = vmin.f32 %v1430, %v1284
        %1432 = vmin.xlane.f32.xlu0 %v1431
        %v1433 = vpop.xlane.xlu0 %1432
        %v1434 = vmin.f32 %v1285, %v1286
        %v1435 = vmin.f32 %v1434, %v1287
        %v1436 = vmin.f32 %v1435, %v1288
        %1437 = vmin.xlane.f32.xlu0 %v1436
        %v1438 = vpop.xlane.xlu0 %1437
        %v1439 = vmin.f32 %v1289, %v1290
        %v1440 = vmin.f32 %v1439, %v1291
        %v1441 = vmin.f32 %v1440, %v1292
        %1442 = vmin.xlane.f32.xlu0 %v1441
        %v1443 = vpop.xlane.xlu0 %1442
        %v1444 = vmin.f32 %v1293, %v1294
        %v1445 = vmin.f32 %v1444, %v1295
        %v1446 = vmin.f32 %v1445, %v1296
        %1447 = vmin.xlane.f32.xlu0 %v1446
        %v1448 = vpop.xlane.xlu0 %1447
        %v1449 = vmin.f32 %v1297, %v1298
        %v1450 = vmin.f32 %v1449, %v1299
        %v1451 = vmin.f32 %v1450, %v1300
        %1452 = vmin.xlane.f32.xlu0 %v1451
        %v1453 = vpop.xlane.xlu0 %1452
        %v1454 = vmin.f32 %v1301, %v1302
        %v1455 = vmin.f32 %v1454, %v1303
        %v1456 = vmin.f32 %v1455, %v1304
        %1457 = vmin.xlane.f32.xlu0 %v1456
        %v1458 = vpop.xlane.xlu0 %1457
        %v1459 = vmin.f32 %v1305, %v1306
        %v1460 = vmin.f32 %v1459, %v1307
        %v1461 = vmin.f32 %v1460, %v1308
        %1462 = vmin.xlane.f32.xlu0 %v1461
        %v1463 = vpop.xlane.xlu0 %1462
        %v1464 = vmin.f32 %v1309, %v1310
        %v1465 = vmin.f32 %v1464, %v1311
        %v1466 = vmin.f32 %v1465, %v1312
        %1467 = vmin.xlane.f32.xlu0 %v1466
        %v1468 = vpop.xlane.xlu0 %1467
        %v1469 = vmin.f32 %v1313, %v1314
        %v1470 = vmin.f32 %v1469, %v1315
        %v1471 = vmin.f32 %v1470, %v1316
        %1472 = vmin.xlane.f32.xlu0 %v1471
        %v1473 = vpop.xlane.xlu0 %1472
        %v1474 = vmin.f32 %v1317, %v1318
        %v1475 = vmin.f32 %v1474, %v1319
        %v1476 = vmin.f32 %v1475, %v1320
        %1477 = vmin.xlane.f32.xlu0 %v1476
        %v1478 = vpop.xlane.xlu0 %1477
        %v1479 = vmin.f32 %v1321, %v1322
        %v1480 = vmin.f32 %v1479, %v1323
        %v1481 = vmin.f32 %v1480, %v1324
        %1482 = vmin.xlane.f32.xlu0 %v1481
        %v1483 = vpop.xlane.xlu0 %1482
        %v1484 = vmin.f32 %v1325, %v1326
        %v1485 = vmin.f32 %v1484, %v1327
        %v1486 = vmin.f32 %v1485, %v1328
        %1487 = vmin.xlane.f32.xlu0 %v1486
        %v1488 = vpop.xlane.xlu0 %1487
        %v1489 = vmin.f32 %v1329, %v1330
        %v1490 = vmin.f32 %v1489, %v1331
        %v1491 = vmin.f32 %v1490, %v1332
        %1492 = vmin.xlane.f32.xlu0 %v1491
        %v1493 = vpop.xlane.xlu0 %1492
        %v1494 = vmin.f32 %v1333, %v1334
        %v1495 = vmin.f32 %v1494, %v1335
        %v1496 = vmin.f32 %v1495, %v1336
        %1497 = vmin.xlane.f32.xlu0 %v1496
        %v1498 = vpop.xlane.xlu0 %1497
        %v1499 = vmin.f32 %v1337, %v1338
        %v1500 = vmin.f32 %v1499, %v1339
        %v1501 = vmin.f32 %v1500, %v1340
        %1502 = vmin.xlane.f32.xlu0 %v1501
        %v1503 = vpop.xlane.xlu0 %1502
        %v1504 = vmin.f32 %v1341, %v1342
        %v1505 = vmin.f32 %v1504, %v1343
        %v1506 = vmin.f32 %v1505, %v1344
        %1507 = vmin.xlane.f32.xlu0 %v1506
        %v1508 = vpop.xlane.xlu0 %1507
        %v1509 = vmin.f32 %v1345, %v1346
        %v1510 = vmin.f32 %v1509, %v1347
        %v1511 = vmin.f32 %v1510, %v1348
        %1512 = vmin.xlane.f32.xlu0 %v1511
        %v1513 = vpop.xlane.xlu0 %1512
        %vm1514 = vcmp.eq.f32.partialorder %v1221, %v1358
        %vm1515 = vcmp.eq.f32.partialorder %v1222, %v1358
        %vm1516 = vcmp.eq.f32.partialorder %v1223, %v1358
        %vm1517 = vcmp.eq.f32.partialorder %v1224, %v1358
        %vm1518 = vcmp.eq.f32.partialorder %v1225, %v1363
        %vm1519 = vcmp.eq.f32.partialorder %v1226, %v1363
        %vm1520 = vcmp.eq.f32.partialorder %v1227, %v1363
        %vm1521 = vcmp.eq.f32.partialorder %v1228, %v1363
        %vm1522 = vcmp.eq.f32.partialorder %v1229, %v1368
        %vm1523 = vcmp.eq.f32.partialorder %v1230, %v1368
        %vm1524 = vcmp.eq.f32.partialorder %v1231, %v1368
        %vm1525 = vcmp.eq.f32.partialorder %v1232, %v1368
        %vm1526 = vcmp.eq.f32.partialorder %v1233, %v1373
        %vm1527 = vcmp.eq.f32.partialorder %v1234, %v1373
        %vm1528 = vcmp.eq.f32.partialorder %v1235, %v1373
        %vm1529 = vcmp.eq.f32.partialorder %v1236, %v1373
        %vm1530 = vcmp.eq.f32.partialorder %v1237, %v1378
        %vm1531 = vcmp.eq.f32.partialorder %v1238, %v1378
        %vm1532 = vcmp.eq.f32.partialorder %v1239, %v1378
        %vm1533 = vcmp.eq.f32.partialorder %v1240, %v1378
        %vm1534 = vcmp.eq.f32.partialorder %v1241, %v1383
        %vm1535 = vcmp.eq.f32.partialorder %v1242, %v1383
        %vm1536 = vcmp.eq.f32.partialorder %v1243, %v1383
        %vm1537 = vcmp.eq.f32.partialorder %v1244, %v1383
        %vm1538 = vcmp.eq.f32.partialorder %v1245, %v1388
        %vm1539 = vcmp.eq.f32.partialorder %v1246, %v1388
        %vm1540 = vcmp.eq.f32.partialorder %v1247, %v1388
        %vm1541 = vcmp.eq.f32.partialorder %v1248, %v1388
        %vm1542 = vcmp.eq.f32.partialorder %v1249, %v1393
        %vm1543 = vcmp.eq.f32.partialorder %v1250, %v1393
        %vm1544 = vcmp.eq.f32.partialorder %v1251, %v1393
        %vm1545 = vcmp.eq.f32.partialorder %v1252, %v1393
        %vm1546 = vcmp.eq.f32.partialorder %v1253, %v1398
        %vm1547 = vcmp.eq.f32.partialorder %v1254, %v1398
        %vm1548 = vcmp.eq.f32.partialorder %v1255, %v1398
        %vm1549 = vcmp.eq.f32.partialorder %v1256, %v1398
        %vm1550 = vcmp.eq.f32.partialorder %v1257, %v1403
        %vm1551 = vcmp.eq.f32.partialorder %v1258, %v1403
        %vm1552 = vcmp.eq.f32.partialorder %v1259, %v1403
        %vm1553 = vcmp.eq.f32.partialorder %v1260, %v1403
        %vm1554 = vcmp.eq.f32.partialorder %v1261, %v1408
        %vm1555 = vcmp.eq.f32.partialorder %v1262, %v1408
        %vm1556 = vcmp.eq.f32.partialorder %v1263, %v1408
        %vm1557 = vcmp.eq.f32.partialorder %v1264, %v1408
        %vm1558 = vcmp.eq.f32.partialorder %v1265, %v1413
        %vm1559 = vcmp.eq.f32.partialorder %v1266, %v1413
        %vm1560 = vcmp.eq.f32.partialorder %v1267, %v1413
        %vm1561 = vcmp.eq.f32.partialorder %v1268, %v1413
        %vm1562 = vcmp.eq.f32.partialorder %v1269, %v1418
        %vm1563 = vcmp.eq.f32.partialorder %v1270, %v1418
        %vm1564 = vcmp.eq.f32.partialorder %v1271, %v1418
        %vm1565 = vcmp.eq.f32.partialorder %v1272, %v1418
        %vm1566 = vcmp.eq.f32.partialorder %v1273, %v1423
        %vm1567 = vcmp.eq.f32.partialorder %v1274, %v1423
        %vm1568 = vcmp.eq.f32.partialorder %v1275, %v1423
        %vm1569 = vcmp.eq.f32.partialorder %v1276, %v1423
        %vm1570 = vcmp.eq.f32.partialorder %v1277, %v1428
        %vm1571 = vcmp.eq.f32.partialorder %v1278, %v1428
        %vm1572 = vcmp.eq.f32.partialorder %v1279, %v1428
        %vm1573 = vcmp.eq.f32.partialorder %v1280, %v1428
        %vm1574 = vcmp.eq.f32.partialorder %v1281, %v1433
        %vm1575 = vcmp.eq.f32.partialorder %v1282, %v1433
        %vm1576 = vcmp.eq.f32.partialorder %v1283, %v1433
        %vm1577 = vcmp.eq.f32.partialorder %v1284, %v1433
        %vm1578 = vcmp.eq.f32.partialorder %v1285, %v1438
        %vm1579 = vcmp.eq.f32.partialorder %v1286, %v1438
        %vm1580 = vcmp.eq.f32.partialorder %v1287, %v1438
        %vm1581 = vcmp.eq.f32.partialorder %v1288, %v1438
        %vm1582 = vcmp.eq.f32.partialorder %v1289, %v1443
        %vm1583 = vcmp.eq.f32.partialorder %v1290, %v1443
        %vm1584 = vcmp.eq.f32.partialorder %v1291, %v1443
        %vm1585 = vcmp.eq.f32.partialorder %v1292, %v1443
        %vm1586 = vcmp.eq.f32.partialorder %v1293, %v1448
        %vm1587 = vcmp.eq.f32.partialorder %v1294, %v1448
        %vm1588 = vcmp.eq.f32.partialorder %v1295, %v1448
        %vm1589 = vcmp.eq.f32.partialorder %v1296, %v1448
        %vm1590 = vcmp.eq.f32.partialorder %v1297, %v1453
        %vm1591 = vcmp.eq.f32.partialorder %v1298, %v1453
        %vm1592 = vcmp.eq.f32.partialorder %v1299, %v1453
        %vm1593 = vcmp.eq.f32.partialorder %v1300, %v1453
        %vm1594 = vcmp.eq.f32.partialorder %v1301, %v1458
        %vm1595 = vcmp.eq.f32.partialorder %v1302, %v1458
        %vm1596 = vcmp.eq.f32.partialorder %v1303, %v1458
        %vm1597 = vcmp.eq.f32.partialorder %v1304, %v1458
        %vm1598 = vcmp.eq.f32.partialorder %v1305, %v1463
        %vm1599 = vcmp.eq.f32.partialorder %v1306, %v1463
        %vm1600 = vcmp.eq.f32.partialorder %v1307, %v1463
        %vm1601 = vcmp.eq.f32.partialorder %v1308, %v1463
        %vm1602 = vcmp.eq.f32.partialorder %v1309, %v1468
        %vm1603 = vcmp.eq.f32.partialorder %v1310, %v1468
        %vm1604 = vcmp.eq.f32.partialorder %v1311, %v1468
        %vm1605 = vcmp.eq.f32.partialorder %v1312, %v1468
        %vm1606 = vcmp.eq.f32.partialorder %v1313, %v1473
        %vm1607 = vcmp.eq.f32.partialorder %v1314, %v1473
        %vm1608 = vcmp.eq.f32.partialorder %v1315, %v1473
        %vm1609 = vcmp.eq.f32.partialorder %v1316, %v1473
        %vm1610 = vcmp.eq.f32.partialorder %v1317, %v1478
        %vm1611 = vcmp.eq.f32.partialorder %v1318, %v1478
        %vm1612 = vcmp.eq.f32.partialorder %v1319, %v1478
        %vm1613 = vcmp.eq.f32.partialorder %v1320, %v1478
        %vm1614 = vcmp.eq.f32.partialorder %v1321, %v1483
        %vm1615 = vcmp.eq.f32.partialorder %v1322, %v1483
        %vm1616 = vcmp.eq.f32.partialorder %v1323, %v1483
        %vm1617 = vcmp.eq.f32.partialorder %v1324, %v1483
        %vm1618 = vcmp.eq.f32.partialorder %v1325, %v1488
        %vm1619 = vcmp.eq.f32.partialorder %v1326, %v1488
        %vm1620 = vcmp.eq.f32.partialorder %v1327, %v1488
        %vm1621 = vcmp.eq.f32.partialorder %v1328, %v1488
        %vm1622 = vcmp.eq.f32.partialorder %v1329, %v1493
        %vm1623 = vcmp.eq.f32.partialorder %v1330, %v1493
        %vm1624 = vcmp.eq.f32.partialorder %v1331, %v1493
        %vm1625 = vcmp.eq.f32.partialorder %v1332, %v1493
        %vm1626 = vcmp.eq.f32.partialorder %v1333, %v1498
        %vm1627 = vcmp.eq.f32.partialorder %v1334, %v1498
        %vm1628 = vcmp.eq.f32.partialorder %v1335, %v1498
        %vm1629 = vcmp.eq.f32.partialorder %v1336, %v1498
        %vm1630 = vcmp.eq.f32.partialorder %v1337, %v1503
        %vm1631 = vcmp.eq.f32.partialorder %v1338, %v1503
        %vm1632 = vcmp.eq.f32.partialorder %v1339, %v1503
        %vm1633 = vcmp.eq.f32.partialorder %v1340, %v1503
        %vm1634 = vcmp.eq.f32.partialorder %v1341, %v1508
        %vm1635 = vcmp.eq.f32.partialorder %v1342, %v1508
        %vm1636 = vcmp.eq.f32.partialorder %v1343, %v1508
        %vm1637 = vcmp.eq.f32.partialorder %v1344, %v1508
        %vm1638 = vcmp.eq.f32.partialorder %v1345, %v1513
        %vm1639 = vcmp.eq.f32.partialorder %v1346, %v1513
        %vm1640 = vcmp.eq.f32.partialorder %v1347, %v1513
        %vm1641 = vcmp.eq.f32.partialorder %v1348, %v1513
        %v1642 = vsel %vm1514, %v1350, 512
        %v1643 = vsel %vm1515, %v1351, 512
        %v1644 = vsel %vm1516, %v1352, 512
        %v1645 = vsel %vm1517, %v1353, 512
        %v1646 = vsel %vm1518, %v1350, 512
        %v1647 = vsel %vm1519, %v1351, 512
        %v1648 = vsel %vm1520, %v1352, 512
        %v1649 = vsel %vm1521, %v1353, 512
        %v1650 = vsel %vm1522, %v1350, 512
        %v1651 = vsel %vm1523, %v1351, 512
        %v1652 = vsel %vm1524, %v1352, 512
        %v1653 = vsel %vm1525, %v1353, 512
        %v1654 = vsel %vm1526, %v1350, 512
        %v1655 = vsel %vm1527, %v1351, 512
        %v1656 = vsel %vm1528, %v1352, 512
        %v1657 = vsel %vm1529, %v1353, 512
        %v1658 = vsel %vm1530, %v1350, 512
        %v1659 = vsel %vm1531, %v1351, 512
        %v1660 = vsel %vm1532, %v1352, 512
        %v1661 = vsel %vm1533, %v1353, 512
        %v1662 = vsel %vm1534, %v1350, 512
        %v1663 = vsel %vm1535, %v1351, 512
        %v1664 = vsel %vm1536, %v1352, 512
        %v1665 = vsel %vm1537, %v1353, 512
        %v1666 = vsel %vm1538, %v1350, 512
        %v1667 = vsel %vm1539, %v1351, 512
        %v1668 = vsel %vm1540, %v1352, 512
        %v1669 = vsel %vm1541, %v1353, 512
        %v1670 = vsel %vm1542, %v1350, 512
        %v1671 = vsel %vm1543, %v1351, 512
        %v1672 = vsel %vm1544, %v1352, 512
        %v1673 = vsel %vm1545, %v1353, 512
        %v1674 = vsel %vm1546, %v1350, 512
        %v1675 = vsel %vm1547, %v1351, 512
        %v1676 = vsel %vm1548, %v1352, 512
        %v1677 = vsel %vm1549, %v1353, 512
        %v1678 = vsel %vm1550, %v1350, 512
        %v1679 = vsel %vm1551, %v1351, 512
        %v1680 = vsel %vm1552, %v1352, 512
        %v1681 = vsel %vm1553, %v1353, 512
        %v1682 = vsel %vm1554, %v1350, 512
        %v1683 = vsel %vm1555, %v1351, 512
        %v1684 = vsel %vm1556, %v1352, 512
        %v1685 = vsel %vm1557, %v1353, 512
        %v1686 = vsel %vm1558, %v1350, 512
        %v1687 = vsel %vm1559, %v1351, 512
        %v1688 = vsel %vm1560, %v1352, 512
        %v1689 = vsel %vm1561, %v1353, 512
        %v1690 = vsel %vm1562, %v1350, 512
        %v1691 = vsel %vm1563, %v1351, 512
        %v1692 = vsel %vm1564, %v1352, 512
        %v1693 = vsel %vm1565, %v1353, 512
        %v1694 = vsel %vm1566, %v1350, 512
        %v1695 = vsel %vm1567, %v1351, 512
        %v1696 = vsel %vm1568, %v1352, 512
        %v1697 = vsel %vm1569, %v1353, 512
        %v1698 = vsel %vm1570, %v1350, 512
        %v1699 = vsel %vm1571, %v1351, 512
        %v1700 = vsel %vm1572, %v1352, 512
        %v1701 = vsel %vm1573, %v1353, 512
        %v1702 = vsel %vm1574, %v1350, 512
        %v1703 = vsel %vm1575, %v1351, 512
        %v1704 = vsel %vm1576, %v1352, 512
        %v1705 = vsel %vm1577, %v1353, 512
        %v1706 = vsel %vm1578, %v1350, 512
        %v1707 = vsel %vm1579, %v1351, 512
        %v1708 = vsel %vm1580, %v1352, 512
        %v1709 = vsel %vm1581, %v1353, 512
        %v1710 = vsel %vm1582, %v1350, 512
        %v1711 = vsel %vm1583, %v1351, 512
        %v1712 = vsel %vm1584, %v1352, 512
        %v1713 = vsel %vm1585, %v1353, 512
        %v1714 = vsel %vm1586, %v1350, 512
        %v1715 = vsel %vm1587, %v1351, 512
        %v1716 = vsel %vm1588, %v1352, 512
        %v1717 = vsel %vm1589, %v1353, 512
        %v1718 = vsel %vm1590, %v1350, 512
        %v1719 = vsel %vm1591, %v1351, 512
        %v1720 = vsel %vm1592, %v1352, 512
        %v1721 = vsel %vm1593, %v1353, 512
        %v1722 = vsel %vm1594, %v1350, 512
        %v1723 = vsel %vm1595, %v1351, 512
        %v1724 = vsel %vm1596, %v1352, 512
        %v1725 = vsel %vm1597, %v1353, 512
        %v1726 = vsel %vm1598, %v1350, 512
        %v1727 = vsel %vm1599, %v1351, 512
        %v1728 = vsel %vm1600, %v1352, 512
        %v1729 = vsel %vm1601, %v1353, 512
        %v1730 = vsel %vm1602, %v1350, 512
        %v1731 = vsel %vm1603, %v1351, 512
        %v1732 = vsel %vm1604, %v1352, 512
        %v1733 = vsel %vm1605, %v1353, 512
        %v1734 = vsel %vm1606, %v1350, 512
        %v1735 = vsel %vm1607, %v1351, 512
        %v1736 = vsel %vm1608, %v1352, 512
        %v1737 = vsel %vm1609, %v1353, 512
        %v1738 = vsel %vm1610, %v1350, 512
        %v1739 = vsel %vm1611, %v1351, 512
        %v1740 = vsel %vm1612, %v1352, 512
        %v1741 = vsel %vm1613, %v1353, 512
        %v1742 = vsel %vm1614, %v1350, 512
        %v1743 = vsel %vm1615, %v1351, 512
        %v1744 = vsel %vm1616, %v1352, 512
        %v1745 = vsel %vm1617, %v1353, 512
        %v1746 = vsel %vm1618, %v1350, 512
        %v1747 = vsel %vm1619, %v1351, 512
        %v1748 = vsel %vm1620, %v1352, 512
        %v1749 = vsel %vm1621, %v1353, 512
        %v1750 = vsel %vm1622, %v1350, 512
        %v1751 = vsel %vm1623, %v1351, 512
        %v1752 = vsel %vm1624, %v1352, 512
        %v1753 = vsel %vm1625, %v1353, 512
        %v1754 = vsel %vm1626, %v1350, 512
        %v1755 = vsel %vm1627, %v1351, 512
        %v1756 = vsel %vm1628, %v1352, 512
        %v1757 = vsel %vm1629, %v1353, 512
        %v1758 = vsel %vm1630, %v1350, 512
        %v1759 = vsel %vm1631, %v1351, 512
        %v1760 = vsel %vm1632, %v1352, 512
        %v1761 = vsel %vm1633, %v1353, 512
        %v1762 = vsel %vm1634, %v1350, 512
        %v1763 = vsel %vm1635, %v1351, 512
        %v1764 = vsel %vm1636, %v1352, 512
        %v1765 = vsel %vm1637, %v1353, 512
        %v1766 = vsel %vm1638, %v1350, 512
        %v1767 = vsel %vm1639, %v1351, 512
        %v1768 = vsel %vm1640, %v1352, 512
        %v1769 = vsel %vm1641, %v1353, 512
        %vm1770 = vcmp.lt.s32.totalorder %v1642, %v1643
        %v1771 = vsel %vm1770, %v1642, %v1643
        %vm1772 = vcmp.lt.s32.totalorder %v1771, %v1644
        %v1773 = vsel %vm1772, %v1771, %v1644
        %vm1774 = vcmp.lt.s32.totalorder %v1773, %v1645
        %v1775 = vsel %vm1774, %v1773, %v1645
        %v1776 = vand.u32 %v1775, 65535
        %v1777 = vshra.s32 %v1775, 16
        %v1778 = vcvt.s32.f32 %v1776
        %v1779 = vcvt.s32.f32 %v1777
        %1780 = vmin.xlane.f32.xlu0 %v1779
        %v1781 = vpop.xlane.xlu0 %1780
        %vm1782 = vcmp.eq.f32.partialorder %v1779, %v1781
        %v1783 = vsel %vm1782, %v1778, inf
        %1784 = vmin.xlane.f32.xlu0 %v1783
        %v1785 = vpop.xlane.xlu0 %1784
        %v1786 = vcvt.f32.s32 %v1785
        %v1787 = vcvt.f32.s32 %v1781
        %v1788 = vshll.u32 %v1787, 16
        %v1789 = vadd.s32 %v1788, %v1786
        %vm1790 = vcmp.lt.s32.totalorder %v1646, %v1647
        %v1791 = vsel %vm1790, %v1646, %v1647
        %vm1792 = vcmp.lt.s32.totalorder %v1791, %v1648
        %v1793 = vsel %vm1792, %v1791, %v1648
        %vm1794 = vcmp.lt.s32.totalorder %v1793, %v1649
        %v1795 = vsel %vm1794, %v1793, %v1649
        %v1796 = vand.u32 %v1795, 65535
        %v1797 = vshra.s32 %v1795, 16
        %v1798 = vcvt.s32.f32 %v1796
        %v1799 = vcvt.s32.f32 %v1797
        %1800 = vmin.xlane.f32.xlu0 %v1799
        %v1801 = vpop.xlane.xlu0 %1800
        %vm1802 = vcmp.eq.f32.partialorder %v1799, %v1801
        %v1803 = vsel %vm1802, %v1798, inf
        %1804 = vmin.xlane.f32.xlu0 %v1803
        %v1805 = vpop.xlane.xlu0 %1804
        %v1806 = vcvt.f32.s32 %v1805
        %v1807 = vcvt.f32.s32 %v1801
        %v1808 = vshll.u32 %v1807, 16
        %v1809 = vadd.s32 %v1808, %v1806
        %vm1810 = vcmp.lt.s32.totalorder %v1650, %v1651
        %v1811 = vsel %vm1810, %v1650, %v1651
        %vm1812 = vcmp.lt.s32.totalorder %v1811, %v1652
        %v1813 = vsel %vm1812, %v1811, %v1652
        %vm1814 = vcmp.lt.s32.totalorder %v1813, %v1653
        %v1815 = vsel %vm1814, %v1813, %v1653
        %v1816 = vand.u32 %v1815, 65535
        %v1817 = vshra.s32 %v1815, 16
        %v1818 = vcvt.s32.f32 %v1816
        %v1819 = vcvt.s32.f32 %v1817
        %1820 = vmin.xlane.f32.xlu0 %v1819
        %v1821 = vpop.xlane.xlu0 %1820
        %vm1822 = vcmp.eq.f32.partialorder %v1819, %v1821
        %v1823 = vsel %vm1822, %v1818, inf
        %1824 = vmin.xlane.f32.xlu0 %v1823
        %v1825 = vpop.xlane.xlu0 %1824
        %v1826 = vcvt.f32.s32 %v1825
        %v1827 = vcvt.f32.s32 %v1821
        %v1828 = vshll.u32 %v1827, 16
        %v1829 = vadd.s32 %v1828, %v1826
        %vm1830 = vcmp.lt.s32.totalorder %v1654, %v1655
        %v1831 = vsel %vm1830, %v1654, %v1655
        %vm1832 = vcmp.lt.s32.totalorder %v1831, %v1656
        %v1833 = vsel %vm1832, %v1831, %v1656
        %vm1834 = vcmp.lt.s32.totalorder %v1833, %v1657
        %v1835 = vsel %vm1834, %v1833, %v1657
        %v1836 = vand.u32 %v1835, 65535
        %v1837 = vshra.s32 %v1835, 16
        %v1838 = vcvt.s32.f32 %v1836
        %v1839 = vcvt.s32.f32 %v1837
        %1840 = vmin.xlane.f32.xlu0 %v1839
        %v1841 = vpop.xlane.xlu0 %1840
        %vm1842 = vcmp.eq.f32.partialorder %v1839, %v1841
        %v1843 = vsel %vm1842, %v1838, inf
        %1844 = vmin.xlane.f32.xlu0 %v1843
        %v1845 = vpop.xlane.xlu0 %1844
        %v1846 = vcvt.f32.s32 %v1845
        %v1847 = vcvt.f32.s32 %v1841
        %v1848 = vshll.u32 %v1847, 16
        %v1849 = vadd.s32 %v1848, %v1846
        %vm1850 = vcmp.lt.s32.totalorder %v1658, %v1659
        %v1851 = vsel %vm1850, %v1658, %v1659
        %vm1852 = vcmp.lt.s32.totalorder %v1851, %v1660
        %v1853 = vsel %vm1852, %v1851, %v1660
        %vm1854 = vcmp.lt.s32.totalorder %v1853, %v1661
        %v1855 = vsel %vm1854, %v1853, %v1661
        %v1856 = vand.u32 %v1855, 65535
        %v1857 = vshra.s32 %v1855, 16
        %v1858 = vcvt.s32.f32 %v1856
        %v1859 = vcvt.s32.f32 %v1857
        %1860 = vmin.xlane.f32.xlu0 %v1859
        %v1861 = vpop.xlane.xlu0 %1860
        %vm1862 = vcmp.eq.f32.partialorder %v1859, %v1861
        %v1863 = vsel %vm1862, %v1858, inf
        %1864 = vmin.xlane.f32.xlu0 %v1863
        %v1865 = vpop.xlane.xlu0 %1864
        %v1866 = vcvt.f32.s32 %v1865
        %v1867 = vcvt.f32.s32 %v1861
        %v1868 = vshll.u32 %v1867, 16
        %v1869 = vadd.s32 %v1868, %v1866
        %vm1870 = vcmp.lt.s32.totalorder %v1662, %v1663
        %v1871 = vsel %vm1870, %v1662, %v1663
        %vm1872 = vcmp.lt.s32.totalorder %v1871, %v1664
        %v1873 = vsel %vm1872, %v1871, %v1664
        %vm1874 = vcmp.lt.s32.totalorder %v1873, %v1665
        %v1875 = vsel %vm1874, %v1873, %v1665
        %v1876 = vand.u32 %v1875, 65535
        %v1877 = vshra.s32 %v1875, 16
        %v1878 = vcvt.s32.f32 %v1876
        %v1879 = vcvt.s32.f32 %v1877
        %1880 = vmin.xlane.f32.xlu0 %v1879
        %v1881 = vpop.xlane.xlu0 %1880
        %vm1882 = vcmp.eq.f32.partialorder %v1879, %v1881
        %v1883 = vsel %vm1882, %v1878, inf
        %1884 = vmin.xlane.f32.xlu0 %v1883
        %v1885 = vpop.xlane.xlu0 %1884
        %v1886 = vcvt.f32.s32 %v1885
        %v1887 = vcvt.f32.s32 %v1881
        %v1888 = vshll.u32 %v1887, 16
        %v1889 = vadd.s32 %v1888, %v1886
        %vm1890 = vcmp.lt.s32.totalorder %v1666, %v1667
        %v1891 = vsel %vm1890, %v1666, %v1667
        %vm1892 = vcmp.lt.s32.totalorder %v1891, %v1668
        %v1893 = vsel %vm1892, %v1891, %v1668
        %vm1894 = vcmp.lt.s32.totalorder %v1893, %v1669
        %v1895 = vsel %vm1894, %v1893, %v1669
        %v1896 = vand.u32 %v1895, 65535
        %v1897 = vshra.s32 %v1895, 16
        %v1898 = vcvt.s32.f32 %v1896
        %v1899 = vcvt.s32.f32 %v1897
        %1900 = vmin.xlane.f32.xlu0 %v1899
        %v1901 = vpop.xlane.xlu0 %1900
        %vm1902 = vcmp.eq.f32.partialorder %v1899, %v1901
        %v1903 = vsel %vm1902, %v1898, inf
        %1904 = vmin.xlane.f32.xlu0 %v1903
        %v1905 = vpop.xlane.xlu0 %1904
        %v1906 = vcvt.f32.s32 %v1905
        %v1907 = vcvt.f32.s32 %v1901
        %v1908 = vshll.u32 %v1907, 16
        %v1909 = vadd.s32 %v1908, %v1906
        %vm1910 = vcmp.lt.s32.totalorder %v1670, %v1671
        %v1911 = vsel %vm1910, %v1670, %v1671
        %vm1912 = vcmp.lt.s32.totalorder %v1911, %v1672
        %v1913 = vsel %vm1912, %v1911, %v1672
        %vm1914 = vcmp.lt.s32.totalorder %v1913, %v1673
        %v1915 = vsel %vm1914, %v1913, %v1673
        %v1916 = vand.u32 %v1915, 65535
        %v1917 = vshra.s32 %v1915, 16
        %v1918 = vcvt.s32.f32 %v1916
        %v1919 = vcvt.s32.f32 %v1917
        %1920 = vmin.xlane.f32.xlu0 %v1919
        %v1921 = vpop.xlane.xlu0 %1920
        %vm1922 = vcmp.eq.f32.partialorder %v1919, %v1921
        %v1923 = vsel %vm1922, %v1918, inf
        %1924 = vmin.xlane.f32.xlu0 %v1923
        %v1925 = vpop.xlane.xlu0 %1924
        %v1926 = vcvt.f32.s32 %v1925
        %v1927 = vcvt.f32.s32 %v1921
        %v1928 = vshll.u32 %v1927, 16
        %v1929 = vadd.s32 %v1928, %v1926
        %vm1930 = vcmp.lt.s32.totalorder %v1674, %v1675
        %v1931 = vsel %vm1930, %v1674, %v1675
        %vm1932 = vcmp.lt.s32.totalorder %v1931, %v1676
        %v1933 = vsel %vm1932, %v1931, %v1676
        %vm1934 = vcmp.lt.s32.totalorder %v1933, %v1677
        %v1935 = vsel %vm1934, %v1933, %v1677
        %v1936 = vand.u32 %v1935, 65535
        %v1937 = vshra.s32 %v1935, 16
        %v1938 = vcvt.s32.f32 %v1936
        %v1939 = vcvt.s32.f32 %v1937
        %1940 = vmin.xlane.f32.xlu0 %v1939
        %v1941 = vpop.xlane.xlu0 %1940
        %vm1942 = vcmp.eq.f32.partialorder %v1939, %v1941
        %v1943 = vsel %vm1942, %v1938, inf
        %1944 = vmin.xlane.f32.xlu0 %v1943
        %v1945 = vpop.xlane.xlu0 %1944
        %v1946 = vcvt.f32.s32 %v1945
        %v1947 = vcvt.f32.s32 %v1941
        %v1948 = vshll.u32 %v1947, 16
        %v1949 = vadd.s32 %v1948, %v1946
        %vm1950 = vcmp.lt.s32.totalorder %v1678, %v1679
        %v1951 = vsel %vm1950, %v1678, %v1679
        %vm1952 = vcmp.lt.s32.totalorder %v1951, %v1680
        %v1953 = vsel %vm1952, %v1951, %v1680
        %vm1954 = vcmp.lt.s32.totalorder %v1953, %v1681
        %v1955 = vsel %vm1954, %v1953, %v1681
        %v1956 = vand.u32 %v1955, 65535
        %v1957 = vshra.s32 %v1955, 16
        %v1958 = vcvt.s32.f32 %v1956
        %v1959 = vcvt.s32.f32 %v1957
        %1960 = vmin.xlane.f32.xlu0 %v1959
        %v1961 = vpop.xlane.xlu0 %1960
        %vm1962 = vcmp.eq.f32.partialorder %v1959, %v1961
        %v1963 = vsel %vm1962, %v1958, inf
        %1964 = vmin.xlane.f32.xlu0 %v1963
        %v1965 = vpop.xlane.xlu0 %1964
        %v1966 = vcvt.f32.s32 %v1965
        %v1967 = vcvt.f32.s32 %v1961
        %v1968 = vshll.u32 %v1967, 16
        %v1969 = vadd.s32 %v1968, %v1966
        %vm1970 = vcmp.lt.s32.totalorder %v1682, %v1683
        %v1971 = vsel %vm1970, %v1682, %v1683
        %vm1972 = vcmp.lt.s32.totalorder %v1971, %v1684
        %v1973 = vsel %vm1972, %v1971, %v1684
        %vm1974 = vcmp.lt.s32.totalorder %v1973, %v1685
        %v1975 = vsel %vm1974, %v1973, %v1685
        %v1976 = vand.u32 %v1975, 65535
        %v1977 = vshra.s32 %v1975, 16
        %v1978 = vcvt.s32.f32 %v1976
        %v1979 = vcvt.s32.f32 %v1977
        %1980 = vmin.xlane.f32.xlu0 %v1979
        %v1981 = vpop.xlane.xlu0 %1980
        %vm1982 = vcmp.eq.f32.partialorder %v1979, %v1981
        %v1983 = vsel %vm1982, %v1978, inf
        %1984 = vmin.xlane.f32.xlu0 %v1983
        %v1985 = vpop.xlane.xlu0 %1984
        %v1986 = vcvt.f32.s32 %v1985
        %v1987 = vcvt.f32.s32 %v1981
        %v1988 = vshll.u32 %v1987, 16
        %v1989 = vadd.s32 %v1988, %v1986
        %vm1990 = vcmp.lt.s32.totalorder %v1686, %v1687
        %v1991 = vsel %vm1990, %v1686, %v1687
        %vm1992 = vcmp.lt.s32.totalorder %v1991, %v1688
        %v1993 = vsel %vm1992, %v1991, %v1688
        %vm1994 = vcmp.lt.s32.totalorder %v1993, %v1689
        %v1995 = vsel %vm1994, %v1993, %v1689
        %v1996 = vand.u32 %v1995, 65535
        %v1997 = vshra.s32 %v1995, 16
        %v1998 = vcvt.s32.f32 %v1996
        %v1999 = vcvt.s32.f32 %v1997
        %2000 = vmin.xlane.f32.xlu0 %v1999
        %v2001 = vpop.xlane.xlu0 %2000
        %vm2002 = vcmp.eq.f32.partialorder %v1999, %v2001
        %v2003 = vsel %vm2002, %v1998, inf
        %2004 = vmin.xlane.f32.xlu0 %v2003
        %v2005 = vpop.xlane.xlu0 %2004
        %v2006 = vcvt.f32.s32 %v2005
        %v2007 = vcvt.f32.s32 %v2001
        %v2008 = vshll.u32 %v2007, 16
        %v2009 = vadd.s32 %v2008, %v2006
        %vm2010 = vcmp.lt.s32.totalorder %v1690, %v1691
        %v2011 = vsel %vm2010, %v1690, %v1691
        %vm2012 = vcmp.lt.s32.totalorder %v2011, %v1692
        %v2013 = vsel %vm2012, %v2011, %v1692
        %vm2014 = vcmp.lt.s32.totalorder %v2013, %v1693
        %v2015 = vsel %vm2014, %v2013, %v1693
        %v2016 = vand.u32 %v2015, 65535
        %v2017 = vshra.s32 %v2015, 16
        %v2018 = vcvt.s32.f32 %v2016
        %v2019 = vcvt.s32.f32 %v2017
        %2020 = vmin.xlane.f32.xlu0 %v2019
        %v2021 = vpop.xlane.xlu0 %2020
        %vm2022 = vcmp.eq.f32.partialorder %v2019, %v2021
        %v2023 = vsel %vm2022, %v2018, inf
        %2024 = vmin.xlane.f32.xlu0 %v2023
        %v2025 = vpop.xlane.xlu0 %2024
        %v2026 = vcvt.f32.s32 %v2025
        %v2027 = vcvt.f32.s32 %v2021
        %v2028 = vshll.u32 %v2027, 16
        %v2029 = vadd.s32 %v2028, %v2026
        %vm2030 = vcmp.lt.s32.totalorder %v1694, %v1695
        %v2031 = vsel %vm2030, %v1694, %v1695
        %vm2032 = vcmp.lt.s32.totalorder %v2031, %v1696
        %v2033 = vsel %vm2032, %v2031, %v1696
        %vm2034 = vcmp.lt.s32.totalorder %v2033, %v1697
        %v2035 = vsel %vm2034, %v2033, %v1697
        %v2036 = vand.u32 %v2035, 65535
        %v2037 = vshra.s32 %v2035, 16
        %v2038 = vcvt.s32.f32 %v2036
        %v2039 = vcvt.s32.f32 %v2037
        %2040 = vmin.xlane.f32.xlu0 %v2039
        %v2041 = vpop.xlane.xlu0 %2040
        %vm2042 = vcmp.eq.f32.partialorder %v2039, %v2041
        %v2043 = vsel %vm2042, %v2038, inf
        %2044 = vmin.xlane.f32.xlu0 %v2043
        %v2045 = vpop.xlane.xlu0 %2044
        %v2046 = vcvt.f32.s32 %v2045
        %v2047 = vcvt.f32.s32 %v2041
        %v2048 = vshll.u32 %v2047, 16
        %v2049 = vadd.s32 %v2048, %v2046
        %vm2050 = vcmp.lt.s32.totalorder %v1698, %v1699
        %v2051 = vsel %vm2050, %v1698, %v1699
        %vm2052 = vcmp.lt.s32.totalorder %v2051, %v1700
        %v2053 = vsel %vm2052, %v2051, %v1700
        %vm2054 = vcmp.lt.s32.totalorder %v2053, %v1701
        %v2055 = vsel %vm2054, %v2053, %v1701
        %v2056 = vand.u32 %v2055, 65535
        %v2057 = vshra.s32 %v2055, 16
        %v2058 = vcvt.s32.f32 %v2056
        %v2059 = vcvt.s32.f32 %v2057
        %2060 = vmin.xlane.f32.xlu0 %v2059
        %v2061 = vpop.xlane.xlu0 %2060
        %vm2062 = vcmp.eq.f32.partialorder %v2059, %v2061
        %v2063 = vsel %vm2062, %v2058, inf
        %2064 = vmin.xlane.f32.xlu0 %v2063
        %v2065 = vpop.xlane.xlu0 %2064
        %v2066 = vcvt.f32.s32 %v2065
        %v2067 = vcvt.f32.s32 %v2061
        %v2068 = vshll.u32 %v2067, 16
        %v2069 = vadd.s32 %v2068, %v2066
        %vm2070 = vcmp.lt.s32.totalorder %v1702, %v1703
        %v2071 = vsel %vm2070, %v1702, %v1703
        %vm2072 = vcmp.lt.s32.totalorder %v2071, %v1704
        %v2073 = vsel %vm2072, %v2071, %v1704
        %vm2074 = vcmp.lt.s32.totalorder %v2073, %v1705
        %v2075 = vsel %vm2074, %v2073, %v1705
        %v2076 = vand.u32 %v2075, 65535
        %v2077 = vshra.s32 %v2075, 16
        %v2078 = vcvt.s32.f32 %v2076
        %v2079 = vcvt.s32.f32 %v2077
        %2080 = vmin.xlane.f32.xlu0 %v2079
        %v2081 = vpop.xlane.xlu0 %2080
        %vm2082 = vcmp.eq.f32.partialorder %v2079, %v2081
        %v2083 = vsel %vm2082, %v2078, inf
        %2084 = vmin.xlane.f32.xlu0 %v2083
        %v2085 = vpop.xlane.xlu0 %2084
        %v2086 = vcvt.f32.s32 %v2085
        %v2087 = vcvt.f32.s32 %v2081
        %v2088 = vshll.u32 %v2087, 16
        %v2089 = vadd.s32 %v2088, %v2086
        %vm2090 = vcmp.lt.s32.totalorder %v1706, %v1707
        %v2091 = vsel %vm2090, %v1706, %v1707
        %vm2092 = vcmp.lt.s32.totalorder %v2091, %v1708
        %v2093 = vsel %vm2092, %v2091, %v1708
        %vm2094 = vcmp.lt.s32.totalorder %v2093, %v1709
        %v2095 = vsel %vm2094, %v2093, %v1709
        %v2096 = vand.u32 %v2095, 65535
        %v2097 = vshra.s32 %v2095, 16
        %v2098 = vcvt.s32.f32 %v2096
        %v2099 = vcvt.s32.f32 %v2097
        %2100 = vmin.xlane.f32.xlu0 %v2099
        %v2101 = vpop.xlane.xlu0 %2100
        %vm2102 = vcmp.eq.f32.partialorder %v2099, %v2101
        %v2103 = vsel %vm2102, %v2098, inf
        %2104 = vmin.xlane.f32.xlu0 %v2103
        %v2105 = vpop.xlane.xlu0 %2104
        %v2106 = vcvt.f32.s32 %v2105
        %v2107 = vcvt.f32.s32 %v2101
        %v2108 = vshll.u32 %v2107, 16
        %v2109 = vadd.s32 %v2108, %v2106
        %vm2110 = vcmp.lt.s32.totalorder %v1710, %v1711
        %v2111 = vsel %vm2110, %v1710, %v1711
        %vm2112 = vcmp.lt.s32.totalorder %v2111, %v1712
        %v2113 = vsel %vm2112, %v2111, %v1712
        %vm2114 = vcmp.lt.s32.totalorder %v2113, %v1713
        %v2115 = vsel %vm2114, %v2113, %v1713
        %v2116 = vand.u32 %v2115, 65535
        %v2117 = vshra.s32 %v2115, 16
        %v2118 = vcvt.s32.f32 %v2116
        %v2119 = vcvt.s32.f32 %v2117
        %2120 = vmin.xlane.f32.xlu0 %v2119
        %v2121 = vpop.xlane.xlu0 %2120
        %vm2122 = vcmp.eq.f32.partialorder %v2119, %v2121
        %v2123 = vsel %vm2122, %v2118, inf
        %2124 = vmin.xlane.f32.xlu0 %v2123
        %v2125 = vpop.xlane.xlu0 %2124
        %v2126 = vcvt.f32.s32 %v2125
        %v2127 = vcvt.f32.s32 %v2121
        %v2128 = vshll.u32 %v2127, 16
        %v2129 = vadd.s32 %v2128, %v2126
        %vm2130 = vcmp.lt.s32.totalorder %v1714, %v1715
        %v2131 = vsel %vm2130, %v1714, %v1715
        %vm2132 = vcmp.lt.s32.totalorder %v2131, %v1716
        %v2133 = vsel %vm2132, %v2131, %v1716
        %vm2134 = vcmp.lt.s32.totalorder %v2133, %v1717
        %v2135 = vsel %vm2134, %v2133, %v1717
        %v2136 = vand.u32 %v2135, 65535
        %v2137 = vshra.s32 %v2135, 16
        %v2138 = vcvt.s32.f32 %v2136
        %v2139 = vcvt.s32.f32 %v2137
        %2140 = vmin.xlane.f32.xlu0 %v2139
        %v2141 = vpop.xlane.xlu0 %2140
        %vm2142 = vcmp.eq.f32.partialorder %v2139, %v2141
        %v2143 = vsel %vm2142, %v2138, inf
        %2144 = vmin.xlane.f32.xlu0 %v2143
        %v2145 = vpop.xlane.xlu0 %2144
        %v2146 = vcvt.f32.s32 %v2145
        %v2147 = vcvt.f32.s32 %v2141
        %v2148 = vshll.u32 %v2147, 16
        %v2149 = vadd.s32 %v2148, %v2146
        %vm2150 = vcmp.lt.s32.totalorder %v1718, %v1719
        %v2151 = vsel %vm2150, %v1718, %v1719
        %vm2152 = vcmp.lt.s32.totalorder %v2151, %v1720
        %v2153 = vsel %vm2152, %v2151, %v1720
        %vm2154 = vcmp.lt.s32.totalorder %v2153, %v1721
        %v2155 = vsel %vm2154, %v2153, %v1721
        %v2156 = vand.u32 %v2155, 65535
        %v2157 = vshra.s32 %v2155, 16
        %v2158 = vcvt.s32.f32 %v2156
        %v2159 = vcvt.s32.f32 %v2157
        %2160 = vmin.xlane.f32.xlu0 %v2159
        %v2161 = vpop.xlane.xlu0 %2160
        %vm2162 = vcmp.eq.f32.partialorder %v2159, %v2161
        %v2163 = vsel %vm2162, %v2158, inf
        %2164 = vmin.xlane.f32.xlu0 %v2163
        %v2165 = vpop.xlane.xlu0 %2164
        %v2166 = vcvt.f32.s32 %v2165
        %v2167 = vcvt.f32.s32 %v2161
        %v2168 = vshll.u32 %v2167, 16
        %v2169 = vadd.s32 %v2168, %v2166
        %vm2170 = vcmp.lt.s32.totalorder %v1722, %v1723
        %v2171 = vsel %vm2170, %v1722, %v1723
        %vm2172 = vcmp.lt.s32.totalorder %v2171, %v1724
        %v2173 = vsel %vm2172, %v2171, %v1724
        %vm2174 = vcmp.lt.s32.totalorder %v2173, %v1725
        %v2175 = vsel %vm2174, %v2173, %v1725
        %v2176 = vand.u32 %v2175, 65535
        %v2177 = vshra.s32 %v2175, 16
        %v2178 = vcvt.s32.f32 %v2176
        %v2179 = vcvt.s32.f32 %v2177
        %2180 = vmin.xlane.f32.xlu0 %v2179
        %v2181 = vpop.xlane.xlu0 %2180
        %vm2182 = vcmp.eq.f32.partialorder %v2179, %v2181
        %v2183 = vsel %vm2182, %v2178, inf
        %2184 = vmin.xlane.f32.xlu0 %v2183
        %v2185 = vpop.xlane.xlu0 %2184
        %v2186 = vcvt.f32.s32 %v2185
        %v2187 = vcvt.f32.s32 %v2181
        %v2188 = vshll.u32 %v2187, 16
        %v2189 = vadd.s32 %v2188, %v2186
        %vm2190 = vcmp.lt.s32.totalorder %v1726, %v1727
        %v2191 = vsel %vm2190, %v1726, %v1727
        %vm2192 = vcmp.lt.s32.totalorder %v2191, %v1728
        %v2193 = vsel %vm2192, %v2191, %v1728
        %vm2194 = vcmp.lt.s32.totalorder %v2193, %v1729
        %v2195 = vsel %vm2194, %v2193, %v1729
        %v2196 = vand.u32 %v2195, 65535
        %v2197 = vshra.s32 %v2195, 16
        %v2198 = vcvt.s32.f32 %v2196
        %v2199 = vcvt.s32.f32 %v2197
        %2200 = vmin.xlane.f32.xlu0 %v2199
        %v2201 = vpop.xlane.xlu0 %2200
        %vm2202 = vcmp.eq.f32.partialorder %v2199, %v2201
        %v2203 = vsel %vm2202, %v2198, inf
        %2204 = vmin.xlane.f32.xlu0 %v2203
        %v2205 = vpop.xlane.xlu0 %2204
        %v2206 = vcvt.f32.s32 %v2205
        %v2207 = vcvt.f32.s32 %v2201
        %v2208 = vshll.u32 %v2207, 16
        %v2209 = vadd.s32 %v2208, %v2206
        %vm2210 = vcmp.lt.s32.totalorder %v1730, %v1731
        %v2211 = vsel %vm2210, %v1730, %v1731
        %vm2212 = vcmp.lt.s32.totalorder %v2211, %v1732
        %v2213 = vsel %vm2212, %v2211, %v1732
        %vm2214 = vcmp.lt.s32.totalorder %v2213, %v1733
        %v2215 = vsel %vm2214, %v2213, %v1733
        %v2216 = vand.u32 %v2215, 65535
        %v2217 = vshra.s32 %v2215, 16
        %v2218 = vcvt.s32.f32 %v2216
        %v2219 = vcvt.s32.f32 %v2217
        %2220 = vmin.xlane.f32.xlu0 %v2219
        %v2221 = vpop.xlane.xlu0 %2220
        %vm2222 = vcmp.eq.f32.partialorder %v2219, %v2221
        %v2223 = vsel %vm2222, %v2218, inf
        %2224 = vmin.xlane.f32.xlu0 %v2223
        %v2225 = vpop.xlane.xlu0 %2224
        %v2226 = vcvt.f32.s32 %v2225
        %v2227 = vcvt.f32.s32 %v2221
        %v2228 = vshll.u32 %v2227, 16
        %v2229 = vadd.s32 %v2228, %v2226
        %vm2230 = vcmp.lt.s32.totalorder %v1734, %v1735
        %v2231 = vsel %vm2230, %v1734, %v1735
        %vm2232 = vcmp.lt.s32.totalorder %v2231, %v1736
        %v2233 = vsel %vm2232, %v2231, %v1736
        %vm2234 = vcmp.lt.s32.totalorder %v2233, %v1737
        %v2235 = vsel %vm2234, %v2233, %v1737
        %v2236 = vand.u32 %v2235, 65535
        %v2237 = vshra.s32 %v2235, 16
        %v2238 = vcvt.s32.f32 %v2236
        %v2239 = vcvt.s32.f32 %v2237
        %2240 = vmin.xlane.f32.xlu0 %v2239
        %v2241 = vpop.xlane.xlu0 %2240
        %vm2242 = vcmp.eq.f32.partialorder %v2239, %v2241
        %v2243 = vsel %vm2242, %v2238, inf
        %2244 = vmin.xlane.f32.xlu0 %v2243
        %v2245 = vpop.xlane.xlu0 %2244
        %v2246 = vcvt.f32.s32 %v2245
        %v2247 = vcvt.f32.s32 %v2241
        %v2248 = vshll.u32 %v2247, 16
        %v2249 = vadd.s32 %v2248, %v2246
        %vm2250 = vcmp.lt.s32.totalorder %v1738, %v1739
        %v2251 = vsel %vm2250, %v1738, %v1739
        %vm2252 = vcmp.lt.s32.totalorder %v2251, %v1740
        %v2253 = vsel %vm2252, %v2251, %v1740
        %vm2254 = vcmp.lt.s32.totalorder %v2253, %v1741
        %v2255 = vsel %vm2254, %v2253, %v1741
        %v2256 = vand.u32 %v2255, 65535
        %v2257 = vshra.s32 %v2255, 16
        %v2258 = vcvt.s32.f32 %v2256
        %v2259 = vcvt.s32.f32 %v2257
        %2260 = vmin.xlane.f32.xlu0 %v2259
        %v2261 = vpop.xlane.xlu0 %2260
        %vm2262 = vcmp.eq.f32.partialorder %v2259, %v2261
        %v2263 = vsel %vm2262, %v2258, inf
        %2264 = vmin.xlane.f32.xlu0 %v2263
        %v2265 = vpop.xlane.xlu0 %2264
        %v2266 = vcvt.f32.s32 %v2265
        %v2267 = vcvt.f32.s32 %v2261
        %v2268 = vshll.u32 %v2267, 16
        %v2269 = vadd.s32 %v2268, %v2266
        %vm2270 = vcmp.lt.s32.totalorder %v1742, %v1743
        %v2271 = vsel %vm2270, %v1742, %v1743
        %vm2272 = vcmp.lt.s32.totalorder %v2271, %v1744
        %v2273 = vsel %vm2272, %v2271, %v1744
        %vm2274 = vcmp.lt.s32.totalorder %v2273, %v1745
        %v2275 = vsel %vm2274, %v2273, %v1745
        %v2276 = vand.u32 %v2275, 65535
        %v2277 = vshra.s32 %v2275, 16
        %v2278 = vcvt.s32.f32 %v2276
        %v2279 = vcvt.s32.f32 %v2277
        %2280 = vmin.xlane.f32.xlu0 %v2279
        %v2281 = vpop.xlane.xlu0 %2280
        %vm2282 = vcmp.eq.f32.partialorder %v2279, %v2281
        %v2283 = vsel %vm2282, %v2278, inf
        %2284 = vmin.xlane.f32.xlu0 %v2283
        %v2285 = vpop.xlane.xlu0 %2284
        %v2286 = vcvt.f32.s32 %v2285
        %v2287 = vcvt.f32.s32 %v2281
        %v2288 = vshll.u32 %v2287, 16
        %v2289 = vadd.s32 %v2288, %v2286
        %vm2290 = vcmp.lt.s32.totalorder %v1746, %v1747
        %v2291 = vsel %vm2290, %v1746, %v1747
        %vm2292 = vcmp.lt.s32.totalorder %v2291, %v1748
        %v2293 = vsel %vm2292, %v2291, %v1748
        %vm2294 = vcmp.lt.s32.totalorder %v2293, %v1749
        %v2295 = vsel %vm2294, %v2293, %v1749
        %v2296 = vand.u32 %v2295, 65535
        %v2297 = vshra.s32 %v2295, 16
        %v2298 = vcvt.s32.f32 %v2296
        %v2299 = vcvt.s32.f32 %v2297
        %2300 = vmin.xlane.f32.xlu0 %v2299
        %v2301 = vpop.xlane.xlu0 %2300
        %vm2302 = vcmp.eq.f32.partialorder %v2299, %v2301
        %v2303 = vsel %vm2302, %v2298, inf
        %2304 = vmin.xlane.f32.xlu0 %v2303
        %v2305 = vpop.xlane.xlu0 %2304
        %v2306 = vcvt.f32.s32 %v2305
        %v2307 = vcvt.f32.s32 %v2301
        %v2308 = vshll.u32 %v2307, 16
        %v2309 = vadd.s32 %v2308, %v2306
        %vm2310 = vcmp.lt.s32.totalorder %v1750, %v1751
        %v2311 = vsel %vm2310, %v1750, %v1751
        %vm2312 = vcmp.lt.s32.totalorder %v2311, %v1752
        %v2313 = vsel %vm2312, %v2311, %v1752
        %vm2314 = vcmp.lt.s32.totalorder %v2313, %v1753
        %v2315 = vsel %vm2314, %v2313, %v1753
        %v2316 = vand.u32 %v2315, 65535
        %v2317 = vshra.s32 %v2315, 16
        %v2318 = vcvt.s32.f32 %v2316
        %v2319 = vcvt.s32.f32 %v2317
        %2320 = vmin.xlane.f32.xlu0 %v2319
        %v2321 = vpop.xlane.xlu0 %2320
        %vm2322 = vcmp.eq.f32.partialorder %v2319, %v2321
        %v2323 = vsel %vm2322, %v2318, inf
        %2324 = vmin.xlane.f32.xlu0 %v2323
        %v2325 = vpop.xlane.xlu0 %2324
        %v2326 = vcvt.f32.s32 %v2325
        %v2327 = vcvt.f32.s32 %v2321
        %v2328 = vshll.u32 %v2327, 16
        %v2329 = vadd.s32 %v2328, %v2326
        %vm2330 = vcmp.lt.s32.totalorder %v1754, %v1755
        %v2331 = vsel %vm2330, %v1754, %v1755
        %vm2332 = vcmp.lt.s32.totalorder %v2331, %v1756
        %v2333 = vsel %vm2332, %v2331, %v1756
        %vm2334 = vcmp.lt.s32.totalorder %v2333, %v1757
        %v2335 = vsel %vm2334, %v2333, %v1757
        %v2336 = vand.u32 %v2335, 65535
        %v2337 = vshra.s32 %v2335, 16
        %v2338 = vcvt.s32.f32 %v2336
        %v2339 = vcvt.s32.f32 %v2337
        %2340 = vmin.xlane.f32.xlu0 %v2339
        %v2341 = vpop.xlane.xlu0 %2340
        %vm2342 = vcmp.eq.f32.partialorder %v2339, %v2341
        %v2343 = vsel %vm2342, %v2338, inf
        %2344 = vmin.xlane.f32.xlu0 %v2343
        %v2345 = vpop.xlane.xlu0 %2344
        %v2346 = vcvt.f32.s32 %v2345
        %v2347 = vcvt.f32.s32 %v2341
        %v2348 = vshll.u32 %v2347, 16
        %v2349 = vadd.s32 %v2348, %v2346
        %vm2350 = vcmp.lt.s32.totalorder %v1758, %v1759
        %v2351 = vsel %vm2350, %v1758, %v1759
        %vm2352 = vcmp.lt.s32.totalorder %v2351, %v1760
        %v2353 = vsel %vm2352, %v2351, %v1760
        %vm2354 = vcmp.lt.s32.totalorder %v2353, %v1761
        %v2355 = vsel %vm2354, %v2353, %v1761
        %v2356 = vand.u32 %v2355, 65535
        %v2357 = vshra.s32 %v2355, 16
        %v2358 = vcvt.s32.f32 %v2356
        %v2359 = vcvt.s32.f32 %v2357
        %2360 = vmin.xlane.f32.xlu0 %v2359
        %v2361 = vpop.xlane.xlu0 %2360
        %vm2362 = vcmp.eq.f32.partialorder %v2359, %v2361
        %v2363 = vsel %vm2362, %v2358, inf
        %2364 = vmin.xlane.f32.xlu0 %v2363
        %v2365 = vpop.xlane.xlu0 %2364
        %v2366 = vcvt.f32.s32 %v2365
        %v2367 = vcvt.f32.s32 %v2361
        %v2368 = vshll.u32 %v2367, 16
        %v2369 = vadd.s32 %v2368, %v2366
        %vm2370 = vcmp.lt.s32.totalorder %v1762, %v1763
        %v2371 = vsel %vm2370, %v1762, %v1763
        %vm2372 = vcmp.lt.s32.totalorder %v2371, %v1764
        %v2373 = vsel %vm2372, %v2371, %v1764
        %vm2374 = vcmp.lt.s32.totalorder %v2373, %v1765
        %v2375 = vsel %vm2374, %v2373, %v1765
        %v2376 = vand.u32 %v2375, 65535
        %v2377 = vshra.s32 %v2375, 16
        %v2378 = vcvt.s32.f32 %v2376
        %v2379 = vcvt.s32.f32 %v2377
        %2380 = vmin.xlane.f32.xlu0 %v2379
        %v2381 = vpop.xlane.xlu0 %2380
        %vm2382 = vcmp.eq.f32.partialorder %v2379, %v2381
        %v2383 = vsel %vm2382, %v2378, inf
        %2384 = vmin.xlane.f32.xlu0 %v2383
        %v2385 = vpop.xlane.xlu0 %2384
        %v2386 = vcvt.f32.s32 %v2385
        %v2387 = vcvt.f32.s32 %v2381
        %v2388 = vshll.u32 %v2387, 16
        %v2389 = vadd.s32 %v2388, %v2386
        %vm2390 = vcmp.lt.s32.totalorder %v1766, %v1767
        %v2391 = vsel %vm2390, %v1766, %v1767
        %vm2392 = vcmp.lt.s32.totalorder %v2391, %v1768
        %v2393 = vsel %vm2392, %v2391, %v1768
        %vm2394 = vcmp.lt.s32.totalorder %v2393, %v1769
        %v2395 = vsel %vm2394, %v2393, %v1769
        %v2396 = vand.u32 %v2395, 65535
        %v2397 = vshra.s32 %v2395, 16
        %v2398 = vcvt.s32.f32 %v2396
        %v2399 = vcvt.s32.f32 %v2397
        %2400 = vmin.xlane.f32.xlu0 %v2399
        %v2401 = vpop.xlane.xlu0 %2400
        %vm2402 = vcmp.eq.f32.partialorder %v2399, %v2401
        %v2403 = vsel %vm2402, %v2398, inf
        %2404 = vmin.xlane.f32.xlu0 %v2403
        %v2405 = vpop.xlane.xlu0 %2404
        %v2406 = vcvt.f32.s32 %v2405
        %v2407 = vcvt.f32.s32 %v2401
        %v2408 = vshll.u32 %v2407, 16
        %v2409 = vadd.s32 %v2408, %v2406
        %vm2410 = vcmp.eq.s32.totalorder %v1350, %v1789
        %vm2411 = vcmp.eq.s32.totalorder %v1351, %v1789
        %vm2412 = vcmp.eq.s32.totalorder %v1352, %v1789
        %vm2413 = vcmp.eq.s32.totalorder %v1353, %v1789
        %vm2414 = vcmp.eq.s32.totalorder %v1350, %v1809
        %vm2415 = vcmp.eq.s32.totalorder %v1351, %v1809
        %vm2416 = vcmp.eq.s32.totalorder %v1352, %v1809
        %vm2417 = vcmp.eq.s32.totalorder %v1353, %v1809
        %vm2418 = vcmp.eq.s32.totalorder %v1350, %v1829
        %vm2419 = vcmp.eq.s32.totalorder %v1351, %v1829
        %vm2420 = vcmp.eq.s32.totalorder %v1352, %v1829
        %vm2421 = vcmp.eq.s32.totalorder %v1353, %v1829
        %vm2422 = vcmp.eq.s32.totalorder %v1350, %v1849
        %vm2423 = vcmp.eq.s32.totalorder %v1351, %v1849
        %vm2424 = vcmp.eq.s32.totalorder %v1352, %v1849
        %vm2425 = vcmp.eq.s32.totalorder %v1353, %v1849
        %vm2426 = vcmp.eq.s32.totalorder %v1350, %v1869
        %vm2427 = vcmp.eq.s32.totalorder %v1351, %v1869
        %vm2428 = vcmp.eq.s32.totalorder %v1352, %v1869
        %vm2429 = vcmp.eq.s32.totalorder %v1353, %v1869
        %vm2430 = vcmp.eq.s32.totalorder %v1350, %v1889
        %vm2431 = vcmp.eq.s32.totalorder %v1351, %v1889
        %vm2432 = vcmp.eq.s32.totalorder %v1352, %v1889
        %vm2433 = vcmp.eq.s32.totalorder %v1353, %v1889
        %vm2434 = vcmp.eq.s32.totalorder %v1350, %v1909
        %vm2435 = vcmp.eq.s32.totalorder %v1351, %v1909
        %vm2436 = vcmp.eq.s32.totalorder %v1352, %v1909
        %vm2437 = vcmp.eq.s32.totalorder %v1353, %v1909
        %vm2438 = vcmp.eq.s32.totalorder %v1350, %v1929
        %vm2439 = vcmp.eq.s32.totalorder %v1351, %v1929
        %vm2440 = vcmp.eq.s32.totalorder %v1352, %v1929
        %vm2441 = vcmp.eq.s32.totalorder %v1353, %v1929
        %vm2442 = vcmp.eq.s32.totalorder %v1350, %v1949
        %vm2443 = vcmp.eq.s32.totalorder %v1351, %v1949
        %vm2444 = vcmp.eq.s32.totalorder %v1352, %v1949
        %vm2445 = vcmp.eq.s32.totalorder %v1353, %v1949
        %vm2446 = vcmp.eq.s32.totalorder %v1350, %v1969
        %vm2447 = vcmp.eq.s32.totalorder %v1351, %v1969
        %vm2448 = vcmp.eq.s32.totalorder %v1352, %v1969
        %vm2449 = vcmp.eq.s32.totalorder %v1353, %v1969
        %vm2450 = vcmp.eq.s32.totalorder %v1350, %v1989
        %vm2451 = vcmp.eq.s32.totalorder %v1351, %v1989
        %vm2452 = vcmp.eq.s32.totalorder %v1352, %v1989
        %vm2453 = vcmp.eq.s32.totalorder %v1353, %v1989
        %vm2454 = vcmp.eq.s32.totalorder %v1350, %v2009
        %vm2455 = vcmp.eq.s32.totalorder %v1351, %v2009
        %vm2456 = vcmp.eq.s32.totalorder %v1352, %v2009
        %vm2457 = vcmp.eq.s32.totalorder %v1353, %v2009
        %vm2458 = vcmp.eq.s32.totalorder %v1350, %v2029
        %vm2459 = vcmp.eq.s32.totalorder %v1351, %v2029
        %vm2460 = vcmp.eq.s32.totalorder %v1352, %v2029
        %vm2461 = vcmp.eq.s32.totalorder %v1353, %v2029
        %vm2462 = vcmp.eq.s32.totalorder %v1350, %v2049
        %vm2463 = vcmp.eq.s32.totalorder %v1351, %v2049
        %vm2464 = vcmp.eq.s32.totalorder %v1352, %v2049
        %vm2465 = vcmp.eq.s32.totalorder %v1353, %v2049
        %vm2466 = vcmp.eq.s32.totalorder %v1350, %v2069
        %vm2467 = vcmp.eq.s32.totalorder %v1351, %v2069
        %vm2468 = vcmp.eq.s32.totalorder %v1352, %v2069
        %vm2469 = vcmp.eq.s32.totalorder %v1353, %v2069
        %vm2470 = vcmp.eq.s32.totalorder %v1350, %v2089
        %vm2471 = vcmp.eq.s32.totalorder %v1351, %v2089
        %vm2472 = vcmp.eq.s32.totalorder %v1352, %v2089
        %vm2473 = vcmp.eq.s32.totalorder %v1353, %v2089
        %vm2474 = vcmp.eq.s32.totalorder %v1350, %v2109
        %vm2475 = vcmp.eq.s32.totalorder %v1351, %v2109
        %vm2476 = vcmp.eq.s32.totalorder %v1352, %v2109
        %vm2477 = vcmp.eq.s32.totalorder %v1353, %v2109
        %vm2478 = vcmp.eq.s32.totalorder %v1350, %v2129
        %vm2479 = vcmp.eq.s32.totalorder %v1351, %v2129
        %vm2480 = vcmp.eq.s32.totalorder %v1352, %v2129
        %vm2481 = vcmp.eq.s32.totalorder %v1353, %v2129
        %vm2482 = vcmp.eq.s32.totalorder %v1350, %v2149
        %vm2483 = vcmp.eq.s32.totalorder %v1351, %v2149
        %vm2484 = vcmp.eq.s32.totalorder %v1352, %v2149
        %vm2485 = vcmp.eq.s32.totalorder %v1353, %v2149
        %vm2486 = vcmp.eq.s32.totalorder %v1350, %v2169
        %vm2487 = vcmp.eq.s32.totalorder %v1351, %v2169
        %vm2488 = vcmp.eq.s32.totalorder %v1352, %v2169
        %vm2489 = vcmp.eq.s32.totalorder %v1353, %v2169
        %vm2490 = vcmp.eq.s32.totalorder %v1350, %v2189
        %vm2491 = vcmp.eq.s32.totalorder %v1351, %v2189
        %vm2492 = vcmp.eq.s32.totalorder %v1352, %v2189
        %vm2493 = vcmp.eq.s32.totalorder %v1353, %v2189
        %vm2494 = vcmp.eq.s32.totalorder %v1350, %v2209
        %vm2495 = vcmp.eq.s32.totalorder %v1351, %v2209
        %vm2496 = vcmp.eq.s32.totalorder %v1352, %v2209
        %vm2497 = vcmp.eq.s32.totalorder %v1353, %v2209
        %vm2498 = vcmp.eq.s32.totalorder %v1350, %v2229
        %vm2499 = vcmp.eq.s32.totalorder %v1351, %v2229
        %vm2500 = vcmp.eq.s32.totalorder %v1352, %v2229
        %vm2501 = vcmp.eq.s32.totalorder %v1353, %v2229
        %vm2502 = vcmp.eq.s32.totalorder %v1350, %v2249
        %vm2503 = vcmp.eq.s32.totalorder %v1351, %v2249
        %vm2504 = vcmp.eq.s32.totalorder %v1352, %v2249
        %vm2505 = vcmp.eq.s32.totalorder %v1353, %v2249
        %vm2506 = vcmp.eq.s32.totalorder %v1350, %v2269
        %vm2507 = vcmp.eq.s32.totalorder %v1351, %v2269
        %vm2508 = vcmp.eq.s32.totalorder %v1352, %v2269
        %vm2509 = vcmp.eq.s32.totalorder %v1353, %v2269
        %vm2510 = vcmp.eq.s32.totalorder %v1350, %v2289
        %vm2511 = vcmp.eq.s32.totalorder %v1351, %v2289
        %vm2512 = vcmp.eq.s32.totalorder %v1352, %v2289
        %vm2513 = vcmp.eq.s32.totalorder %v1353, %v2289
        %vm2514 = vcmp.eq.s32.totalorder %v1350, %v2309
        %vm2515 = vcmp.eq.s32.totalorder %v1351, %v2309
        %vm2516 = vcmp.eq.s32.totalorder %v1352, %v2309
        %vm2517 = vcmp.eq.s32.totalorder %v1353, %v2309
        %vm2518 = vcmp.eq.s32.totalorder %v1350, %v2329
        %vm2519 = vcmp.eq.s32.totalorder %v1351, %v2329
        %vm2520 = vcmp.eq.s32.totalorder %v1352, %v2329
        %vm2521 = vcmp.eq.s32.totalorder %v1353, %v2329
        %vm2522 = vcmp.eq.s32.totalorder %v1350, %v2349
        %vm2523 = vcmp.eq.s32.totalorder %v1351, %v2349
        %vm2524 = vcmp.eq.s32.totalorder %v1352, %v2349
        %vm2525 = vcmp.eq.s32.totalorder %v1353, %v2349
        %vm2526 = vcmp.eq.s32.totalorder %v1350, %v2369
        %vm2527 = vcmp.eq.s32.totalorder %v1351, %v2369
        %vm2528 = vcmp.eq.s32.totalorder %v1352, %v2369
        %vm2529 = vcmp.eq.s32.totalorder %v1353, %v2369
        %vm2530 = vcmp.eq.s32.totalorder %v1350, %v2389
        %vm2531 = vcmp.eq.s32.totalorder %v1351, %v2389
        %vm2532 = vcmp.eq.s32.totalorder %v1352, %v2389
        %vm2533 = vcmp.eq.s32.totalorder %v1353, %v2389
        %vm2534 = vcmp.eq.s32.totalorder %v1350, %v2409
        %vm2535 = vcmp.eq.s32.totalorder %v1351, %v2409
        %vm2536 = vcmp.eq.s32.totalorder %v1352, %v2409
        %vm2537 = vcmp.eq.s32.totalorder %v1353, %v2409
        %v2538 = vsel %vm2410, 1, 0
        %v2539 = vsel %vm2411, 1, 0
        %v2540 = vsel %vm2412, 1, 0
        %v2541 = vsel %vm2413, 1, 0
        %v2542 = vsel %vm2414, 1, 0
        %v2543 = vsel %vm2415, 1, 0
        %v2544 = vsel %vm2416, 1, 0
        %v2545 = vsel %vm2417, 1, 0
        %v2546 = vsel %vm2418, 1, 0
        %v2547 = vsel %vm2419, 1, 0
        %v2548 = vsel %vm2420, 1, 0
        %v2549 = vsel %vm2421, 1, 0
        %v2550 = vsel %vm2422, 1, 0
        %v2551 = vsel %vm2423, 1, 0
        %v2552 = vsel %vm2424, 1, 0
        %v2553 = vsel %vm2425, 1, 0
        %v2554 = vsel %vm2426, 1, 0
        %v2555 = vsel %vm2427, 1, 0
        %v2556 = vsel %vm2428, 1, 0
        %v2557 = vsel %vm2429, 1, 0
        %v2558 = vsel %vm2430, 1, 0
        %v2559 = vsel %vm2431, 1, 0
        %v2560 = vsel %vm2432, 1, 0
        %v2561 = vsel %vm2433, 1, 0
        %v2562 = vsel %vm2434, 1, 0
        %v2563 = vsel %vm2435, 1, 0
        %v2564 = vsel %vm2436, 1, 0
        %v2565 = vsel %vm2437, 1, 0
        %v2566 = vsel %vm2438, 1, 0
        %v2567 = vsel %vm2439, 1, 0
        %v2568 = vsel %vm2440, 1, 0
        %v2569 = vsel %vm2441, 1, 0
        %v2570 = vsel %vm2442, 1, 0
        %v2571 = vsel %vm2443, 1, 0
        %v2572 = vsel %vm2444, 1, 0
        %v2573 = vsel %vm2445, 1, 0
        %v2574 = vsel %vm2446, 1, 0
        %v2575 = vsel %vm2447, 1, 0
        %v2576 = vsel %vm2448, 1, 0
        %v2577 = vsel %vm2449, 1, 0
        %v2578 = vsel %vm2450, 1, 0
        %v2579 = vsel %vm2451, 1, 0
        %v2580 = vsel %vm2452, 1, 0
        %v2581 = vsel %vm2453, 1, 0
        %v2582 = vsel %vm2454, 1, 0
        %v2583 = vsel %vm2455, 1, 0
        %v2584 = vsel %vm2456, 1, 0
        %v2585 = vsel %vm2457, 1, 0
        %v2586 = vsel %vm2458, 1, 0
        %v2587 = vsel %vm2459, 1, 0
        %v2588 = vsel %vm2460, 1, 0
        %v2589 = vsel %vm2461, 1, 0
        %v2590 = vsel %vm2462, 1, 0
        %v2591 = vsel %vm2463, 1, 0
        %v2592 = vsel %vm2464, 1, 0
        %v2593 = vsel %vm2465, 1, 0
        %v2594 = vsel %vm2466, 1, 0
        %v2595 = vsel %vm2467, 1, 0
        %v2596 = vsel %vm2468, 1, 0
        %v2597 = vsel %vm2469, 1, 0
        %v2598 = vsel %vm2470, 1, 0
        %v2599 = vsel %vm2471, 1, 0
        %v2600 = vsel %vm2472, 1, 0
        %v2601 = vsel %vm2473, 1, 0
        %v2602 = vsel %vm2474, 1, 0
        %v2603 = vsel %vm2475, 1, 0
        %v2604 = vsel %vm2476, 1, 0
        %v2605 = vsel %vm2477, 1, 0
        %v2606 = vsel %vm2478, 1, 0
        %v2607 = vsel %vm2479, 1, 0
        %v2608 = vsel %vm2480, 1, 0
        %v2609 = vsel %vm2481, 1, 0
        %v2610 = vsel %vm2482, 1, 0
        %v2611 = vsel %vm2483, 1, 0
        %v2612 = vsel %vm2484, 1, 0
        %v2613 = vsel %vm2485, 1, 0
        %v2614 = vsel %vm2486, 1, 0
        %v2615 = vsel %vm2487, 1, 0
        %v2616 = vsel %vm2488, 1, 0
        %v2617 = vsel %vm2489, 1, 0
        %v2618 = vsel %vm2490, 1, 0
        %v2619 = vsel %vm2491, 1, 0
        %v2620 = vsel %vm2492, 1, 0
        %v2621 = vsel %vm2493, 1, 0
        %v2622 = vsel %vm2494, 1, 0
        %v2623 = vsel %vm2495, 1, 0
        %v2624 = vsel %vm2496, 1, 0
        %v2625 = vsel %vm2497, 1, 0
        %v2626 = vsel %vm2498, 1, 0
        %v2627 = vsel %vm2499, 1, 0
        %v2628 = vsel %vm2500, 1, 0
        %v2629 = vsel %vm2501, 1, 0
        %v2630 = vsel %vm2502, 1, 0
        %v2631 = vsel %vm2503, 1, 0
        %v2632 = vsel %vm2504, 1, 0
        %v2633 = vsel %vm2505, 1, 0
        %v2634 = vsel %vm2506, 1, 0
        %v2635 = vsel %vm2507, 1, 0
        %v2636 = vsel %vm2508, 1, 0
        %v2637 = vsel %vm2509, 1, 0
        %v2638 = vsel %vm2510, 1, 0
        %v2639 = vsel %vm2511, 1, 0
        %v2640 = vsel %vm2512, 1, 0
        %v2641 = vsel %vm2513, 1, 0
        %v2642 = vsel %vm2514, 1, 0
        %v2643 = vsel %vm2515, 1, 0
        %v2644 = vsel %vm2516, 1, 0
        %v2645 = vsel %vm2517, 1, 0
        %v2646 = vsel %vm2518, 1, 0
        %v2647 = vsel %vm2519, 1, 0
        %v2648 = vsel %vm2520, 1, 0
        %v2649 = vsel %vm2521, 1, 0
        %v2650 = vsel %vm2522, 1, 0
        %v2651 = vsel %vm2523, 1, 0
        %v2652 = vsel %vm2524, 1, 0
        %v2653 = vsel %vm2525, 1, 0
        %v2654 = vsel %vm2526, 1, 0
        %v2655 = vsel %vm2527, 1, 0
        %v2656 = vsel %vm2528, 1, 0
        %v2657 = vsel %vm2529, 1, 0
        %v2658 = vsel %vm2530, 1, 0
        %v2659 = vsel %vm2531, 1, 0
        %v2660 = vsel %vm2532, 1, 0
        %v2661 = vsel %vm2533, 1, 0
        %v2662 = vsel %vm2534, 1, 0
        %v2663 = vsel %vm2535, 1, 0
        %v2664 = vsel %vm2536, 1, 0
        %v2665 = vsel %vm2537, 1, 0
        %v2666 = vcvt.s32.f32 %v2538
        %v2667 = vcvt.s32.f32 %v2539
        %v2668 = vcvt.s32.f32 %v2540
        %v2669 = vcvt.s32.f32 %v2541
        %v2670 = vcvt.s32.f32 %v2542
        %v2671 = vcvt.s32.f32 %v2543
        %v2672 = vcvt.s32.f32 %v2544
        %v2673 = vcvt.s32.f32 %v2545
        %v2674 = vcvt.s32.f32 %v2546
        %v2675 = vcvt.s32.f32 %v2547
        %v2676 = vcvt.s32.f32 %v2548
        %v2677 = vcvt.s32.f32 %v2549
        %v2678 = vcvt.s32.f32 %v2550
        %v2679 = vcvt.s32.f32 %v2551
        %v2680 = vcvt.s32.f32 %v2552
        %v2681 = vcvt.s32.f32 %v2553
        %v2682 = vcvt.s32.f32 %v2554
        %v2683 = vcvt.s32.f32 %v2555
        %v2684 = vcvt.s32.f32 %v2556
        %v2685 = vcvt.s32.f32 %v2557
        %v2686 = vcvt.s32.f32 %v2558
        %v2687 = vcvt.s32.f32 %v2559
        %v2688 = vcvt.s32.f32 %v2560
        %v2689 = vcvt.s32.f32 %v2561
        %v2690 = vcvt.s32.f32 %v2562
        %v2691 = vcvt.s32.f32 %v2563
        %v2692 = vcvt.s32.f32 %v2564
        %v2693 = vcvt.s32.f32 %v2565
        %v2694 = vcvt.s32.f32 %v2566
        %v2695 = vcvt.s32.f32 %v2567
        %v2696 = vcvt.s32.f32 %v2568
        %v2697 = vcvt.s32.f32 %v2569
        %v2698 = vcvt.s32.f32 %v2570
        %v2699 = vcvt.s32.f32 %v2571
        %v2700 = vcvt.s32.f32 %v2572
        %v2701 = vcvt.s32.f32 %v2573
        %v2702 = vcvt.s32.f32 %v2574
        %v2703 = vcvt.s32.f32 %v2575
        %v2704 = vcvt.s32.f32 %v2576
        %v2705 = vcvt.s32.f32 %v2577
        %v2706 = vcvt.s32.f32 %v2578
        %v2707 = vcvt.s32.f32 %v2579
        %v2708 = vcvt.s32.f32 %v2580
        %v2709 = vcvt.s32.f32 %v2581
        %v2710 = vcvt.s32.f32 %v2582
        %v2711 = vcvt.s32.f32 %v2583
        %v2712 = vcvt.s32.f32 %v2584
        %v2713 = vcvt.s32.f32 %v2585
        %v2714 = vcvt.s32.f32 %v2586
        %v2715 = vcvt.s32.f32 %v2587
        %v2716 = vcvt.s32.f32 %v2588
        %v2717 = vcvt.s32.f32 %v2589
        %v2718 = vcvt.s32.f32 %v2590
        %v2719 = vcvt.s32.f32 %v2591
        %v2720 = vcvt.s32.f32 %v2592
        %v2721 = vcvt.s32.f32 %v2593
        %v2722 = vcvt.s32.f32 %v2594
        %v2723 = vcvt.s32.f32 %v2595
        %v2724 = vcvt.s32.f32 %v2596
        %v2725 = vcvt.s32.f32 %v2597
        %v2726 = vcvt.s32.f32 %v2598
        %v2727 = vcvt.s32.f32 %v2599
        %v2728 = vcvt.s32.f32 %v2600
        %v2729 = vcvt.s32.f32 %v2601
        %v2730 = vcvt.s32.f32 %v2602
        %v2731 = vcvt.s32.f32 %v2603
        %v2732 = vcvt.s32.f32 %v2604
        %v2733 = vcvt.s32.f32 %v2605
        %v2734 = vcvt.s32.f32 %v2606
        %v2735 = vcvt.s32.f32 %v2607
        %v2736 = vcvt.s32.f32 %v2608
        %v2737 = vcvt.s32.f32 %v2609
        %v2738 = vcvt.s32.f32 %v2610
        %v2739 = vcvt.s32.f32 %v2611
        %v2740 = vcvt.s32.f32 %v2612
        %v2741 = vcvt.s32.f32 %v2613
        %v2742 = vcvt.s32.f32 %v2614
        %v2743 = vcvt.s32.f32 %v2615
        %v2744 = vcvt.s32.f32 %v2616
        %v2745 = vcvt.s32.f32 %v2617
        %v2746 = vcvt.s32.f32 %v2618
        %v2747 = vcvt.s32.f32 %v2619
        %v2748 = vcvt.s32.f32 %v2620
        %v2749 = vcvt.s32.f32 %v2621
        %v2750 = vcvt.s32.f32 %v2622
        %v2751 = vcvt.s32.f32 %v2623
        %v2752 = vcvt.s32.f32 %v2624
        %v2753 = vcvt.s32.f32 %v2625
        %v2754 = vcvt.s32.f32 %v2626
        %v2755 = vcvt.s32.f32 %v2627
        %v2756 = vcvt.s32.f32 %v2628
        %v2757 = vcvt.s32.f32 %v2629
        %v2758 = vcvt.s32.f32 %v2630
        %v2759 = vcvt.s32.f32 %v2631
        %v2760 = vcvt.s32.f32 %v2632
        %v2761 = vcvt.s32.f32 %v2633
        %v2762 = vcvt.s32.f32 %v2634
        %v2763 = vcvt.s32.f32 %v2635
        %v2764 = vcvt.s32.f32 %v2636
        %v2765 = vcvt.s32.f32 %v2637
        %v2766 = vcvt.s32.f32 %v2638
        %v2767 = vcvt.s32.f32 %v2639
        %v2768 = vcvt.s32.f32 %v2640
        %v2769 = vcvt.s32.f32 %v2641
        %v2770 = vcvt.s32.f32 %v2642
        %v2771 = vcvt.s32.f32 %v2643
        %v2772 = vcvt.s32.f32 %v2644
        %v2773 = vcvt.s32.f32 %v2645
        %v2774 = vcvt.s32.f32 %v2646
        %v2775 = vcvt.s32.f32 %v2647
        %v2776 = vcvt.s32.f32 %v2648
        %v2777 = vcvt.s32.f32 %v2649
        %v2778 = vcvt.s32.f32 %v2650
        %v2779 = vcvt.s32.f32 %v2651
        %v2780 = vcvt.s32.f32 %v2652
        %v2781 = vcvt.s32.f32 %v2653
        %v2782 = vcvt.s32.f32 %v2654
        %v2783 = vcvt.s32.f32 %v2655
        %v2784 = vcvt.s32.f32 %v2656
        %v2785 = vcvt.s32.f32 %v2657
        %v2786 = vcvt.s32.f32 %v2658
        %v2787 = vcvt.s32.f32 %v2659
        %v2788 = vcvt.s32.f32 %v2660
        %v2789 = vcvt.s32.f32 %v2661
        %v2790 = vcvt.s32.f32 %v2662
        %v2791 = vcvt.s32.f32 %v2663
        %v2792 = vcvt.s32.f32 %v2664
        %v2793 = vcvt.s32.f32 %v2665
        %2794 = vmatpush.msra.mxu0 %v293
        %2795 = vmatpush.msra.mxu0 %v292
        %2796 = vmatpush.msra.mxu0 %v291
        %2797 = vmatpush.msra.mxu0 %v290
        %2798 = vmatpush.msra.mxu0 %v289
        %2799 = vmatpush.msra.mxu0 %v288
        %2800 = vmatpush.msra.mxu0 %v287
        %2801 = vmatpush.msra.mxu0 %v286
        %2802 = vmatpush.msra.mxu0 %v285
        %2803 = vmatpush.msra.mxu0 %v284
        %2804 = vmatpush.msra.mxu0 %v283
        %2805 = vmatpush.msra.mxu0 %v282
        %2806 = vmatpush.msra.mxu0 %v281
        %2807 = vmatpush.msra.mxu0 %v280
        %2808 = vmatpush.msra.mxu0 %v279
        %2809 = vmatpush.msra.mxu0 %v278
        %2810 = vmatmul.f32.gmra.mxu0 %v2666
        %v2811 = vpop.f32.mrf.mxu0
        %v2812 = vadd.f32 0.0, %v2811
        %2813 = vmatmul.f32.gmra.mxu0 %v2670
        %v2814 = vpop.f32.mrf.mxu0
        %v2815 = vadd.f32 0.0, %v2814
        %2816 = vmatmul.f32.gmra.mxu0 %v2674
        %v2817 = vpop.f32.mrf.mxu0
        %v2818 = vadd.f32 0.0, %v2817
        %2819 = vmatmul.f32.gmra.mxu0 %v2678
        %v2820 = vpop.f32.mrf.mxu0
        %v2821 = vadd.f32 0.0, %v2820
        %2822 = vmatmul.f32.gmra.mxu0 %v2682
        %v2823 = vpop.f32.mrf.mxu0
        %v2824 = vadd.f32 0.0, %v2823
        %2825 = vmatmul.f32.gmra.mxu0 %v2686
        %v2826 = vpop.f32.mrf.mxu0
        %v2827 = vadd.f32 0.0, %v2826
        %2828 = vmatmul.f32.gmra.mxu0 %v2690
        %v2829 = vpop.f32.mrf.mxu0
        %v2830 = vadd.f32 0.0, %v2829
        %2831 = vmatmul.f32.gmra.mxu0 %v2694
        %v2832 = vpop.f32.mrf.mxu0
        %v2833 = vadd.f32 0.0, %v2832
        %2834 = vmatmul.f32.gmra.mxu0 %v2698
        %v2835 = vpop.f32.mrf.mxu0
        %v2836 = vadd.f32 0.0, %v2835
        %2837 = vmatmul.f32.gmra.mxu0 %v2702
        %v2838 = vpop.f32.mrf.mxu0
        %v2839 = vadd.f32 0.0, %v2838
        %2840 = vmatmul.f32.gmra.mxu0 %v2706
        %v2841 = vpop.f32.mrf.mxu0
        %v2842 = vadd.f32 0.0, %v2841
        %2843 = vmatmul.f32.gmra.mxu0 %v2710
        %v2844 = vpop.f32.mrf.mxu0
        %v2845 = vadd.f32 0.0, %v2844
        %2846 = vmatmul.f32.gmra.mxu0 %v2714
        %v2847 = vpop.f32.mrf.mxu0
        %v2848 = vadd.f32 0.0, %v2847
        %2849 = vmatmul.f32.gmra.mxu0 %v2718
        %v2850 = vpop.f32.mrf.mxu0
        %v2851 = vadd.f32 0.0, %v2850
        %2852 = vmatmul.f32.gmra.mxu0 %v2722
        %v2853 = vpop.f32.mrf.mxu0
        %v2854 = vadd.f32 0.0, %v2853
        %2855 = vmatmul.f32.gmra.mxu0 %v2726
        %v2856 = vpop.f32.mrf.mxu0
        %v2857 = vadd.f32 0.0, %v2856
        %2858 = vmatmul.f32.gmra.mxu0 %v2730
        %v2859 = vpop.f32.mrf.mxu0
        %v2860 = vadd.f32 0.0, %v2859
        %2861 = vmatmul.f32.gmra.mxu0 %v2734
        %v2862 = vpop.f32.mrf.mxu0
        %v2863 = vadd.f32 0.0, %v2862
        %2864 = vmatmul.f32.gmra.mxu0 %v2738
        %v2865 = vpop.f32.mrf.mxu0
        %v2866 = vadd.f32 0.0, %v2865
        %2867 = vmatmul.f32.gmra.mxu0 %v2742
        %v2868 = vpop.f32.mrf.mxu0
        %v2869 = vadd.f32 0.0, %v2868
        %2870 = vmatmul.f32.gmra.mxu0 %v2746
        %v2871 = vpop.f32.mrf.mxu0
        %v2872 = vadd.f32 0.0, %v2871
        %2873 = vmatmul.f32.gmra.mxu0 %v2750
        %v2874 = vpop.f32.mrf.mxu0
        %v2875 = vadd.f32 0.0, %v2874
        %2876 = vmatmul.f32.gmra.mxu0 %v2754
        %v2877 = vpop.f32.mrf.mxu0
        %v2878 = vadd.f32 0.0, %v2877
        %2879 = vmatmul.f32.gmra.mxu0 %v2758
        %v2880 = vpop.f32.mrf.mxu0
        %v2881 = vadd.f32 0.0, %v2880
        %2882 = vmatmul.f32.gmra.mxu0 %v2762
        %v2883 = vpop.f32.mrf.mxu0
        %v2884 = vadd.f32 0.0, %v2883
        %2885 = vmatmul.f32.gmra.mxu0 %v2766
        %v2886 = vpop.f32.mrf.mxu0
        %v2887 = vadd.f32 0.0, %v2886
        %2888 = vmatmul.f32.gmra.mxu0 %v2770
        %v2889 = vpop.f32.mrf.mxu0
        %v2890 = vadd.f32 0.0, %v2889
        %2891 = vmatmul.f32.gmra.mxu0 %v2774
        %v2892 = vpop.f32.mrf.mxu0
        %v2893 = vadd.f32 0.0, %v2892
        %2894 = vmatmul.f32.gmra.mxu0 %v2778
        %v2895 = vpop.f32.mrf.mxu0
        %v2896 = vadd.f32 0.0, %v2895
        %2897 = vmatmul.f32.gmra.mxu0 %v2782
        %v2898 = vpop.f32.mrf.mxu0
        %v2899 = vadd.f32 0.0, %v2898
        %2900 = vmatmul.f32.gmra.mxu0 %v2786
        %v2901 = vpop.f32.mrf.mxu0
        %v2902 = vadd.f32 0.0, %v2901
        %2903 = vmatmul.f32.gmra.mxu0 %v2790
        %v2904 = vpop.f32.mrf.mxu0
        %v2905 = vadd.f32 0.0, %v2904
        %2906 = vdwg.mxu0
        %2907 = vmatpush.msra.mxu0 %v309
        %2908 = vmatpush.msra.mxu0 %v308
        %2909 = vmatpush.msra.mxu0 %v307
        %2910 = vmatpush.msra.mxu0 %v306
        %2911 = vmatpush.msra.mxu0 %v305
        %2912 = vmatpush.msra.mxu0 %v304
        %2913 = vmatpush.msra.mxu0 %v303
        %2914 = vmatpush.msra.mxu0 %v302
        %2915 = vmatpush.msra.mxu0 %v301
        %2916 = vmatpush.msra.mxu0 %v300
        %2917 = vmatpush.msra.mxu0 %v299
        %2918 = vmatpush.msra.mxu0 %v298
        %2919 = vmatpush.msra.mxu0 %v297
        %2920 = vmatpush.msra.mxu0 %v296
        %2921 = vmatpush.msra.mxu0 %v295
        %2922 = vmatpush.msra.mxu0 %v294
        %2923 = vmatmul.f32.gmra.mxu0 %v2667
        %v2924 = vpop.f32.mrf.mxu0
        %v2925 = vadd.f32 %v2812, %v2924
        %2926 = vmatmul.f32.gmra.mxu0 %v2671
        %v2927 = vpop.f32.mrf.mxu0
        %v2928 = vadd.f32 %v2815, %v2927
        %2929 = vmatmul.f32.gmra.mxu0 %v2675
        %v2930 = vpop.f32.mrf.mxu0
        %v2931 = vadd.f32 %v2818, %v2930
        %2932 = vmatmul.f32.gmra.mxu0 %v2679
        %v2933 = vpop.f32.mrf.mxu0
        %v2934 = vadd.f32 %v2821, %v2933
        %2935 = vmatmul.f32.gmra.mxu0 %v2683
        %v2936 = vpop.f32.mrf.mxu0
        %v2937 = vadd.f32 %v2824, %v2936
        %2938 = vmatmul.f32.gmra.mxu0 %v2687
        %v2939 = vpop.f32.mrf.mxu0
        %v2940 = vadd.f32 %v2827, %v2939
        %2941 = vmatmul.f32.gmra.mxu0 %v2691
        %v2942 = vpop.f32.mrf.mxu0
        %v2943 = vadd.f32 %v2830, %v2942
        %2944 = vmatmul.f32.gmra.mxu0 %v2695
        %v2945 = vpop.f32.mrf.mxu0
        %v2946 = vadd.f32 %v2833, %v2945
        %2947 = vmatmul.f32.gmra.mxu0 %v2699
        %v2948 = vpop.f32.mrf.mxu0
        %v2949 = vadd.f32 %v2836, %v2948
        %2950 = vmatmul.f32.gmra.mxu0 %v2703
        %v2951 = vpop.f32.mrf.mxu0
        %v2952 = vadd.f32 %v2839, %v2951
        %2953 = vmatmul.f32.gmra.mxu0 %v2707
        %v2954 = vpop.f32.mrf.mxu0
        %v2955 = vadd.f32 %v2842, %v2954
        %2956 = vmatmul.f32.gmra.mxu0 %v2711
        %v2957 = vpop.f32.mrf.mxu0
        %v2958 = vadd.f32 %v2845, %v2957
        %2959 = vmatmul.f32.gmra.mxu0 %v2715
        %v2960 = vpop.f32.mrf.mxu0
        %v2961 = vadd.f32 %v2848, %v2960
        %2962 = vmatmul.f32.gmra.mxu0 %v2719
        %v2963 = vpop.f32.mrf.mxu0
        %v2964 = vadd.f32 %v2851, %v2963
        %2965 = vmatmul.f32.gmra.mxu0 %v2723
        %v2966 = vpop.f32.mrf.mxu0
        %v2967 = vadd.f32 %v2854, %v2966
        %2968 = vmatmul.f32.gmra.mxu0 %v2727
        %v2969 = vpop.f32.mrf.mxu0
        %v2970 = vadd.f32 %v2857, %v2969
        %2971 = vmatmul.f32.gmra.mxu0 %v2731
        %v2972 = vpop.f32.mrf.mxu0
        %v2973 = vadd.f32 %v2860, %v2972
        %2974 = vmatmul.f32.gmra.mxu0 %v2735
        %v2975 = vpop.f32.mrf.mxu0
        %v2976 = vadd.f32 %v2863, %v2975
        %2977 = vmatmul.f32.gmra.mxu0 %v2739
        %v2978 = vpop.f32.mrf.mxu0
        %v2979 = vadd.f32 %v2866, %v2978
        %2980 = vmatmul.f32.gmra.mxu0 %v2743
        %v2981 = vpop.f32.mrf.mxu0
        %v2982 = vadd.f32 %v2869, %v2981
        %2983 = vmatmul.f32.gmra.mxu0 %v2747
        %v2984 = vpop.f32.mrf.mxu0
        %v2985 = vadd.f32 %v2872, %v2984
        %2986 = vmatmul.f32.gmra.mxu0 %v2751
        %v2987 = vpop.f32.mrf.mxu0
        %v2988 = vadd.f32 %v2875, %v2987
        %2989 = vmatmul.f32.gmra.mxu0 %v2755
        %v2990 = vpop.f32.mrf.mxu0
        %v2991 = vadd.f32 %v2878, %v2990
        %2992 = vmatmul.f32.gmra.mxu0 %v2759
        %v2993 = vpop.f32.mrf.mxu0
        %v2994 = vadd.f32 %v2881, %v2993
        %2995 = vmatmul.f32.gmra.mxu0 %v2763
        %v2996 = vpop.f32.mrf.mxu0
        %v2997 = vadd.f32 %v2884, %v2996
        %2998 = vmatmul.f32.gmra.mxu0 %v2767
        %v2999 = vpop.f32.mrf.mxu0
        %v3000 = vadd.f32 %v2887, %v2999
        %3001 = vmatmul.f32.gmra.mxu0 %v2771
        %v3002 = vpop.f32.mrf.mxu0
        %v3003 = vadd.f32 %v2890, %v3002
        %3004 = vmatmul.f32.gmra.mxu0 %v2775
        %v3005 = vpop.f32.mrf.mxu0
        %v3006 = vadd.f32 %v2893, %v3005
        %3007 = vmatmul.f32.gmra.mxu0 %v2779
        %v3008 = vpop.f32.mrf.mxu0
        %v3009 = vadd.f32 %v2896, %v3008
        %3010 = vmatmul.f32.gmra.mxu0 %v2783
        %v3011 = vpop.f32.mrf.mxu0
        %v3012 = vadd.f32 %v2899, %v3011
        %3013 = vmatmul.f32.gmra.mxu0 %v2787
        %v3014 = vpop.f32.mrf.mxu0
        %v3015 = vadd.f32 %v2902, %v3014
        %3016 = vmatmul.f32.gmra.mxu0 %v2791
        %v3017 = vpop.f32.mrf.mxu0
        %v3018 = vadd.f32 %v2905, %v3017
        %3019 = vdwg.mxu0
        %3020 = vmatpush.msra.mxu0 %v325
        %3021 = vmatpush.msra.mxu0 %v324
        %3022 = vmatpush.msra.mxu0 %v323
        %3023 = vmatpush.msra.mxu0 %v322
        %3024 = vmatpush.msra.mxu0 %v321
        %3025 = vmatpush.msra.mxu0 %v320
        %3026 = vmatpush.msra.mxu0 %v319
        %3027 = vmatpush.msra.mxu0 %v318
        %3028 = vmatpush.msra.mxu0 %v317
        %3029 = vmatpush.msra.mxu0 %v316
        %3030 = vmatpush.msra.mxu0 %v315
        %3031 = vmatpush.msra.mxu0 %v314
        %3032 = vmatpush.msra.mxu0 %v313
        %3033 = vmatpush.msra.mxu0 %v312
        %3034 = vmatpush.msra.mxu0 %v311
        %3035 = vmatpush.msra.mxu0 %v310
        %3036 = vmatmul.f32.gmra.mxu0 %v2668
        %v3037 = vpop.f32.mrf.mxu0
        %v3038 = vadd.f32 %v2925, %v3037
        %3039 = vmatmul.f32.gmra.mxu0 %v2672
        %v3040 = vpop.f32.mrf.mxu0
        %v3041 = vadd.f32 %v2928, %v3040
        %3042 = vmatmul.f32.gmra.mxu0 %v2676
        %v3043 = vpop.f32.mrf.mxu0
        %v3044 = vadd.f32 %v2931, %v3043
        %3045 = vmatmul.f32.gmra.mxu0 %v2680
        %v3046 = vpop.f32.mrf.mxu0
        %v3047 = vadd.f32 %v2934, %v3046
        %3048 = vmatmul.f32.gmra.mxu0 %v2684
        %v3049 = vpop.f32.mrf.mxu0
        %v3050 = vadd.f32 %v2937, %v3049
        %3051 = vmatmul.f32.gmra.mxu0 %v2688
        %v3052 = vpop.f32.mrf.mxu0
        %v3053 = vadd.f32 %v2940, %v3052
        %3054 = vmatmul.f32.gmra.mxu0 %v2692
        %v3055 = vpop.f32.mrf.mxu0
        %v3056 = vadd.f32 %v2943, %v3055
        %3057 = vmatmul.f32.gmra.mxu0 %v2696
        %v3058 = vpop.f32.mrf.mxu0
        %v3059 = vadd.f32 %v2946, %v3058
        %3060 = vmatmul.f32.gmra.mxu0 %v2700
        %v3061 = vpop.f32.mrf.mxu0
        %v3062 = vadd.f32 %v2949, %v3061
        %3063 = vmatmul.f32.gmra.mxu0 %v2704
        %v3064 = vpop.f32.mrf.mxu0
        %v3065 = vadd.f32 %v2952, %v3064
        %3066 = vmatmul.f32.gmra.mxu0 %v2708
        %v3067 = vpop.f32.mrf.mxu0
        %v3068 = vadd.f32 %v2955, %v3067
        %3069 = vmatmul.f32.gmra.mxu0 %v2712
        %v3070 = vpop.f32.mrf.mxu0
        %v3071 = vadd.f32 %v2958, %v3070
        %3072 = vmatmul.f32.gmra.mxu0 %v2716
        %v3073 = vpop.f32.mrf.mxu0
        %v3074 = vadd.f32 %v2961, %v3073
        %3075 = vmatmul.f32.gmra.mxu0 %v2720
        %v3076 = vpop.f32.mrf.mxu0
        %v3077 = vadd.f32 %v2964, %v3076
        %3078 = vmatmul.f32.gmra.mxu0 %v2724
        %v3079 = vpop.f32.mrf.mxu0
        %v3080 = vadd.f32 %v2967, %v3079
        %3081 = vmatmul.f32.gmra.mxu0 %v2728
        %v3082 = vpop.f32.mrf.mxu0
        %v3083 = vadd.f32 %v2970, %v3082
        %3084 = vmatmul.f32.gmra.mxu0 %v2732
        %v3085 = vpop.f32.mrf.mxu0
        %v3086 = vadd.f32 %v2973, %v3085
        %3087 = vmatmul.f32.gmra.mxu0 %v2736
        %v3088 = vpop.f32.mrf.mxu0
        %v3089 = vadd.f32 %v2976, %v3088
        %3090 = vmatmul.f32.gmra.mxu0 %v2740
        %v3091 = vpop.f32.mrf.mxu0
        %v3092 = vadd.f32 %v2979, %v3091
        %3093 = vmatmul.f32.gmra.mxu0 %v2744
        %v3094 = vpop.f32.mrf.mxu0
        %v3095 = vadd.f32 %v2982, %v3094
        %3096 = vmatmul.f32.gmra.mxu0 %v2748
        %v3097 = vpop.f32.mrf.mxu0
        %v3098 = vadd.f32 %v2985, %v3097
        %3099 = vmatmul.f32.gmra.mxu0 %v2752
        %v3100 = vpop.f32.mrf.mxu0
        %v3101 = vadd.f32 %v2988, %v3100
        %3102 = vmatmul.f32.gmra.mxu0 %v2756
        %v3103 = vpop.f32.mrf.mxu0
        %v3104 = vadd.f32 %v2991, %v3103
        %3105 = vmatmul.f32.gmra.mxu0 %v2760
        %v3106 = vpop.f32.mrf.mxu0
        %v3107 = vadd.f32 %v2994, %v3106
        %3108 = vmatmul.f32.gmra.mxu0 %v2764
        %v3109 = vpop.f32.mrf.mxu0
        %v3110 = vadd.f32 %v2997, %v3109
        %3111 = vmatmul.f32.gmra.mxu0 %v2768
        %v3112 = vpop.f32.mrf.mxu0
        %v3113 = vadd.f32 %v3000, %v3112
        %3114 = vmatmul.f32.gmra.mxu0 %v2772
        %v3115 = vpop.f32.mrf.mxu0
        %v3116 = vadd.f32 %v3003, %v3115
        %3117 = vmatmul.f32.gmra.mxu0 %v2776
        %v3118 = vpop.f32.mrf.mxu0
        %v3119 = vadd.f32 %v3006, %v3118
        %3120 = vmatmul.f32.gmra.mxu0 %v2780
        %v3121 = vpop.f32.mrf.mxu0
        %v3122 = vadd.f32 %v3009, %v3121
        %3123 = vmatmul.f32.gmra.mxu0 %v2784
        %v3124 = vpop.f32.mrf.mxu0
        %v3125 = vadd.f32 %v3012, %v3124
        %3126 = vmatmul.f32.gmra.mxu0 %v2788
        %v3127 = vpop.f32.mrf.mxu0
        %v3128 = vadd.f32 %v3015, %v3127
        %3129 = vmatmul.f32.gmra.mxu0 %v2792
        %v3130 = vpop.f32.mrf.mxu0
        %v3131 = vadd.f32 %v3018, %v3130
        %3132 = vdwg.mxu0
        %3133 = vmatpush.msra.mxu0 %v341
        %3134 = vmatpush.msra.mxu0 %v340
        %3135 = vmatpush.msra.mxu0 %v339
        %3136 = vmatpush.msra.mxu0 %v338
        %3137 = vmatpush.msra.mxu0 %v337
        %3138 = vmatpush.msra.mxu0 %v336
        %3139 = vmatpush.msra.mxu0 %v335
        %3140 = vmatpush.msra.mxu0 %v334
        %3141 = vmatpush.msra.mxu0 %v333
        %3142 = vmatpush.msra.mxu0 %v332
        %3143 = vmatpush.msra.mxu0 %v331
        %3144 = vmatpush.msra.mxu0 %v330
        %3145 = vmatpush.msra.mxu0 %v329
        %3146 = vmatpush.msra.mxu0 %v328
        %3147 = vmatpush.msra.mxu0 %v327
        %3148 = vmatpush.msra.mxu0 %v326
        %3149 = vmatmul.f32.gmra.mxu0 %v2669
        %v3150 = vpop.f32.mrf.mxu0
        %v3151 = vadd.f32 %v3038, %v3150
        %3152 = vmatmul.f32.gmra.mxu0 %v2673
        %v3153 = vpop.f32.mrf.mxu0
        %v3154 = vadd.f32 %v3041, %v3153
        %3155 = vmatmul.f32.gmra.mxu0 %v2677
        %v3156 = vpop.f32.mrf.mxu0
        %v3157 = vadd.f32 %v3044, %v3156
        %3158 = vmatmul.f32.gmra.mxu0 %v2681
        %v3159 = vpop.f32.mrf.mxu0
        %v3160 = vadd.f32 %v3047, %v3159
        %3161 = vmatmul.f32.gmra.mxu0 %v2685
        %v3162 = vpop.f32.mrf.mxu0
        %v3163 = vadd.f32 %v3050, %v3162
        %3164 = vmatmul.f32.gmra.mxu0 %v2689
        %v3165 = vpop.f32.mrf.mxu0
        %v3166 = vadd.f32 %v3053, %v3165
        %3167 = vmatmul.f32.gmra.mxu0 %v2693
        %v3168 = vpop.f32.mrf.mxu0
        %v3169 = vadd.f32 %v3056, %v3168
        %3170 = vmatmul.f32.gmra.mxu0 %v2697
        %v3171 = vpop.f32.mrf.mxu0
        %v3172 = vadd.f32 %v3059, %v3171
        %3173 = vmatmul.f32.gmra.mxu0 %v2701
        %v3174 = vpop.f32.mrf.mxu0
        %v3175 = vadd.f32 %v3062, %v3174
        %3176 = vmatmul.f32.gmra.mxu0 %v2705
        %v3177 = vpop.f32.mrf.mxu0
        %v3178 = vadd.f32 %v3065, %v3177
        %3179 = vmatmul.f32.gmra.mxu0 %v2709
        %v3180 = vpop.f32.mrf.mxu0
        %v3181 = vadd.f32 %v3068, %v3180
        %3182 = vmatmul.f32.gmra.mxu0 %v2713
        %v3183 = vpop.f32.mrf.mxu0
        %v3184 = vadd.f32 %v3071, %v3183
        %3185 = vmatmul.f32.gmra.mxu0 %v2717
        %v3186 = vpop.f32.mrf.mxu0
        %v3187 = vadd.f32 %v3074, %v3186
        %3188 = vmatmul.f32.gmra.mxu0 %v2721
        %v3189 = vpop.f32.mrf.mxu0
        %v3190 = vadd.f32 %v3077, %v3189
        %3191 = vmatmul.f32.gmra.mxu0 %v2725
        %v3192 = vpop.f32.mrf.mxu0
        %v3193 = vadd.f32 %v3080, %v3192
        %3194 = vmatmul.f32.gmra.mxu0 %v2729
        %v3195 = vpop.f32.mrf.mxu0
        %v3196 = vadd.f32 %v3083, %v3195
        %3197 = vmatmul.f32.gmra.mxu0 %v2733
        %v3198 = vpop.f32.mrf.mxu0
        %v3199 = vadd.f32 %v3086, %v3198
        %3200 = vmatmul.f32.gmra.mxu0 %v2737
        %v3201 = vpop.f32.mrf.mxu0
        %v3202 = vadd.f32 %v3089, %v3201
        %3203 = vmatmul.f32.gmra.mxu0 %v2741
        %v3204 = vpop.f32.mrf.mxu0
        %v3205 = vadd.f32 %v3092, %v3204
        %3206 = vmatmul.f32.gmra.mxu0 %v2745
        %v3207 = vpop.f32.mrf.mxu0
        %v3208 = vadd.f32 %v3095, %v3207
        %3209 = vmatmul.f32.gmra.mxu0 %v2749
        %v3210 = vpop.f32.mrf.mxu0
        %v3211 = vadd.f32 %v3098, %v3210
        %3212 = vmatmul.f32.gmra.mxu0 %v2753
        %v3213 = vpop.f32.mrf.mxu0
        %v3214 = vadd.f32 %v3101, %v3213
        %3215 = vmatmul.f32.gmra.mxu0 %v2757
        %v3216 = vpop.f32.mrf.mxu0
        %v3217 = vadd.f32 %v3104, %v3216
        %3218 = vmatmul.f32.gmra.mxu0 %v2761
        %v3219 = vpop.f32.mrf.mxu0
        %v3220 = vadd.f32 %v3107, %v3219
        %3221 = vmatmul.f32.gmra.mxu0 %v2765
        %v3222 = vpop.f32.mrf.mxu0
        %v3223 = vadd.f32 %v3110, %v3222
        %3224 = vmatmul.f32.gmra.mxu0 %v2769
        %v3225 = vpop.f32.mrf.mxu0
        %v3226 = vadd.f32 %v3113, %v3225
        %3227 = vmatmul.f32.gmra.mxu0 %v2773
        %v3228 = vpop.f32.mrf.mxu0
        %v3229 = vadd.f32 %v3116, %v3228
        %3230 = vmatmul.f32.gmra.mxu0 %v2777
        %v3231 = vpop.f32.mrf.mxu0
        %v3232 = vadd.f32 %v3119, %v3231
        %3233 = vmatmul.f32.gmra.mxu0 %v2781
        %v3234 = vpop.f32.mrf.mxu0
        %v3235 = vadd.f32 %v3122, %v3234
        %3236 = vmatmul.f32.gmra.mxu0 %v2785
        %v3237 = vpop.f32.mrf.mxu0
        %v3238 = vadd.f32 %v3125, %v3237
        %3239 = vmatmul.f32.gmra.mxu0 %v2789
        %v3240 = vpop.f32.mrf.mxu0
        %v3241 = vadd.f32 %v3128, %v3240
        %3242 = vmatmul.f32.gmra.mxu0 %v2793
        %v3243 = vpop.f32.mrf.mxu0
        %v3244 = vadd.f32 %v3131, %v3243
        %3245 = vdwg.mxu0
        %3246 = vst.msk [vmem:[%s232] sm:$0xff] %vm342, %v3151
        %3247 = vst.msk [vmem:[%s232 + $0x8] sm:$0xff] %vm342, %v3154
        %3248 = vst.msk [vmem:[%s232 + $0x10] sm:$0xff] %vm342, %v3157
        %3249 = vst.msk [vmem:[%s232 + $0x18] sm:$0xff] %vm342, %v3160
        %3250 = vst.msk [vmem:[%s232 + $0x20] sm:$0xff] %vm342, %v3163
        %3251 = vst.msk [vmem:[%s232 + $0x28] sm:$0xff] %vm342, %v3166
        %3252 = vst.msk [vmem:[%s232 + $0x30] sm:$0xff] %vm342, %v3169
        %3253 = vst.msk [vmem:[%s232 + $0x38] sm:$0xff] %vm342, %v3172
        %3254 = vst.msk [vmem:[%s232 + $0x40] sm:$0xff] %vm342, %v3175
        %3255 = vst.msk [vmem:[%s232 + $0x48] sm:$0xff] %vm342, %v3178
        %3256 = vst.msk [vmem:[%s232 + $0x50] sm:$0xff] %vm342, %v3181
        %3257 = vst.msk [vmem:[%s232 + $0x58] sm:$0xff] %vm342, %v3184
        %3258 = vst.msk [vmem:[%s232 + $0x60] sm:$0xff] %vm342, %v3187
        %3259 = vst.msk [vmem:[%s232 + $0x68] sm:$0xff] %vm342, %v3190
        %3260 = vst.msk [vmem:[%s232 + $0x70] sm:$0xff] %vm342, %v3193
        %3261 = vst.msk [vmem:[%s232 + $0x78] sm:$0xff] %vm342, %v3196
        %3262 = vst.msk [vmem:[%s232 + $0x80] sm:$0xff] %vm342, %v3199
        %3263 = vst.msk [vmem:[%s232 + $0x88] sm:$0xff] %vm342, %v3202
        %3264 = vst.msk [vmem:[%s232 + $0x90] sm:$0xff] %vm342, %v3205
        %3265 = vst.msk [vmem:[%s232 + $0x98] sm:$0xff] %vm342, %v3208
        %3266 = vst.msk [vmem:[%s232 + $0xa0] sm:$0xff] %vm342, %v3211
        %3267 = vst.msk [vmem:[%s232 + $0xa8] sm:$0xff] %vm342, %v3214
        %3268 = vst.msk [vmem:[%s232 + $0xb0] sm:$0xff] %vm342, %v3217
        %3269 = vst.msk [vmem:[%s232 + $0xb8] sm:$0xff] %vm342, %v3220
        %3270 = vst.msk [vmem:[%s232 + $0xc0] sm:$0xff] %vm342, %v3223
        %3271 = vst.msk [vmem:[%s232 + $0xc8] sm:$0xff] %vm342, %v3226
        %3272 = vst.msk [vmem:[%s232 + $0xd0] sm:$0xff] %vm342, %v3229
        %3273 = vst.msk [vmem:[%s232 + $0xd8] sm:$0xff] %vm342, %v3232
        %3274 = vst.msk [vmem:[%s232 + $0xe0] sm:$0xff] %vm342, %v3235
        %3275 = vst.msk [vmem:[%s232 + $0xe8] sm:$0xff] %vm342, %v3238
        %3276 = vst.msk [vmem:[%s232 + $0xf0] sm:$0xff] %vm342, %v3241
        %3277 = vst.msk [vmem:[%s232 + $0xf8] sm:$0xff] %vm342, %v3244
        %vm3278 = vcmask 7168
        %3279 = vst.msk [vmem:[%s238] sm:$0xff] %vm3278, %v1789
        %3280 = vst.msk [vmem:[%s238 + $0x8] sm:$0xff] %vm3278, %v1809
        %3281 = vst.msk [vmem:[%s238 + $0x10] sm:$0xff] %vm3278, %v1829
        %3282 = vst.msk [vmem:[%s238 + $0x18] sm:$0xff] %vm3278, %v1849
        %3283 = vst.msk [vmem:[%s238 + $0x20] sm:$0xff] %vm3278, %v1869
        %3284 = vst.msk [vmem:[%s238 + $0x28] sm:$0xff] %vm3278, %v1889
        %3285 = vst.msk [vmem:[%s238 + $0x30] sm:$0xff] %vm3278, %v1909
        %3286 = vst.msk [vmem:[%s238 + $0x38] sm:$0xff] %vm3278, %v1929
        %3287 = vst.msk [vmem:[%s238 + $0x40] sm:$0xff] %vm3278, %v1949
        %3288 = vst.msk [vmem:[%s238 + $0x48] sm:$0xff] %vm3278, %v1969
        %3289 = vst.msk [vmem:[%s238 + $0x50] sm:$0xff] %vm3278, %v1989
        %3290 = vst.msk [vmem:[%s238 + $0x58] sm:$0xff] %vm3278, %v2009
        %3291 = vst.msk [vmem:[%s238 + $0x60] sm:$0xff] %vm3278, %v2029
        %3292 = vst.msk [vmem:[%s238 + $0x68] sm:$0xff] %vm3278, %v2049
        %3293 = vst.msk [vmem:[%s238 + $0x70] sm:$0xff] %vm3278, %v2069
        %3294 = vst.msk [vmem:[%s238 + $0x78] sm:$0xff] %vm3278, %v2089
        %3295 = vst.msk [vmem:[%s238 + $0x80] sm:$0xff] %vm3278, %v2109
        %3296 = vst.msk [vmem:[%s238 + $0x88] sm:$0xff] %vm3278, %v2129
        %3297 = vst.msk [vmem:[%s238 + $0x90] sm:$0xff] %vm3278, %v2149
        %3298 = vst.msk [vmem:[%s238 + $0x98] sm:$0xff] %vm3278, %v2169
        %3299 = vst.msk [vmem:[%s238 + $0xa0] sm:$0xff] %vm3278, %v2189
        %3300 = vst.msk [vmem:[%s238 + $0xa8] sm:$0xff] %vm3278, %v2209
        %3301 = vst.msk [vmem:[%s238 + $0xb0] sm:$0xff] %vm3278, %v2229
        %3302 = vst.msk [vmem:[%s238 + $0xb8] sm:$0xff] %vm3278, %v2249
        %3303 = vst.msk [vmem:[%s238 + $0xc0] sm:$0xff] %vm3278, %v2269
        %3304 = vst.msk [vmem:[%s238 + $0xc8] sm:$0xff] %vm3278, %v2289
        %3305 = vst.msk [vmem:[%s238 + $0xd0] sm:$0xff] %vm3278, %v2309
        %3306 = vst.msk [vmem:[%s238 + $0xd8] sm:$0xff] %vm3278, %v2329
        %3307 = vst.msk [vmem:[%s238 + $0xe0] sm:$0xff] %vm3278, %v2349
        %3308 = vst.msk [vmem:[%s238 + $0xe8] sm:$0xff] %vm3278, %v2369
        %3309 = vst.msk [vmem:[%s238 + $0xf0] sm:$0xff] %vm3278, %v2389
        %3310 = vst.msk [vmem:[%s238 + $0xf8] sm:$0xff] %vm3278, %v2409
        %v3311 = vlaneseq
        %v3312 = vshrl.u32 %v3311, 7
        %v3313 = vadd.s32 %v3312, 8
        %v3314 = vadd.s32 %v3312, 16
        %v3315 = vadd.s32 %v3312, 24
        %v3316 = vadd.s32 %v3312, 32
        %v3317 = vadd.s32 %v3312, 40
        %v3318 = vadd.s32 %v3312, 48
        %v3319 = vadd.s32 %v3312, 56
        %v3320 = vadd.s32 %v3312, 64
        %v3321 = vadd.s32 %v3312, 72
        %v3322 = vadd.s32 %v3312, 80
        %v3323 = vadd.s32 %v3312, 88
        %v3324 = vadd.s32 %v3312, 96
        %v3325 = vadd.s32 %v3312, 104
        %v3326 = vadd.s32 %v3312, 112
        %v3327 = vadd.s32 %v3312, 120
        %v3328 = vadd.s32 %v3312, 128
        %v3329 = vadd.s32 %v3312, 136
        %v3330 = vadd.s32 %v3312, 144
        %v3331 = vadd.s32 %v3312, 152
        %v3332 = vadd.s32 %v3312, 160
        %v3333 = vadd.s32 %v3312, 168
        %v3334 = vadd.s32 %v3312, 176
        %v3335 = vadd.s32 %v3312, 184
        %v3336 = vadd.s32 %v3312, 192
        %v3337 = vadd.s32 %v3312, 200
        %v3338 = vadd.s32 %v3312, 208
        %v3339 = vadd.s32 %v3312, 216
        %v3340 = vadd.s32 %v3312, 224
        %v3341 = vadd.s32 %v3312, 232
        %v3342 = vadd.s32 %v3312, 240
        %v3343 = vadd.s32 %v3312, 248
        %s3344 = smul.u32 %s18, 256
        %v3345 = vstv %s3344
        %v3346 = vadd.s32 %v3312, %v3345
        %v3347 = vadd.s32 %v3313, %v3345
        %v3348 = vadd.s32 %v3314, %v3345
        %v3349 = vadd.s32 %v3315, %v3345
        %v3350 = vadd.s32 %v3316, %v3345
        %v3351 = vadd.s32 %v3317, %v3345
        %v3352 = vadd.s32 %v3318, %v3345
        %v3353 = vadd.s32 %v3319, %v3345
        %v3354 = vadd.s32 %v3320, %v3345
        %v3355 = vadd.s32 %v3321, %v3345
        %v3356 = vadd.s32 %v3322, %v3345
        %v3357 = vadd.s32 %v3323, %v3345
        %v3358 = vadd.s32 %v3324, %v3345
        %v3359 = vadd.s32 %v3325, %v3345
        %v3360 = vadd.s32 %v3326, %v3345
        %v3361 = vadd.s32 %v3327, %v3345
        %v3362 = vadd.s32 %v3328, %v3345
        %v3363 = vadd.s32 %v3329, %v3345
        %v3364 = vadd.s32 %v3330, %v3345
        %v3365 = vadd.s32 %v3331, %v3345
        %v3366 = vadd.s32 %v3332, %v3345
        %v3367 = vadd.s32 %v3333, %v3345
        %v3368 = vadd.s32 %v3334, %v3345
        %v3369 = vadd.s32 %v3335, %v3345
        %v3370 = vadd.s32 %v3336, %v3345
        %v3371 = vadd.s32 %v3337, %v3345
        %v3372 = vadd.s32 %v3338, %v3345
        %v3373 = vadd.s32 %v3339, %v3345
        %v3374 = vadd.s32 %v3340, %v3345
        %v3375 = vadd.s32 %v3341, %v3345
        %v3376 = vadd.s32 %v3342, %v3345
        %v3377 = vadd.s32 %v3343, %v3345
        %vm3378 = vcmp.lt.s32.totalorder %v3346, 512
        %vm3379 = vcmp.lt.s32.totalorder %v3347, 512
        %vm3380 = vcmp.lt.s32.totalorder %v3348, 512
        %vm3381 = vcmp.lt.s32.totalorder %v3349, 512
        %vm3382 = vcmp.lt.s32.totalorder %v3350, 512
        %vm3383 = vcmp.lt.s32.totalorder %v3351, 512
        %vm3384 = vcmp.lt.s32.totalorder %v3352, 512
        %vm3385 = vcmp.lt.s32.totalorder %v3353, 512
        %vm3386 = vcmp.lt.s32.totalorder %v3354, 512
        %vm3387 = vcmp.lt.s32.totalorder %v3355, 512
        %vm3388 = vcmp.lt.s32.totalorder %v3356, 512
        %vm3389 = vcmp.lt.s32.totalorder %v3357, 512
        %vm3390 = vcmp.lt.s32.totalorder %v3358, 512
        %vm3391 = vcmp.lt.s32.totalorder %v3359, 512
        %vm3392 = vcmp.lt.s32.totalorder %v3360, 512
        %vm3393 = vcmp.lt.s32.totalorder %v3361, 512
        %vm3394 = vcmp.lt.s32.totalorder %v3362, 512
        %vm3395 = vcmp.lt.s32.totalorder %v3363, 512
        %vm3396 = vcmp.lt.s32.totalorder %v3364, 512
        %vm3397 = vcmp.lt.s32.totalorder %v3365, 512
        %vm3398 = vcmp.lt.s32.totalorder %v3366, 512
        %vm3399 = vcmp.lt.s32.totalorder %v3367, 512
        %vm3400 = vcmp.lt.s32.totalorder %v3368, 512
        %vm3401 = vcmp.lt.s32.totalorder %v3369, 512
        %vm3402 = vcmp.lt.s32.totalorder %v3370, 512
        %vm3403 = vcmp.lt.s32.totalorder %v3371, 512
        %vm3404 = vcmp.lt.s32.totalorder %v3372, 512
        %vm3405 = vcmp.lt.s32.totalorder %v3373, 512
        %vm3406 = vcmp.lt.s32.totalorder %v3374, 512
        %vm3407 = vcmp.lt.s32.totalorder %v3375, 512
        %vm3408 = vcmp.lt.s32.totalorder %v3376, 512
        %vm3409 = vcmp.lt.s32.totalorder %v3377, 512
        %v3410 = vsub.f32 %v3151, %v246
        %v3411 = vsub.f32 %v3154, %v247
        %v3412 = vsub.f32 %v3157, %v248
        %v3413 = vsub.f32 %v3160, %v249
        %v3414 = vsub.f32 %v3163, %v250
        %v3415 = vsub.f32 %v3166, %v251
        %v3416 = vsub.f32 %v3169, %v252
        %v3417 = vsub.f32 %v3172, %v253
        %v3418 = vsub.f32 %v3175, %v254
        %v3419 = vsub.f32 %v3178, %v255
        %v3420 = vsub.f32 %v3181, %v256
        %v3421 = vsub.f32 %v3184, %v257
        %v3422 = vsub.f32 %v3187, %v258
        %v3423 = vsub.f32 %v3190, %v259
        %v3424 = vsub.f32 %v3193, %v260
        %v3425 = vsub.f32 %v3196, %v261
        %v3426 = vsub.f32 %v3199, %v262
        %v3427 = vsub.f32 %v3202, %v263
        %v3428 = vsub.f32 %v3205, %v264
        %v3429 = vsub.f32 %v3208, %v265
        %v3430 = vsub.f32 %v3211, %v266
        %v3431 = vsub.f32 %v3214, %v267
        %v3432 = vsub.f32 %v3217, %v268
        %v3433 = vsub.f32 %v3220, %v269
        %v3434 = vsub.f32 %v3223, %v270
        %v3435 = vsub.f32 %v3226, %v271
        %v3436 = vsub.f32 %v3229, %v272
        %v3437 = vsub.f32 %v3232, %v273
        %v3438 = vsub.f32 %v3235, %v274
        %v3439 = vsub.f32 %v3238, %v275
        %v3440 = vsub.f32 %v3241, %v276
        %v3441 = vsub.f32 %v3244, %v277
        %v3442 = vsel %vm3378, 1, 0
        %v3443 = vsel %vm3379, 1, 0
        %v3444 = vsel %vm3380, 1, 0
        %v3445 = vsel %vm3381, 1, 0
        %v3446 = vsel %vm3382, 1, 0
        %v3447 = vsel %vm3383, 1, 0
        %v3448 = vsel %vm3384, 1, 0
        %v3449 = vsel %vm3385, 1, 0
        %v3450 = vsel %vm3386, 1, 0
        %v3451 = vsel %vm3387, 1, 0
        %v3452 = vsel %vm3388, 1, 0
        %v3453 = vsel %vm3389, 1, 0
        %v3454 = vsel %vm3390, 1, 0
        %v3455 = vsel %vm3391, 1, 0
        %v3456 = vsel %vm3392, 1, 0
        %v3457 = vsel %vm3393, 1, 0
        %v3458 = vsel %vm3394, 1, 0
        %v3459 = vsel %vm3395, 1, 0
        %v3460 = vsel %vm3396, 1, 0
        %v3461 = vsel %vm3397, 1, 0
        %v3462 = vsel %vm3398, 1, 0
        %v3463 = vsel %vm3399, 1, 0
        %v3464 = vsel %vm3400, 1, 0
        %v3465 = vsel %vm3401, 1, 0
        %v3466 = vsel %vm3402, 1, 0
        %v3467 = vsel %vm3403, 1, 0
        %v3468 = vsel %vm3404, 1, 0
        %v3469 = vsel %vm3405, 1, 0
        %v3470 = vsel %vm3406, 1, 0
        %v3471 = vsel %vm3407, 1, 0
        %v3472 = vsel %vm3408, 1, 0
        %v3473 = vsel %vm3409, 1, 0
        %vm3474 = vcmp.eq.s32.totalorder %v3442, 1
        %vm3475 = vcmp.eq.s32.totalorder %v3443, 1
        %vm3476 = vcmp.eq.s32.totalorder %v3444, 1
        %vm3477 = vcmp.eq.s32.totalorder %v3445, 1
        %vm3478 = vcmp.eq.s32.totalorder %v3446, 1
        %vm3479 = vcmp.eq.s32.totalorder %v3447, 1
        %vm3480 = vcmp.eq.s32.totalorder %v3448, 1
        %vm3481 = vcmp.eq.s32.totalorder %v3449, 1
        %vm3482 = vcmp.eq.s32.totalorder %v3450, 1
        %vm3483 = vcmp.eq.s32.totalorder %v3451, 1
        %vm3484 = vcmp.eq.s32.totalorder %v3452, 1
        %vm3485 = vcmp.eq.s32.totalorder %v3453, 1
        %vm3486 = vcmp.eq.s32.totalorder %v3454, 1
        %vm3487 = vcmp.eq.s32.totalorder %v3455, 1
        %vm3488 = vcmp.eq.s32.totalorder %v3456, 1
        %vm3489 = vcmp.eq.s32.totalorder %v3457, 1
        %vm3490 = vcmp.eq.s32.totalorder %v3458, 1
        %vm3491 = vcmp.eq.s32.totalorder %v3459, 1
        %vm3492 = vcmp.eq.s32.totalorder %v3460, 1
        %vm3493 = vcmp.eq.s32.totalorder %v3461, 1
        %vm3494 = vcmp.eq.s32.totalorder %v3462, 1
        %vm3495 = vcmp.eq.s32.totalorder %v3463, 1
        %vm3496 = vcmp.eq.s32.totalorder %v3464, 1
        %vm3497 = vcmp.eq.s32.totalorder %v3465, 1
        %vm3498 = vcmp.eq.s32.totalorder %v3466, 1
        %vm3499 = vcmp.eq.s32.totalorder %v3467, 1
        %vm3500 = vcmp.eq.s32.totalorder %v3468, 1
        %vm3501 = vcmp.eq.s32.totalorder %v3469, 1
        %vm3502 = vcmp.eq.s32.totalorder %v3470, 1
        %vm3503 = vcmp.eq.s32.totalorder %v3471, 1
        %vm3504 = vcmp.eq.s32.totalorder %v3472, 1
        %vm3505 = vcmp.eq.s32.totalorder %v3473, 1
        %v3506 = vsel %vm3474, %v3410, 0.0
        %v3507 = vsel %vm3475, %v3411, 0.0
        %v3508 = vsel %vm3476, %v3412, 0.0
        %v3509 = vsel %vm3477, %v3413, 0.0
        %v3510 = vsel %vm3478, %v3414, 0.0
        %v3511 = vsel %vm3479, %v3415, 0.0
        %v3512 = vsel %vm3480, %v3416, 0.0
        %v3513 = vsel %vm3481, %v3417, 0.0
        %v3514 = vsel %vm3482, %v3418, 0.0
        %v3515 = vsel %vm3483, %v3419, 0.0
        %v3516 = vsel %vm3484, %v3420, 0.0
        %v3517 = vsel %vm3485, %v3421, 0.0
        %v3518 = vsel %vm3486, %v3422, 0.0
        %v3519 = vsel %vm3487, %v3423, 0.0
        %v3520 = vsel %vm3488, %v3424, 0.0
        %v3521 = vsel %vm3489, %v3425, 0.0
        %v3522 = vsel %vm3490, %v3426, 0.0
        %v3523 = vsel %vm3491, %v3427, 0.0
        %v3524 = vsel %vm3492, %v3428, 0.0
        %v3525 = vsel %vm3493, %v3429, 0.0
        %v3526 = vsel %vm3494, %v3430, 0.0
        %v3527 = vsel %vm3495, %v3431, 0.0
        %v3528 = vsel %vm3496, %v3432, 0.0
        %v3529 = vsel %vm3497, %v3433, 0.0
        %v3530 = vsel %vm3498, %v3434, 0.0
        %v3531 = vsel %vm3499, %v3435, 0.0
        %v3532 = vsel %vm3500, %v3436, 0.0
        %v3533 = vsel %vm3501, %v3437, 0.0
        %v3534 = vsel %vm3502, %v3438, 0.0
        %v3535 = vsel %vm3503, %v3439, 0.0
        %v3536 = vsel %vm3504, %v3440, 0.0
        %v3537 = vsel %vm3505, %v3441, 0.0
        %v3538 = vld [vmem:[#allocation2] sm:$0x1]
        %v3539 = vmul.f32 %v3506, %v3506
        %v3540 = vmul.f32 %v3507, %v3507
        %v3541 = vmul.f32 %v3508, %v3508
        %v3542 = vmul.f32 %v3509, %v3509
        %v3543 = vmul.f32 %v3510, %v3510
        %v3544 = vmul.f32 %v3511, %v3511
        %v3545 = vmul.f32 %v3512, %v3512
        %v3546 = vmul.f32 %v3513, %v3513
        %v3547 = vmul.f32 %v3514, %v3514
        %v3548 = vmul.f32 %v3515, %v3515
        %v3549 = vmul.f32 %v3516, %v3516
        %v3550 = vmul.f32 %v3517, %v3517
        %v3551 = vmul.f32 %v3518, %v3518
        %v3552 = vmul.f32 %v3519, %v3519
        %v3553 = vmul.f32 %v3520, %v3520
        %v3554 = vmul.f32 %v3521, %v3521
        %v3555 = vmul.f32 %v3522, %v3522
        %v3556 = vmul.f32 %v3523, %v3523
        %v3557 = vmul.f32 %v3524, %v3524
        %v3558 = vmul.f32 %v3525, %v3525
        %v3559 = vmul.f32 %v3526, %v3526
        %v3560 = vmul.f32 %v3527, %v3527
        %v3561 = vmul.f32 %v3528, %v3528
        %v3562 = vmul.f32 %v3529, %v3529
        %v3563 = vmul.f32 %v3530, %v3530
        %v3564 = vmul.f32 %v3531, %v3531
        %v3565 = vmul.f32 %v3532, %v3532
        %v3566 = vmul.f32 %v3533, %v3533
        %v3567 = vmul.f32 %v3534, %v3534
        %v3568 = vmul.f32 %v3535, %v3535
        %v3569 = vmul.f32 %v3536, %v3536
        %v3570 = vmul.f32 %v3537, %v3537
        %v3571 = vsel %vm342, %v3539, 0.0
        %v3572 = vsel %vm342, %v3540, 0.0
        %v3573 = vadd.f32 %v3571, %v3572
        %v3574 = vsel %vm342, %v3541, 0.0
        %v3575 = vadd.f32 %v3573, %v3574
        %v3576 = vsel %vm342, %v3542, 0.0
        %v3577 = vadd.f32 %v3575, %v3576
        %v3578 = vsel %vm342, %v3543, 0.0
        %v3579 = vadd.f32 %v3577, %v3578
        %v3580 = vsel %vm342, %v3544, 0.0
        %v3581 = vadd.f32 %v3579, %v3580
        %v3582 = vsel %vm342, %v3545, 0.0
        %v3583 = vadd.f32 %v3581, %v3582
        %v3584 = vsel %vm342, %v3546, 0.0
        %v3585 = vadd.f32 %v3583, %v3584
        %v3586 = vsel %vm342, %v3547, 0.0
        %v3587 = vadd.f32 %v3585, %v3586
        %v3588 = vsel %vm342, %v3548, 0.0
        %v3589 = vadd.f32 %v3587, %v3588
        %v3590 = vsel %vm342, %v3549, 0.0
        %v3591 = vadd.f32 %v3589, %v3590
        %v3592 = vsel %vm342, %v3550, 0.0
        %v3593 = vadd.f32 %v3591, %v3592
        %v3594 = vsel %vm342, %v3551, 0.0
        %v3595 = vadd.f32 %v3593, %v3594
        %v3596 = vsel %vm342, %v3552, 0.0
        %v3597 = vadd.f32 %v3595, %v3596
        %v3598 = vsel %vm342, %v3553, 0.0
        %v3599 = vadd.f32 %v3597, %v3598
        %v3600 = vsel %vm342, %v3554, 0.0
        %v3601 = vadd.f32 %v3599, %v3600
        %v3602 = vsel %vm342, %v3555, 0.0
        %v3603 = vadd.f32 %v3601, %v3602
        %v3604 = vsel %vm342, %v3556, 0.0
        %v3605 = vadd.f32 %v3603, %v3604
        %v3606 = vsel %vm342, %v3557, 0.0
        %v3607 = vadd.f32 %v3605, %v3606
        %v3608 = vsel %vm342, %v3558, 0.0
        %v3609 = vadd.f32 %v3607, %v3608
        %v3610 = vsel %vm342, %v3559, 0.0
        %v3611 = vadd.f32 %v3609, %v3610
        %v3612 = vsel %vm342, %v3560, 0.0
        %v3613 = vadd.f32 %v3611, %v3612
        %v3614 = vsel %vm342, %v3561, 0.0
        %v3615 = vadd.f32 %v3613, %v3614
        %v3616 = vsel %vm342, %v3562, 0.0
        %v3617 = vadd.f32 %v3615, %v3616
        %v3618 = vsel %vm342, %v3563, 0.0
        %v3619 = vadd.f32 %v3617, %v3618
        %v3620 = vsel %vm342, %v3564, 0.0
        %v3621 = vadd.f32 %v3619, %v3620
        %v3622 = vsel %vm342, %v3565, 0.0
        %v3623 = vadd.f32 %v3621, %v3622
        %v3624 = vsel %vm342, %v3566, 0.0
        %v3625 = vadd.f32 %v3623, %v3624
        %v3626 = vsel %vm342, %v3567, 0.0
        %v3627 = vadd.f32 %v3625, %v3626
        %v3628 = vsel %vm342, %v3568, 0.0
        %v3629 = vadd.f32 %v3627, %v3628
        %v3630 = vsel %vm342, %v3569, 0.0
        %v3631 = vadd.f32 %v3629, %v3630
        %v3632 = vsel %vm342, %v3570, 0.0
        %v3633 = vadd.f32 %v3631, %v3632
        %3634 = vadd.xlane.f32.xlu0 %v3633
        %v3635 = vpop.xlane.xlu0 %3634
        %v3636 = vrot.slane %v3635, 4
        %v3637 = vadd.f32 %v3635, %v3636
        %v3638 = vrot.slane %v3637, 2
        %v3639 = vadd.f32 %v3637, %v3638
        %v3640 = vrot.slane %v3639, 1
        %v3641 = vadd.f32 %v3639, %v3640
        %s3642 = vtos %v3641
        %v3643 = vstv %s3642
        %v3644 = vadd.f32 %v3538, %v3643
        %vm3645 = vcmask 0
        %3646 = vst.msk [vmem:[#allocation2] sm:$0x1] %vm3645, %v3644
        %s3647 = smul.u32 32, %s18
        %p3648 = scmp.lt.s32.totalorder %s3647, 63
        %s3649 = scalar_select %p3648, %s3647, 63
        %s3650 = smul.addr %s3649, 8
        %s3651 = scalar_lea.vmem %s3, %s3650
        %s3652 = smul.u32 32, %s18
        %p3653 = scmp.lt.s32.totalorder %s3652, 63
        %s3654 = scalar_select %p3653, %s3652, 63
        %s3655 = smul.addr %s3654, 8
        %s3656 = scalar_lea.vmem %s4, %s3655
        // Predicated region
        $region37: #{tpu_custom_call.1} parent=31 // pred_check
          %p3657 = pneg %p104
        $region38: #{tpu_custom_call.1} parent=31 // pred_check_branch
          %3659 = sbr.rel (%p3657) target = $region40
        $region39: #{tpu_custom_call.1} parent=31 // pred_region
          %s3660 = smul.u32 32, %s18
        $region40: #{tpu_custom_call.1} parent=31 // pred_fallthru
          _
        // Predicated region
        $region41: #{tpu_custom_call.1} parent=31 // pred_check
          %p3661 = pneg %p130
        $region42: #{tpu_custom_call.1} parent=31 // pred_check_branch
          %3663 = sbr.rel (%p3661) target = $region44
        $region43: #{tpu_custom_call.1} parent=31 // pred_region
          %s3664 = smul.u32 32, %s18
        $region44: #{tpu_custom_call.1} parent=31 // pred_fallthru
          _
        // Predicated region
        $region45: #{tpu_custom_call.1} parent=31 // pred_check
          %p3665 = pneg %p151
        $region46: #{tpu_custom_call.1} parent=31 // pred_check_branch
          %3667 = sbr.rel (%p3665) target = $region48
        $region47: #{tpu_custom_call.1} parent=31 // pred_region
          %3669 = vsyncadd [#allocation3], 0
          %s3671 = sshll.u32 [#allocation2], 4
          %s3672 = int_to_ptr.vmem [resolvable:$true] %s3671
          %s3673 = sshll.u32 %s5, 4
          %s3674 = int_to_ptr.hbm [resolvable:$true] %s3673
          %3676 = dma.vmem_to_hbm [thread:$0]  %s3672, 16, %s3674, [#allocation3]
        $region48: #{tpu_custom_call.1} parent=31 // pred_fallthru
          _
        // Predicated region
        $region49: #{tpu_custom_call.1} parent=31 // pred_check
          %p3677 = pneg %p151
        $region50: #{tpu_custom_call.1} parent=31 // pred_check_branch
          %3679 = sbr.rel (%p3677) target = $region52
        $region51: #{tpu_custom_call.1} parent=31 // pred_region
          %3681 = dma.done [#allocation3], 16
        $region52: #{tpu_custom_call.1} parent=31 // pred_fallthru
          _
      $region32: #{tpu_custom_call.1} parent=5 // pred_fallthru
        _
      %p3682 = scmp.le.s32.totalorder 2, %s13
      // Predicated region
      $region53: #{tpu_custom_call.1} parent=5 // pred_check
        %p3683 = pneg %p3682
      $region54: #{tpu_custom_call.1} parent=5 // pred_check_branch
        %3685 = sbr.rel (%p3683) target = $region56
      $region55: #{tpu_custom_call.1} parent=5 // pred_region
        %s3686 = ssub.s32 %s13, 2
        // Predicated region
        $region57: #{tpu_custom_call.1} parent=55 // pred_check
          %p3687 = pneg %p110
        $region58: #{tpu_custom_call.1} parent=55 // pred_check_branch
          %3689 = sbr.rel (%p3687) target = $region60
        $region59: #{tpu_custom_call.1} parent=55 // pred_region
          %s3690 = smul.u32 32, %s19
          %p3691 = scmp.lt.s32.totalorder %s3690, 63
          %s3692 = scalar_select %p3691, %s3690, 63
          %s3693 = smul.addr %s3692, 8
          %s3694 = scalar_lea.vmem %s3, %s3693
        $region60: #{tpu_custom_call.1} parent=55 // pred_fallthru
          _
        // Predicated region
        $region61: #{tpu_custom_call.1} parent=55 // pred_check
          %p3695 = pneg %p136
        $region62: #{tpu_custom_call.1} parent=55 // pred_check_branch
          %3697 = sbr.rel (%p3695) target = $region64
        $region63: #{tpu_custom_call.1} parent=55 // pred_region
          %s3698 = smul.u32 32, %s19
          %p3699 = scmp.lt.s32.totalorder %s3698, 63
          %s3700 = scalar_select %p3699, %s3698, 63
          %s3701 = smul.addr %s3700, 8
          %s3702 = scalar_lea.vmem %s4, %s3701
        $region64: #{tpu_custom_call.1} parent=55 // pred_fallthru
          _
      $region56: #{tpu_custom_call.1} parent=5 // pred_fallthru
        _
    $region6: #{tpu_custom_call.1} parent=1 // loop_footer
      %s17 = sadd.s32 1, %s13
    $region7: #{tpu_custom_call.1} parent=1 // loop_footer_branch
      %12 = sbr.rel target = $region3
    $region8: #{tpu_custom_call.1} parent=1 // loop_exit
      _
    %3703 = vsyncpa [#allocation3], 1
    %s3704 = scalar_lea.sflag [#allocation3], 1
    %3705 = vsyncpa %s3704, 1

</llo_original>
